<compile_context>
chip_gen: v6e
topology: v6e:2x2x1
jax: 0.10.0
libtpu: 0.0.40
codegen_flags: <defaults>
</compile_context>

<pallas_src>
import functools

import jax
import jax.numpy as jnp
import numpy as np
from jax import lax
from jax.experimental import pallas as pl
from jax.experimental.pallas import tpu as pltpu


def _bottleneck_kernel(x_ref, w1_ref, s1_ref, b1_ref,
                       w2_ref, s2_ref, b2_ref,
                       w3_ref, s3_ref, b3_ref,
                       o_ref, pad_ref, acc_ref, *, dilation):
    """One batch block per grid step; everything for that block lives in VMEM.

    x_ref  : (Nb, H, W, Cin)  bf16   input tile (Cin == 4*planes; residual path)
    w1     : (Cin, Pp)        bf16   conv1 1x1 (Pp = planes padded to 128 lanes)
    w2     : (9, Pp, Pp)      bf16   conv2 3x3, one (Pp,Pp) matrix per tap
    w3     : (Pp, Cin)        bf16   conv3 1x1
    s*/b*  : (1, C)           f32    folded eval-mode BatchNorm scale / shift
    pad_ref: bf16 VMEM (Nb, H+2d, W+2d, Pp)  zero-padded conv2 input
    acc_ref: f32  VMEM (Nb*H*W, Pp)          conv2 accumulator
    """
    Nb, H, W, Cin = x_ref.shape
    Pp = w1_ref.shape[1]
    d = dilation
    _, Hp, Wp, _ = pad_ref.shape
    M = Nb * H * W

    # --- conv1 (1x1) + BN1 + ReLU (bf16 MXU, f32 accumulate) ----------------
    x2d = x_ref[...].reshape(M, Cin)                            # bf16
    h1 = jnp.dot(x2d, w1_ref[...], preferred_element_type=jnp.float32)
    h1 = jnp.maximum(h1 * s1_ref[...] + b1_ref[...], 0.0)       # (M, Pp) f32

    # --- conv2 (3x3, dilation d, stride 1, padding d) + BN2 + ReLU ----------
    # Zero only the halo; the interior is fully overwritten every step.
    # (Re-zeroed every step: scratch is per-core under megacore partitioning,
    #  so a program_id==0 guard would skip the zero on the second core.)
    pad_ref[:, pl.ds(0, d), :, :] = jnp.zeros((Nb, d, Wp, Pp), jnp.bfloat16)
    pad_ref[:, pl.ds(d + H, d), :, :] = jnp.zeros((Nb, d, Wp, Pp), jnp.bfloat16)
    pad_ref[:, pl.ds(d, H), pl.ds(0, d), :] = jnp.zeros((Nb, H, d, Pp), jnp.bfloat16)
    pad_ref[:, pl.ds(d, H), pl.ds(d + W, d), :] = jnp.zeros((Nb, H, d, Pp), jnp.bfloat16)
    pad_ref[:, pl.ds(d, H), pl.ds(d, W), :] = (
        h1.astype(jnp.bfloat16).reshape(Nb, H, W, Pp))

    # Nine accumulating tap dots, reading shifted windows straight from the
    # padded scratch (no materialized im2col buffer).
    for ky in range(3):
        for kx in range(3):
            t = ky * 3 + kx
            patch = pad_ref[:, pl.ds(ky * d, H), pl.ds(kx * d, W), :]
            contrib = jnp.dot(patch.reshape(M, Pp), w2_ref[t],
                              preferred_element_type=jnp.float32)
            if t == 0:
                acc_ref[...] = contrib
            else:
                acc_ref[...] += contrib
    h2 = jnp.maximum(acc_ref[...] * s2_ref[...] + b2_ref[...], 0.0)  # (M, Pp)

    # --- conv3 (1x1) + BN3 + residual add + ReLU ----------------------------
    h3 = jnp.dot(h2.astype(jnp.bfloat16), w3_ref[...],
                 preferred_element_type=jnp.float32)
    h3 = h3 * s3_ref[...] + b3_ref[...]
    # Re-read the (still resident) input tile for the residual instead of
    # keeping an f32 copy live across all three matmuls.
    x_res = x_ref[...].reshape(M, Cin).astype(jnp.float32)
    out = jnp.maximum(h3 + x_res, 0.0)                           # (M, Cin) f32

    o_ref[...] = out.reshape(Nb, H, W, Cin).astype(o_ref.dtype)


def _vmem_capacity_bytes():
    """Generation-aware VMEM capacity (64 MiB on v7x, 128 MiB on v5e/v6e)."""
    try:
        return int(pltpu.get_tpu_info().vmem_capacity_bytes)
    except Exception:
        return 64 * 1024 * 1024        # conservative (v7x) fallback


def _pick_batch_block(N, H, W, C, Pp, dilation, budget_bytes):
    """Largest divisor of N that fits the VMEM budget AND keeps >=3 grid steps."""
    d = dilation
    Hp, Wp = H + 2 * d, W + 2 * d
    min_steps = min(N, 3)              # pipeline depth / v7x 2-TC occupancy
    best = 1
    for nb in range(1, N + 1):
        if N % nb:
            continue
        if N // nb < min_steps:
            break
        m = nb * H * W
        io = 2 * 2 * m * C * 2                    # bf16 in+out blocks, double-buffered
        pad = nb * Hp * Wp * Pp * 2               # bf16 padded-activation scratch
        acc = m * Pp * 4                          # f32 conv2 accumulator
        live = m * (Pp + 2 * C) * 4               # f32 intermediates (h1 / h3 / residual)
        if io + pad + acc + live > budget_bytes:
            break
        best = nb
    # TODO(synk): if even nb=1 exceeds the budget (large H*W*C), fall back to
    # splitting H into halo'd row strips instead of compiling an oversized block.
    return best


def _pad_axis(a, axis, target):
    cur = a.shape[axis]
    if cur == target:
        return a
    pads = [(0, 0)] * a.ndim
    pads[axis] = (0, target - cur)
    return jnp.pad(a, pads)


def bottleneck_v1b_nhwc(x_nhwc, params, *, dilation=1):
    """Forward pass of BottleneckV1b (stride=1, downsample=None, eval-mode BN).

    Activations are NHWC in HBM (bf16 in, bf16 out) — keep them NHWC across
    the whole network; use `bottleneck_v1b_nchw` only at a PyTorch boundary.
    """
    w1, s1, b1, w2, s2, b2, w3, s3, b3 = params
    N, H, W, C = x_nhwc.shape
    P = w1.shape[1]
    assert w3.shape[1] == C, "identity add requires inplanes == 4 * planes"

    bf16 = jnp.bfloat16
    # Pad `planes` up to a multiple of 128 lanes so every stored intermediate
    # is lane-dense; zero-padded weights / BN params keep the math exact.
    Pp = max(128, ((P + 127) // 128) * 128)

    w1p = _pad_axis(w1, 1, Pp).astype(bf16)                        # (C, Pp)
    s1p = _pad_axis(s1, 1, Pp).astype(jnp.float32)
    b1p = _pad_axis(b1, 1, Pp).astype(jnp.float32)
    w2p = _pad_axis(_pad_axis(w2, 2, Pp), 3, Pp)                   # (3,3,Pp,Pp) HWIO
    w2p = w2p.reshape(9, Pp, Pp).astype(bf16)
    s2p = _pad_axis(s2, 1, Pp).astype(jnp.float32)
    b2p = _pad_axis(b2, 1, Pp).astype(jnp.float32)
    w3p = _pad_axis(w3, 0, Pp).astype(bf16)                        # (Pp, C)
    s3p = s3.astype(jnp.float32)
    b3p = b3.astype(jnp.float32)

    x_bf = x_nhwc.astype(bf16)                                     # bf16 HBM I/O

    capacity = _vmem_capacity_bytes()
    budget = int(capacity * 0.6)
    vmem_limit = int(capacity * 0.75)

    Nb = _pick_batch_block(N, H, W, C, Pp, dilation, budget)
    grid = (N // Nb,)

    def full_spec(arr):
        nd = arr.ndim
        return pl.BlockSpec(arr.shape, lambda n, _nd=nd: (0,) * _nd)

    kernel = functools.partial(_bottleneck_kernel, dilation=dilation)

    flops = 2 * N * H * W * (C * Pp + 9 * Pp * Pp + Pp * C)
    bytes_accessed = (2 * N * H * W * C * 2                        # bf16 in + out
                      + (C * Pp + 9 * Pp * Pp + Pp * C) * 2        # bf16 weights
                      + 2 * (Pp + Pp + C) * 4)                     # folded BN params

    out = pl.pallas_call(
        kernel,
        out_shape=jax.ShapeDtypeStruct((N, H, W, C), bf16),
        grid=grid,
        in_specs=[
            pl.BlockSpec((Nb, H, W, C), lambda n: (n, 0, 0, 0)),
            full_spec(w1p), full_spec(s1p), full_spec(b1p),
            full_spec(w2p), full_spec(s2p), full_spec(b2p),
            full_spec(w3p), full_spec(s3p), full_spec(b3p),
        ],
        out_specs=pl.BlockSpec((Nb, H, W, C), lambda n: (n, 0, 0, 0)),
        scratch_shapes=[
            pltpu.VMEM((Nb, H + 2 * dilation, W + 2 * dilation, Pp), jnp.bfloat16),
            pltpu.VMEM((Nb * H * W, Pp), jnp.float32),
        ],
        compiler_params=pltpu.CompilerParams(
            dimension_semantics=("parallel",),
            vmem_limit_bytes=vmem_limit),
        cost_estimate=pl.CostEstimate(
            flops=flops, transcendentals=0, bytes_accessed=bytes_accessed),
    )(x_bf, w1p, s1p, b1p, w2p, s2p, b2p, w3p, s3p, b3p)

    return out


def bottleneck_v1b_nchw(x_nchw, params, *, dilation=1):
    """PyTorch-layout (NCHW) compatibility shim — costs two extra HBM passes."""
    x = jnp.transpose(x_nchw, (0, 2, 3, 1))
    y = bottleneck_v1b_nhwc(x, params, dilation=dilation)
    return jnp.transpose(y, (0, 3, 1, 2))


def reference_bottleneck_nhwc(x_nhwc, params, *, dilation=1):
    """Pure-JAX reference (same folded-BN / bf16-matmul / bf16-residual semantics)."""
    w1, s1, b1, w2, s2, b2, w3, s3, b3 = params
    bf16 = jnp.bfloat16
    x = x_nhwc.astype(bf16)

    h = jnp.einsum('nhwc,co->nhwo', x, w1.astype(bf16),
                   preferred_element_type=jnp.float32)
    h = jnp.maximum(h * s1 + b1, 0.0)
    h = lax.conv_general_dilated(
        h.astype(bf16), w2.astype(bf16), window_strides=(1, 1),
        padding=[(dilation, dilation), (dilation, dilation)],
        rhs_dilation=(dilation, dilation),
        dimension_numbers=('NHWC', 'HWIO', 'NHWC'),
        preferred_element_type=jnp.float32)
    h = jnp.maximum(h * s2 + b2, 0.0)
    h = jnp.einsum('nhwc,co->nhwo', h.astype(bf16), w3.astype(bf16),
                   preferred_element_type=jnp.float32)
    h = h * s3 + b3
    out = jnp.maximum(h + x.astype(jnp.float32), 0.0)
    return out


def make_params(key, inplanes, planes):
    """Deterministic synthetic weights + folded eval-mode BatchNorm params."""
    expansion = 4
    out_ch = planes * expansion
    ks = jax.random.split(key, 15)

    def bn_fold(kg, kb, km, kv, c):
        gamma = 1.0 + 0.1 * jax.random.normal(kg, (c,), jnp.float32)
        beta = 0.1 * jax.random.normal(kb, (c,), jnp.float32)
        mean = 0.1 * jax.random.normal(km, (c,), jnp.float32)
        var = jnp.abs(jax.random.normal(kv, (c,), jnp.float32)) + 0.5
        scale = gamma / jnp.sqrt(var + 1e-5)
        shift = beta - mean * scale
        return scale.reshape(1, c), shift.reshape(1, c)

    # NOTE: w2 is HWIO (3,3,in,out); real PyTorch OIHW checkpoints need a
    # transpose to (kh, kw, in, out) before use.
    w1 = 0.1 * jax.random.normal(ks[0], (inplanes, planes), jnp.float32)
    w2 = 0.1 * jax.random.normal(ks[1], (3, 3, planes, planes), jnp.float32)
    w3 = 0.1 * jax.random.normal(ks[2], (planes, out_ch), jnp.float32)
    s1, b1 = bn_fold(ks[3], ks[4], ks[5], ks[6], planes)
    s2, b2 = bn_fold(ks[7], ks[8], ks[9], ks[10], planes)
    s3, b3 = bn_fold(ks[11], ks[12], ks[13], ks[14], out_ch)
    return (w1, s1, b1, w2, s2, b2, w3, s3, b3)


if __name__ == "__main__":
    # Small shapes consistent with the module: downsample=None => stride=1 and
    # inplanes == planes * expansion.
    N, planes, H, W = 2, 32, 8, 8
    inplanes = planes * 4                          # 128
    dilation = 1

    key = jax.random.PRNGKey(0)
    kx, kp = jax.random.split(key)
    x_nhwc = jax.random.normal(kx, (N, H, W, inplanes), jnp.float32)   # NHWC input
    params = make_params(kp, inplanes, planes)

    out = bottleneck_v1b_nhwc(x_nhwc, params, dilation=dilation)
    out = jax.block_until_ready(out)

    ref = jax.block_until_ready(
        reference_bottleneck_nhwc(x_nhwc, params, dilation=dilation))
    # bf16 matmul inputs / f32 accumulation in both kernel and reference;
    # kernel output is bf16, hence the modest tolerance.
    np.testing.assert_allclose(np.asarray(out, dtype=np.float32),
                               np.asarray(ref, dtype=np.float32),
                               rtol=2e-2, atol=2e-2)

    print("KERNEL_OK")
</pallas_src>

<mosaic_0001>
module attributes {stable_mosaic.version = 11 : i64} {
  func.func @_bottleneck_kernel(%arg0: i32, %arg1: memref<1x8x8x128xbf16, #tpu.memory_space<vmem>>, %arg2: memref<128x128xbf16, #tpu.memory_space<vmem>>, %arg3: memref<1x128xf32, #tpu.memory_space<vmem>>, %arg4: memref<1x128xf32, #tpu.memory_space<vmem>>, %arg5: memref<9x128x128xbf16, #tpu.memory_space<vmem>>, %arg6: memref<1x128xf32, #tpu.memory_space<vmem>>, %arg7: memref<1x128xf32, #tpu.memory_space<vmem>>, %arg8: memref<128x128xbf16, #tpu.memory_space<vmem>>, %arg9: memref<1x128xf32, #tpu.memory_space<vmem>>, %arg10: memref<1x128xf32, #tpu.memory_space<vmem>>, %arg11: memref<1x8x8x128xbf16, #tpu.memory_space<vmem>>, %arg12: memref<1x10x10x128xbf16, #tpu.memory_space<vmem>>, %arg13: memref<64x128xf32, #tpu.memory_space<vmem>>) attributes {dimension_semantics = [#tpu.dimension_semantics<parallel>], iteration_bounds = array<i64: 2>, scalar_prefetch = 0 : i64, scratch_operands = 2 : i64, tpu.core_type = #tpu.core_type<tc>, window_params = [{transform_indices = @transform_0, window_bounds = array<i64: 1, 8, 8, 128>}, {pipeline_mode = #tpu.pipeline_mode<synchronous>, transform_indices = @transform_1, window_bounds = array<i64: 128, 128>}, {pipeline_mode = #tpu.pipeline_mode<synchronous>, transform_indices = @transform_2, window_bounds = array<i64: 1, 128>}, {pipeline_mode = #tpu.pipeline_mode<synchronous>, transform_indices = @transform_3, window_bounds = array<i64: 1, 128>}, {pipeline_mode = #tpu.pipeline_mode<synchronous>, transform_indices = @transform_4, window_bounds = array<i64: 9, 128, 128>}, {pipeline_mode = #tpu.pipeline_mode<synchronous>, transform_indices = @transform_5, window_bounds = array<i64: 1, 128>}, {pipeline_mode = #tpu.pipeline_mode<synchronous>, transform_indices = @transform_6, window_bounds = array<i64: 1, 128>}, {pipeline_mode = #tpu.pipeline_mode<synchronous>, transform_indices = @transform_7, window_bounds = array<i64: 128, 128>}, {pipeline_mode = #tpu.pipeline_mode<synchronous>, transform_indices = @transform_8, window_bounds = array<i64: 1, 128>}, {pipeline_mode = #tpu.pipeline_mode<synchronous>, transform_indices = @transform_9, window_bounds = array<i64: 1, 128>}, {transform_indices = @transform_10, window_bounds = array<i64: 1, 8, 8, 128>}]} {
    %c0 = arith.constant 0 : index
    %c0_0 = arith.constant 0 : index
    %c0_1 = arith.constant 0 : index
    %c0_2 = arith.constant 0 : index
    %0 = vector.load %arg1[%c0, %c0_0, %c0_1, %c0_2] : memref<1x8x8x128xbf16, #tpu.memory_space<vmem>>, vector<1x8x8x128xbf16>
    %1 = vector.shape_cast %0 : vector<1x8x8x128xbf16> to vector<64x128xbf16>
    %c0_3 = arith.constant 0 : index
    %c0_4 = arith.constant 0 : index
    %2 = vector.load %arg2[%c0_3, %c0_4] : memref<128x128xbf16, #tpu.memory_space<vmem>>, vector<128x128xbf16>
    %cst = arith.constant dense<0.000000e+00> : vector<64x128xf32>
    %3 = tpu.matmul %1, %2, %cst {dimension_numbers = #tpu.dot_dimension_numbers<[1], [0], [0], [1], [0, 0, 1, 1], [], []>} : vector<64x128xbf16>, vector<128x128xbf16>, vector<64x128xf32> -> vector<64x128xf32>
    %c0_5 = arith.constant 0 : index
    %c0_6 = arith.constant 0 : index
    %4 = vector.load %arg3[%c0_5, %c0_6] : memref<1x128xf32, #tpu.memory_space<vmem>>, vector<1x128xf32>
    %5 = vector.broadcast %4 : vector<1x128xf32> to vector<64x128xf32>
    %6 = arith.mulf %3, %5 : vector<64x128xf32>
    %c0_7 = arith.constant 0 : index
    %c0_8 = arith.constant 0 : index
    %7 = vector.load %arg4[%c0_7, %c0_8] : memref<1x128xf32, #tpu.memory_space<vmem>>, vector<1x128xf32>
    %8 = vector.broadcast %7 : vector<1x128xf32> to vector<64x128xf32>
    %9 = arith.addf %6, %8 : vector<64x128xf32>
    %cst_9 = arith.constant 0.000000e+00 : f32
    %10 = vector.broadcast %cst_9 : f32 to vector<64x128xf32>
    %11 = arith.maximumf %9, %10 : vector<64x128xf32>
    %cst_10 = arith.constant 0.000000e+00 : bf16
    %12 = vector.broadcast %cst_10 : bf16 to vector<1x1x10x128xbf16>
    %c0_11 = arith.constant 0 : index
    %c0_12 = arith.constant 0 : index
    %c0_13 = arith.constant 0 : index
    %c0_14 = arith.constant 0 : index
    %13 = vector.load %arg12[%c0_11, %c0_12, %c0_13, %c0_14] : memref<1x10x10x128xbf16, #tpu.memory_space<vmem>>, vector<1x1x10x128xbf16>
    tpu.vector_store %arg12[%c0_11, %c0_12, %c0_13, %c0_14], %12 {strides = array<i32>} : memref<1x10x10x128xbf16, #tpu.memory_space<vmem>>, vector<1x1x10x128xbf16>,
    %cst_15 = arith.constant 0.000000e+00 : bf16
    %14 = vector.broadcast %cst_15 : bf16 to vector<1x1x10x128xbf16>
    %c0_16 = arith.constant 0 : index
    %c9 = arith.constant 9 : index
    %c0_17 = arith.constant 0 : index
    %c0_18 = arith.constant 0 : index
    %15 = vector.load %arg12[%c0_16, %c9, %c0_17, %c0_18] : memref<1x10x10x128xbf16, #tpu.memory_space<vmem>>, vector<1x1x10x128xbf16>
    tpu.vector_store %arg12[%c0_16, %c9, %c0_17, %c0_18], %14 {strides = array<i32>} : memref<1x10x10x128xbf16, #tpu.memory_space<vmem>>, vector<1x1x10x128xbf16>,
    %cst_19 = arith.constant 0.000000e+00 : bf16
    %16 = vector.broadcast %cst_19 : bf16 to vector<1x8x1x128xbf16>
    %c0_20 = arith.constant 0 : index
    %c1 = arith.constant 1 : index
    %c0_21 = arith.constant 0 : index
    %c0_22 = arith.constant 0 : index
    %17 = vector.load %arg12[%c0_20, %c1, %c0_21, %c0_22] : memref<1x10x10x128xbf16, #tpu.memory_space<vmem>>, vector<1x8x1x128xbf16>
    tpu.vector_store %arg12[%c0_20, %c1, %c0_21, %c0_22], %16 {strides = array<i32>} : memref<1x10x10x128xbf16, #tpu.memory_space<vmem>>, vector<1x8x1x128xbf16>,
    %cst_23 = arith.constant 0.000000e+00 : bf16
    %18 = vector.broadcast %cst_23 : bf16 to vector<1x8x1x128xbf16>
    %c0_24 = arith.constant 0 : index
    %c1_25 = arith.constant 1 : index
    %c9_26 = arith.constant 9 : index
    %c0_27 = arith.constant 0 : index
    %19 = vector.load %arg12[%c0_24, %c1_25, %c9_26, %c0_27] : memref<1x10x10x128xbf16, #tpu.memory_space<vmem>>, vector<1x8x1x128xbf16>
    tpu.vector_store %arg12[%c0_24, %c1_25, %c9_26, %c0_27], %18 {strides = array<i32>} : memref<1x10x10x128xbf16, #tpu.memory_space<vmem>>, vector<1x8x1x128xbf16>,
    %20 = arith.truncf %11 : vector<64x128xf32> to vector<64x128xbf16>
    %21 = vector.shape_cast %20 : vector<64x128xbf16> to vector<1x8x8x128xbf16>
    %c0_28 = arith.constant 0 : index
    %c1_29 = arith.constant 1 : index
    %c1_30 = arith.constant 1 : index
    %c0_31 = arith.constant 0 : index
    %22 = vector.load %arg12[%c0_28, %c1_29, %c1_30, %c0_31] : memref<1x10x10x128xbf16, #tpu.memory_space<vmem>>, vector<1x8x8x128xbf16>
    tpu.vector_store %arg12[%c0_28, %c1_29, %c1_30, %c0_31], %21 {strides = array<i32>} : memref<1x10x10x128xbf16, #tpu.memory_space<vmem>>, vector<1x8x8x128xbf16>,
    %c0_32 = arith.constant 0 : index
    %c0_33 = arith.constant 0 : index
    %c0_34 = arith.constant 0 : index
    %c0_35 = arith.constant 0 : index
    %23 = vector.load %arg12[%c0_32, %c0_33, %c0_34, %c0_35] : memref<1x10x10x128xbf16, #tpu.memory_space<vmem>>, vector<1x8x8x128xbf16>
    %24 = vector.shape_cast %23 : vector<1x8x8x128xbf16> to vector<64x128xbf16>
    %c0_36 = arith.constant 0 : index
    %c0_37 = arith.constant 0 : index
    %c0_38 = arith.constant 0 : index
    %25 = vector.load %arg5[%c0_36, %c0_37, %c0_38] : memref<9x128x128xbf16, #tpu.memory_space<vmem>>, vector<1x128x128xbf16>
    %26 = vector.shape_cast %25 : vector<1x128x128xbf16> to vector<128x128xbf16>
    %cst_39 = arith.constant dense<0.000000e+00> : vector<64x128xf32>
    %27 = tpu.matmul %24, %26, %cst_39 {dimension_numbers = #tpu.dot_dimension_numbers<[1], [0], [0], [1], [0, 0, 1, 1], [], []>} : vector<64x128xbf16>, vector<128x128xbf16>, vector<64x128xf32> -> vector<64x128xf32>
    %c0_40 = arith.constant 0 : index
    %c0_41 = arith.constant 0 : index
    %28 = vector.load %arg13[%c0_40, %c0_41] : memref<64x128xf32, #tpu.memory_space<vmem>>, vector<64x128xf32>
    tpu.vector_store %arg13[%c0_40, %c0_41], %27 {strides = array<i32>} : memref<64x128xf32, #tpu.memory_space<vmem>>, vector<64x128xf32>,
    %c0_42 = arith.constant 0 : index
    %c0_43 = arith.constant 0 : index
    %c1_44 = arith.constant 1 : index
    %c0_45 = arith.constant 0 : index
    %29 = vector.load %arg12[%c0_42, %c0_43, %c1_44, %c0_45] : memref<1x10x10x128xbf16, #tpu.memory_space<vmem>>, vector<1x8x8x128xbf16>
    %30 = vector.shape_cast %29 : vector<1x8x8x128xbf16> to vector<64x128xbf16>
    %c1_46 = arith.constant 1 : index
    %c0_47 = arith.constant 0 : index
    %c0_48 = arith.constant 0 : index
    %31 = vector.load %arg5[%c1_46, %c0_47, %c0_48] : memref<9x128x128xbf16, #tpu.memory_space<vmem>>, vector<1x128x128xbf16>
    %32 = vector.shape_cast %31 : vector<1x128x128xbf16> to vector<128x128xbf16>
    %cst_49 = arith.constant dense<0.000000e+00> : vector<64x128xf32>
    %33 = tpu.matmul %30, %32, %cst_49 {dimension_numbers = #tpu.dot_dimension_numbers<[1], [0], [0], [1], [0, 0, 1, 1], [], []>} : vector<64x128xbf16>, vector<128x128xbf16>, vector<64x128xf32> -> vector<64x128xf32>
    %c0_50 = arith.constant 0 : index
    %c0_51 = arith.constant 0 : index
    %34 = vector.load %arg13[%c0_50, %c0_51] : memref<64x128xf32, #tpu.memory_space<vmem>>, vector<64x128xf32>
    %35 = arith.addf %34, %33 : vector<64x128xf32>
    %c0_52 = arith.constant 0 : index
    %c0_53 = arith.constant 0 : index
    %36 = vector.load %arg13[%c0_52, %c0_53] : memref<64x128xf32, #tpu.memory_space<vmem>>, vector<64x128xf32>
    tpu.vector_store %arg13[%c0_52, %c0_53], %35 {strides = array<i32>} : memref<64x128xf32, #tpu.memory_space<vmem>>, vector<64x128xf32>,
    %c0_54 = arith.constant 0 : index
    %c0_55 = arith.constant 0 : index
    %c2 = arith.constant 2 : index
    %c0_56 = arith.constant 0 : index
    %37 = vector.load %arg12[%c0_54, %c0_55, %c2, %c0_56] : memref<1x10x10x128xbf16, #tpu.memory_space<vmem>>, vector<1x8x8x128xbf16>
    %38 = vector.shape_cast %37 : vector<1x8x8x128xbf16> to vector<64x128xbf16>
    %c2_57 = arith.constant 2 : index
    %c0_58 = arith.constant 0 : index
    %c0_59 = arith.constant 0 : index
    %39 = vector.load %arg5[%c2_57, %c0_58, %c0_59] : memref<9x128x128xbf16, #tpu.memory_space<vmem>>, vector<1x128x128xbf16>
    %40 = vector.shape_cast %39 : vector<1x128x128xbf16> to vector<128x128xbf16>
    %cst_60 = arith.constant dense<0.000000e+00> : vector<64x128xf32>
    %41 = tpu.matmul %38, %40, %cst_60 {dimension_numbers = #tpu.dot_dimension_numbers<[1], [0], [0], [1], [0, 0, 1, 1], [], []>} : vector<64x128xbf16>, vector<128x128xbf16>, vector<64x128xf32> -> vector<64x128xf32>
    %c0_61 = arith.constant 0 : index
    %c0_62 = arith.constant 0 : index
    %42 = vector.load %arg13[%c0_61, %c0_62] : memref<64x128xf32, #tpu.memory_space<vmem>>, vector<64x128xf32>
    %43 = arith.addf %42, %41 : vector<64x128xf32>
    %c0_63 = arith.constant 0 : index
    %c0_64 = arith.constant 0 : index
    %44 = vector.load %arg13[%c0_63, %c0_64] : memref<64x128xf32, #tpu.memory_space<vmem>>, vector<64x128xf32>
    tpu.vector_store %arg13[%c0_63, %c0_64], %43 {strides = array<i32>} : memref<64x128xf32, #tpu.memory_space<vmem>>, vector<64x128xf32>,
    %c0_65 = arith.constant 0 : index
    %c1_66 = arith.constant 1 : index
    %c0_67 = arith.constant 0 : index
    %c0_68 = arith.constant 0 : index
    %45 = vector.load %arg12[%c0_65, %c1_66, %c0_67, %c0_68] : memref<1x10x10x128xbf16, #tpu.memory_space<vmem>>, vector<1x8x8x128xbf16>
    %46 = vector.shape_cast %45 : vector<1x8x8x128xbf16> to vector<64x128xbf16>
    %c3 = arith.constant 3 : index
    %c0_69 = arith.constant 0 : index
    %c0_70 = arith.constant 0 : index
    %47 = vector.load %arg5[%c3, %c0_69, %c0_70] : memref<9x128x128xbf16, #tpu.memory_space<vmem>>, vector<1x128x128xbf16>
    %48 = vector.shape_cast %47 : vector<1x128x128xbf16> to vector<128x128xbf16>
    %cst_71 = arith.constant dense<0.000000e+00> : vector<64x128xf32>
    %49 = tpu.matmul %46, %48, %cst_71 {dimension_numbers = #tpu.dot_dimension_numbers<[1], [0], [0], [1], [0, 0, 1, 1], [], []>} : vector<64x128xbf16>, vector<128x128xbf16>, vector<64x128xf32> -> vector<64x128xf32>
    %c0_72 = arith.constant 0 : index
    %c0_73 = arith.constant 0 : index
    %50 = vector.load %arg13[%c0_72, %c0_73] : memref<64x128xf32, #tpu.memory_space<vmem>>, vector<64x128xf32>
    %51 = arith.addf %50, %49 : vector<64x128xf32>
    %c0_74 = arith.constant 0 : index
    %c0_75 = arith.constant 0 : index
    %52 = vector.load %arg13[%c0_74, %c0_75] : memref<64x128xf32, #tpu.memory_space<vmem>>, vector<64x128xf32>
    tpu.vector_store %arg13[%c0_74, %c0_75], %51 {strides = array<i32>} : memref<64x128xf32, #tpu.memory_space<vmem>>, vector<64x128xf32>,
    %c0_76 = arith.constant 0 : index
    %c1_77 = arith.constant 1 : index
    %c1_78 = arith.constant 1 : index
    %c0_79 = arith.constant 0 : index
    %53 = vector.load %arg12[%c0_76, %c1_77, %c1_78, %c0_79] : memref<1x10x10x128xbf16, #tpu.memory_space<vmem>>, vector<1x8x8x128xbf16>
    %54 = vector.shape_cast %53 : vector<1x8x8x128xbf16> to vector<64x128xbf16>
    %c4 = arith.constant 4 : index
    %c0_80 = arith.constant 0 : index
    %c0_81 = arith.constant 0 : index
    %55 = vector.load %arg5[%c4, %c0_80, %c0_81] : memref<9x128x128xbf16, #tpu.memory_space<vmem>>, vector<1x128x128xbf16>
    %56 = vector.shape_cast %55 : vector<1x128x128xbf16> to vector<128x128xbf16>
    %cst_82 = arith.constant dense<0.000000e+00> : vector<64x128xf32>
    %57 = tpu.matmul %54, %56, %cst_82 {dimension_numbers = #tpu.dot_dimension_numbers<[1], [0], [0], [1], [0, 0, 1, 1], [], []>} : vector<64x128xbf16>, vector<128x128xbf16>, vector<64x128xf32> -> vector<64x128xf32>
    %c0_83 = arith.constant 0 : index
    %c0_84 = arith.constant 0 : index
    %58 = vector.load %arg13[%c0_83, %c0_84] : memref<64x128xf32, #tpu.memory_space<vmem>>, vector<64x128xf32>
    %59 = arith.addf %58, %57 : vector<64x128xf32>
    %c0_85 = arith.constant 0 : index
    %c0_86 = arith.constant 0 : index
    %60 = vector.load %arg13[%c0_85, %c0_86] : memref<64x128xf32, #tpu.memory_space<vmem>>, vector<64x128xf32>
    tpu.vector_store %arg13[%c0_85, %c0_86], %59 {strides = array<i32>} : memref<64x128xf32, #tpu.memory_space<vmem>>, vector<64x128xf32>,
    %c0_87 = arith.constant 0 : index
    %c1_88 = arith.constant 1 : index
    %c2_89 = arith.constant 2 : index
    %c0_90 = arith.constant 0 : index
    %61 = vector.load %arg12[%c0_87, %c1_88, %c2_89, %c0_90] : memref<1x10x10x128xbf16, #tpu.memory_space<vmem>>, vector<1x8x8x128xbf16>
    %62 = vector.shape_cast %61 : vector<1x8x8x128xbf16> to vector<64x128xbf16>
    %c5 = arith.constant 5 : index
    %c0_91 = arith.constant 0 : index
    %c0_92 = arith.constant 0 : index
    %63 = vector.load %arg5[%c5, %c0_91, %c0_92] : memref<9x128x128xbf16, #tpu.memory_space<vmem>>, vector<1x128x128xbf16>
    %64 = vector.shape_cast %63 : vector<1x128x128xbf16> to vector<128x128xbf16>
    %cst_93 = arith.constant dense<0.000000e+00> : vector<64x128xf32>
    %65 = tpu.matmul %62, %64, %cst_93 {dimension_numbers = #tpu.dot_dimension_numbers<[1], [0], [0], [1], [0, 0, 1, 1], [], []>} : vector<64x128xbf16>, vector<128x128xbf16>, vector<64x128xf32> -> vector<64x128xf32>
    %c0_94 = arith.constant 0 : index
    %c0_95 = arith.constant 0 : index
    %66 = vector.load %arg13[%c0_94, %c0_95] : memref<64x128xf32, #tpu.memory_space<vmem>>, vector<64x128xf32>
    %67 = arith.addf %66, %65 : vector<64x128xf32>
    %c0_96 = arith.constant 0 : index
    %c0_97 = arith.constant 0 : index
    %68 = vector.load %arg13[%c0_96, %c0_97] : memref<64x128xf32, #tpu.memory_space<vmem>>, vector<64x128xf32>
    tpu.vector_store %arg13[%c0_96, %c0_97], %67 {strides = array<i32>} : memref<64x128xf32, #tpu.memory_space<vmem>>, vector<64x128xf32>,
    %c0_98 = arith.constant 0 : index
    %c2_99 = arith.constant 2 : index
    %c0_100 = arith.constant 0 : index
    %c0_101 = arith.constant 0 : index
    %69 = vector.load %arg12[%c0_98, %c2_99, %c0_100, %c0_101] : memref<1x10x10x128xbf16, #tpu.memory_space<vmem>>, vector<1x8x8x128xbf16>
    %70 = vector.shape_cast %69 : vector<1x8x8x128xbf16> to vector<64x128xbf16>
    %c6 = arith.constant 6 : index
    %c0_102 = arith.constant 0 : index
    %c0_103 = arith.constant 0 : index
    %71 = vector.load %arg5[%c6, %c0_102, %c0_103] : memref<9x128x128xbf16, #tpu.memory_space<vmem>>, vector<1x128x128xbf16>
    %72 = vector.shape_cast %71 : vector<1x128x128xbf16> to vector<128x128xbf16>
    %cst_104 = arith.constant dense<0.000000e+00> : vector<64x128xf32>
    %73 = tpu.matmul %70, %72, %cst_104 {dimension_numbers = #tpu.dot_dimension_numbers<[1], [0], [0], [1], [0, 0, 1, 1], [], []>} : vector<64x128xbf16>, vector<128x128xbf16>, vector<64x128xf32> -> vector<64x128xf32>
    %c0_105 = arith.constant 0 : index
    %c0_106 = arith.constant 0 : index
    %74 = vector.load %arg13[%c0_105, %c0_106] : memref<64x128xf32, #tpu.memory_space<vmem>>, vector<64x128xf32>
    %75 = arith.addf %74, %73 : vector<64x128xf32>
    %c0_107 = arith.constant 0 : index
    %c0_108 = arith.constant 0 : index
    %76 = vector.load %arg13[%c0_107, %c0_108] : memref<64x128xf32, #tpu.memory_space<vmem>>, vector<64x128xf32>
    tpu.vector_store %arg13[%c0_107, %c0_108], %75 {strides = array<i32>} : memref<64x128xf32, #tpu.memory_space<vmem>>, vector<64x128xf32>,
    %c0_109 = arith.constant 0 : index
    %c2_110 = arith.constant 2 : index
    %c1_111 = arith.constant 1 : index
    %c0_112 = arith.constant 0 : index
    %77 = vector.load %arg12[%c0_109, %c2_110, %c1_111, %c0_112] : memref<1x10x10x128xbf16, #tpu.memory_space<vmem>>, vector<1x8x8x128xbf16>
    %78 = vector.shape_cast %77 : vector<1x8x8x128xbf16> to vector<64x128xbf16>
    %c7 = arith.constant 7 : index
    %c0_113 = arith.constant 0 : index
    %c0_114 = arith.constant 0 : index
    %79 = vector.load %arg5[%c7, %c0_113, %c0_114] : memref<9x128x128xbf16, #tpu.memory_space<vmem>>, vector<1x128x128xbf16>
    %80 = vector.shape_cast %79 : vector<1x128x128xbf16> to vector<128x128xbf16>
    %cst_115 = arith.constant dense<0.000000e+00> : vector<64x128xf32>
    %81 = tpu.matmul %78, %80, %cst_115 {dimension_numbers = #tpu.dot_dimension_numbers<[1], [0], [0], [1], [0, 0, 1, 1], [], []>} : vector<64x128xbf16>, vector<128x128xbf16>, vector<64x128xf32> -> vector<64x128xf32>
    %c0_116 = arith.constant 0 : index
    %c0_117 = arith.constant 0 : index
    %82 = vector.load %arg13[%c0_116, %c0_117] : memref<64x128xf32, #tpu.memory_space<vmem>>, vector<64x128xf32>
    %83 = arith.addf %82, %81 : vector<64x128xf32>
    %c0_118 = arith.constant 0 : index
    %c0_119 = arith.constant 0 : index
    %84 = vector.load %arg13[%c0_118, %c0_119] : memref<64x128xf32, #tpu.memory_space<vmem>>, vector<64x128xf32>
    tpu.vector_store %arg13[%c0_118, %c0_119], %83 {strides = array<i32>} : memref<64x128xf32, #tpu.memory_space<vmem>>, vector<64x128xf32>,
    %c0_120 = arith.constant 0 : index
    %c2_121 = arith.constant 2 : index
    %c2_122 = arith.constant 2 : index
    %c0_123 = arith.constant 0 : index
    %85 = vector.load %arg12[%c0_120, %c2_121, %c2_122, %c0_123] : memref<1x10x10x128xbf16, #tpu.memory_space<vmem>>, vector<1x8x8x128xbf16>
    %86 = vector.shape_cast %85 : vector<1x8x8x128xbf16> to vector<64x128xbf16>
    %c8 = arith.constant 8 : index
    %c0_124 = arith.constant 0 : index
    %c0_125 = arith.constant 0 : index
    %87 = vector.load %arg5[%c8, %c0_124, %c0_125] : memref<9x128x128xbf16, #tpu.memory_space<vmem>>, vector<1x128x128xbf16>
    %88 = vector.shape_cast %87 : vector<1x128x128xbf16> to vector<128x128xbf16>
    %cst_126 = arith.constant dense<0.000000e+00> : vector<64x128xf32>
    %89 = tpu.matmul %86, %88, %cst_126 {dimension_numbers = #tpu.dot_dimension_numbers<[1], [0], [0], [1], [0, 0, 1, 1], [], []>} : vector<64x128xbf16>, vector<128x128xbf16>, vector<64x128xf32> -> vector<64x128xf32>
    %c0_127 = arith.constant 0 : index
    %c0_128 = arith.constant 0 : index
    %90 = vector.load %arg13[%c0_127, %c0_128] : memref<64x128xf32, #tpu.memory_space<vmem>>, vector<64x128xf32>
    %91 = arith.addf %90, %89 : vector<64x128xf32>
    %c0_129 = arith.constant 0 : index
    %c0_130 = arith.constant 0 : index
    %92 = vector.load %arg13[%c0_129, %c0_130] : memref<64x128xf32, #tpu.memory_space<vmem>>, vector<64x128xf32>
    tpu.vector_store %arg13[%c0_129, %c0_130], %91 {strides = array<i32>} : memref<64x128xf32, #tpu.memory_space<vmem>>, vector<64x128xf32>,
    %c0_131 = arith.constant 0 : index
    %c0_132 = arith.constant 0 : index
    %93 = vector.load %arg13[%c0_131, %c0_132] : memref<64x128xf32, #tpu.memory_space<vmem>>, vector<64x128xf32>
    %c0_133 = arith.constant 0 : index
    %c0_134 = arith.constant 0 : index
    %94 = vector.load %arg6[%c0_133, %c0_134] : memref<1x128xf32, #tpu.memory_space<vmem>>, vector<1x128xf32>
    %95 = vector.broadcast %94 : vector<1x128xf32> to vector<64x128xf32>
    %96 = arith.mulf %93, %95 : vector<64x128xf32>
    %c0_135 = arith.constant 0 : index
    %c0_136 = arith.constant 0 : index
    %97 = vector.load %arg7[%c0_135, %c0_136] : memref<1x128xf32, #tpu.memory_space<vmem>>, vector<1x128xf32>
    %98 = vector.broadcast %97 : vector<1x128xf32> to vector<64x128xf32>
    %99 = arith.addf %96, %98 : vector<64x128xf32>
    %cst_137 = arith.constant 0.000000e+00 : f32
    %100 = vector.broadcast %cst_137 : f32 to vector<64x128xf32>
    %101 = arith.maximumf %99, %100 : vector<64x128xf32>
    %102 = arith.truncf %101 : vector<64x128xf32> to vector<64x128xbf16>
    %c0_138 = arith.constant 0 : index
    %c0_139 = arith.constant 0 : index
    %103 = vector.load %arg8[%c0_138, %c0_139] : memref<128x128xbf16, #tpu.memory_space<vmem>>, vector<128x128xbf16>
    %cst_140 = arith.constant dense<0.000000e+00> : vector<64x128xf32>
    %104 = tpu.matmul %102, %103, %cst_140 {dimension_numbers = #tpu.dot_dimension_numbers<[1], [0], [0], [1], [0, 0, 1, 1], [], []>} : vector<64x128xbf16>, vector<128x128xbf16>, vector<64x128xf32> -> vector<64x128xf32>
    %c0_141 = arith.constant 0 : index
    %c0_142 = arith.constant 0 : index
    %105 = vector.load %arg9[%c0_141, %c0_142] : memref<1x128xf32, #tpu.memory_space<vmem>>, vector<1x128xf32>
    %106 = vector.broadcast %105 : vector<1x128xf32> to vector<64x128xf32>
    %107 = arith.mulf %104, %106 : vector<64x128xf32>
    %c0_143 = arith.constant 0 : index
    %c0_144 = arith.constant 0 : index
    %108 = vector.load %arg10[%c0_143, %c0_144] : memref<1x128xf32, #tpu.memory_space<vmem>>, vector<1x128xf32>
    %109 = vector.broadcast %108 : vector<1x128xf32> to vector<64x128xf32>
    %110 = arith.addf %107, %109 : vector<64x128xf32>
    %c0_145 = arith.constant 0 : index
    %c0_146 = arith.constant 0 : index
    %c0_147 = arith.constant 0 : index
    %c0_148 = arith.constant 0 : index
    %111 = vector.load %arg1[%c0_145, %c0_146, %c0_147, %c0_148] : memref<1x8x8x128xbf16, #tpu.memory_space<vmem>>, vector<1x8x8x128xbf16>
    %112 = vector.shape_cast %111 : vector<1x8x8x128xbf16> to vector<64x128xbf16>
    %113 = arith.extf %112 : vector<64x128xbf16> to vector<64x128xf32>
    %114 = arith.addf %110, %113 : vector<64x128xf32>
    %cst_149 = arith.constant 0.000000e+00 : f32
    %115 = vector.broadcast %cst_149 : f32 to vector<64x128xf32>
    %116 = arith.maximumf %114, %115 : vector<64x128xf32>
    %117 = vector.shape_cast %116 : vector<64x128xf32> to vector<1x8x8x128xf32>
    %118 = arith.truncf %117 : vector<1x8x8x128xf32> to vector<1x8x8x128xbf16>
    %c0_150 = arith.constant 0 : index
    %c0_151 = arith.constant 0 : index
    %c0_152 = arith.constant 0 : index
    %c0_153 = arith.constant 0 : index
    %119 = vector.load %arg11[%c0_150, %c0_151, %c0_152, %c0_153] : memref<1x8x8x128xbf16, #tpu.memory_space<vmem>>, vector<1x8x8x128xbf16>
    tpu.vector_store %arg11[%c0_150, %c0_151, %c0_152, %c0_153], %118 {strides = array<i32>} : memref<1x8x8x128xbf16, #tpu.memory_space<vmem>>, vector<1x8x8x128xbf16>,
    return
  }
  func.func @transform_0(%arg0: i32) -> (i32, i32, i32, i32) {
    %c0_i32 = arith.constant 0 : i32
    %c0_i32_0 = arith.constant 0 : i32
    %c0_i32_1 = arith.constant 0 : i32
    %c0_i32_2 = arith.constant 0 : i32
    return %arg0, %c0_i32, %c0_i32_0, %c0_i32_1 : i32, i32, i32, i32
  }
  func.func @transform_1(%arg0: i32) -> (i32, i32) {
    %c0_i32 = arith.constant 0 : i32
    %c0_i32_0 = arith.constant 0 : i32
    %c0_i32_1 = arith.constant 0 : i32
    return %c0_i32, %c0_i32_0 : i32, i32
  }
  func.func @transform_2(%arg0: i32) -> (i32, i32) {
    %c0_i32 = arith.constant 0 : i32
    %c0_i32_0 = arith.constant 0 : i32
    %c0_i32_1 = arith.constant 0 : i32
    return %c0_i32, %c0_i32_0 : i32, i32
  }
  func.func @transform_3(%arg0: i32) -> (i32, i32) {
    %c0_i32 = arith.constant 0 : i32
    %c0_i32_0 = arith.constant 0 : i32
    %c0_i32_1 = arith.constant 0 : i32
    return %c0_i32, %c0_i32_0 : i32, i32
  }
  func.func @transform_4(%arg0: i32) -> (i32, i32, i32) {
    %c0_i32 = arith.constant 0 : i32
    %c0_i32_0 = arith.constant 0 : i32
    %c0_i32_1 = arith.constant 0 : i32
    %c0_i32_2 = arith.constant 0 : i32
    return %c0_i32, %c0_i32_0, %c0_i32_1 : i32, i32, i32
  }
  func.func @transform_5(%arg0: i32) -> (i32, i32) {
    %c0_i32 = arith.constant 0 : i32
    %c0_i32_0 = arith.constant 0 : i32
    %c0_i32_1 = arith.constant 0 : i32
    return %c0_i32, %c0_i32_0 : i32, i32
  }
  func.func @transform_6(%arg0: i32) -> (i32, i32) {
    %c0_i32 = arith.constant 0 : i32
    %c0_i32_0 = arith.constant 0 : i32
    %c0_i32_1 = arith.constant 0 : i32
    return %c0_i32, %c0_i32_0 : i32, i32
  }
  func.func @transform_7(%arg0: i32) -> (i32, i32) {
    %c0_i32 = arith.constant 0 : i32
    %c0_i32_0 = arith.constant 0 : i32
    %c0_i32_1 = arith.constant 0 : i32
    return %c0_i32, %c0_i32_0 : i32, i32
  }
  func.func @transform_8(%arg0: i32) -> (i32, i32) {
    %c0_i32 = arith.constant 0 : i32
    %c0_i32_0 = arith.constant 0 : i32
    %c0_i32_1 = arith.constant 0 : i32
    return %c0_i32, %c0_i32_0 : i32, i32
  }
  func.func @transform_9(%arg0: i32) -> (i32, i32) {
    %c0_i32 = arith.constant 0 : i32
    %c0_i32_0 = arith.constant 0 : i32
    %c0_i32_1 = arith.constant 0 : i32
    return %c0_i32, %c0_i32_0 : i32, i32
  }
  func.func @transform_10(%arg0: i32) -> (i32, i32, i32, i32) {
    %c0_i32 = arith.constant 0 : i32
    %c0_i32_0 = arith.constant 0 : i32
    %c0_i32_1 = arith.constant 0 : i32
    %c0_i32_2 = arith.constant 0 : i32
    return %arg0, %c0_i32, %c0_i32_0, %c0_i32_1 : i32, i32, i32, i32
  }
}

</mosaic_0001>

<llo_original>
// kernel: tpu_custom_call.1
$region0: #{tpu_custom_call.1}
  #allocation0 [shape = 'u32[]', space=smem, size = 0x4, offset = 0x4, fixed_abs, tag = 'smem constant byte address 0x4 - core index']
  #allocation1 [shape = 'u32[144,128]{1,0:T(1,128)}', space=vmem, size = 0x12000, scoped, tag = 'internal scratch']
  #allocation2 [shape = 'bf16[1,10,10,128]{3,2,1,0:T(8,128)(2,1)}', space=vmem, size = 0xa000, scoped, tag = 'scratch operand']
  #allocation3 [shape = 'f32[64,128]{1,0:T(8,128)}', space=vmem, size = 0x8000, scoped, tag = 'scratch operand']
  %s0 = inlined_call_operand.hbm [shape: bf16[2,8,8,128], index: 0, kind: input, shape index: {}]
  %s1 = inlined_call_operand.hbm [shape: bf16[128,128], index: 1, kind: input, shape index: {}]
  %s2 = inlined_call_operand.vmem [shape: f32[1,128], index: 2, kind: input, shape index: {}]
  %s3 = inlined_call_operand.vmem [shape: f32[1,128], index: 3, kind: input, shape index: {}]
  %s4 = inlined_call_operand.hbm [shape: bf16[9,128,128], index: 4, kind: input, shape index: {}]
  %s5 = inlined_call_operand.vmem [shape: f32[1,128], index: 5, kind: input, shape index: {}]
  %s6 = inlined_call_operand.vmem [shape: f32[1,128], index: 6, kind: input, shape index: {}]
  %s7 = inlined_call_operand.hbm [shape: bf16[128,128], index: 7, kind: input, shape index: {}]
  %s8 = inlined_call_operand.vmem [shape: f32[1,128], index: 8, kind: input, shape index: {}]
  %s9 = inlined_call_operand.vmem [shape: f32[1,128], index: 9, kind: input, shape index: {}]
  %s10 = inlined_call_operand.hbm [shape: bf16[2,8,8,128], index: 10, kind: output, shape index: {}]
  %s11 = sld [smem:[#allocation0]]
  $region89: #{tpu_custom_call.1} parent=0
    _
  %s13 = ssub.s32 1, %s11
  %s14 = scalar_select 0, %s13, %s11
  $region1: #{tpu_custom_call.1} parent=0
    #allocation4 [shape = 'u8[32768]{0}', space=vmem, size = 0x8000, scoped, tag = 'input window, operand 0']
    #allocation5 [shape = 's32[2]{0}', space=sflag, size = 0x8, scoped, tag = 'scoped memory for tpu_custom_call.1']
    #allocation6 [shape = 's32[2]{0}', space=sflag, size = 0x8, scoped, tag = 'scoped memory for tpu_custom_call.1']
    #allocation7 [shape = 'u8[32768]{0}', space=vmem, size = 0x8000, scoped, tag = 'input window, operand 1, single buffered']
    #allocation8 [shape = 's32[1]{0}', space=sflag, size = 0x4, scoped, tag = 'scoped memory for tpu_custom_call.1']
    #allocation9 [shape = 'u8[294912]{0}', space=vmem, size = 0x48000, scoped, tag = 'input window, operand 4, single buffered']
    #allocation10 [shape = 'u8[32768]{0}', space=vmem, size = 0x8000, scoped, tag = 'input window, operand 7, single buffered']
    #allocation11 [shape = 's32[1]{0}', space=sflag, size = 0x4, scoped, tag = 'scoped memory for tpu_custom_call.1']
    #allocation12 [shape = 'u8[32768]{0}', space=vmem, size = 0x8000, scoped, tag = 'output window, operand 0']
    %15 = vsyncpa [#allocation5], 0
    %s16 = scalar_lea.sflag [#allocation5], 1
    %17 = vsyncpa %s16, 0
    %18 = vsyncpa [#allocation8], 0
    %19 = vsyncpa [#allocation11], 0
    %20 = vsyncpa [#allocation6], 0
    %s21 = scalar_lea.sflag [#allocation6], 1
    %22 = vsyncpa %s21, 0
    loop: start=0, step=1, limit=4
    $region2: #{tpu_custom_call.1} parent=1 // loop_pre_header
      _
    $region3: #{tpu_custom_call.1} parent=1 // loop_header
      %s24 = sphi 0, %s28
      %p25 = scmp.ge.s32.totalorder %s24, 4
      %s34 = sphi 0, %s36
      %s37 = sphi 0, %s34
      %s38 = sphi 0, %s37
      %s54 = sphi 0, %s38
      %s58 = sphi 0, %s58
      %s60 = sphi 0, %s58
      %s61 = sphi 0, %s60
      %s75 = sphi 0, %s61
      %s79 = sphi 0, %s79
      %s81 = sphi 0, %s79
      %s82 = sphi 0, %s81
      %s96 = sphi 0, %s82
      %s100 = sphi 0, %s100
      %s102 = sphi 0, %s100
      %s103 = sphi 0, %s102
      %s117 = sphi 0, %s103
      %s121 = sphi 0, %s121
      %s123 = sphi 0, %s121
      %s124 = sphi 0, %s123
      %s138 = sphi 0, %s124
      %s142 = sphi 0, %s142
      %s144 = sphi 0, %s142
      %s145 = sphi 0, %s144
      %s159 = sphi 0, %s145
      %s163 = sphi 0, %s163
      %s165 = sphi 0, %s163
      %s166 = sphi 0, %s165
      %s180 = sphi 0, %s166
      %s184 = sphi 0, %s184
      %s186 = sphi 0, %s184
      %s187 = sphi 0, %s186
      %s201 = sphi 0, %s187
      %s205 = sphi 0, %s205
      %s207 = sphi 0, %s205
      %s208 = sphi 0, %s207
      %s222 = sphi 0, %s208
      %s226 = sphi 0, %s226
      %s228 = sphi 0, %s226
      %s229 = sphi 0, %s228
      %s243 = sphi 0, %s229
      %s249 = sphi 0, %s251
      %s252 = sphi 0, %s249
      %s253 = sphi 0, %s252
      %s269 = sphi 0, %s253
    $region4: #{tpu_custom_call.1} parent=1 // loop_header_branch
      %27 = sbr.rel (%p25) target = $region8
    $region5: #{tpu_custom_call.1} parent=1 // loop_body
      %s29 = ssub.s32 %s24, 1
      %s30 = ssub.s32 %s24, 2
      %s31 = sadd.s32 %s24, 1
      %s32 = ssub.s32 %s24, %s31
      %p33 = scmp.eq.s32.totalorder %s32, 0
      %s35 = sadd.s32 %s34, 1
      %s36 = scalar_select %p33, %s34, %s35
      %p39 = pneg %p33
      %p40 = scmp.eq.s32.totalorder %s24, 1
      %p41 = por %p39, %p40
      %p42 = scmp.ne.s32.totalorder %s34, %s37
      %p43 = scmp.eq.s32.totalorder %s24, 0
      %p44 = por %p42, %p43
      %p45 = scmp.ne.s32.totalorder %s34, %s37
      %p46 = scmp.eq.s32.totalorder %s29, 1
      %p47 = por %p45, %p46
      %p48 = scmp.ne.s32.totalorder %s37, %s38
      %p49 = scmp.eq.s32.totalorder %s29, 0
      %p50 = por %p48, %p49
      %p51 = scmp.ne.s32.totalorder %s37, %s38
      %p52 = scmp.eq.s32.totalorder %s30, 1
      %p53 = por %p51, %p52
      %p55 = scmp.ne.s32.totalorder %s38, %s54
      %p56 = scmp.eq.s32.totalorder %s30, 0
      %p57 = por %p55, %p56
      %s59 = sadd.s32 %s58, 1
      %p62 = scmp.eq.s32.totalorder %s24, 1
      %p63 = scmp.ne.s32.totalorder %s58, %s60
      %p64 = scmp.eq.s32.totalorder %s24, 0
      %p65 = por %p63, %p64
      %p66 = scmp.ne.s32.totalorder %s58, %s60
      %p67 = scmp.eq.s32.totalorder %s29, 1
      %p68 = por %p66, %p67
      %p69 = scmp.ne.s32.totalorder %s60, %s61
      %p70 = scmp.eq.s32.totalorder %s29, 0
      %p71 = por %p69, %p70
      %p72 = scmp.ne.s32.totalorder %s60, %s61
      %p73 = scmp.eq.s32.totalorder %s30, 1
      %p74 = por %p72, %p73
      %p76 = scmp.ne.s32.totalorder %s61, %s75
      %p77 = scmp.eq.s32.totalorder %s30, 0
      %p78 = por %p76, %p77
      %s80 = sadd.s32 %s79, 1
      %p83 = scmp.eq.s32.totalorder %s24, 1
      %p84 = scmp.ne.s32.totalorder %s79, %s81
      %p85 = scmp.eq.s32.totalorder %s24, 0
      %p86 = por %p84, %p85
      %p87 = scmp.ne.s32.totalorder %s79, %s81
      %p88 = scmp.eq.s32.totalorder %s29, 1
      %p89 = por %p87, %p88
      %p90 = scmp.ne.s32.totalorder %s81, %s82
      %p91 = scmp.eq.s32.totalorder %s29, 0
      %p92 = por %p90, %p91
      %p93 = scmp.ne.s32.totalorder %s81, %s82
      %p94 = scmp.eq.s32.totalorder %s30, 1
      %p95 = por %p93, %p94
      %p97 = scmp.ne.s32.totalorder %s82, %s96
      %p98 = scmp.eq.s32.totalorder %s30, 0
      %p99 = por %p97, %p98
      %s101 = sadd.s32 %s100, 1
      %p104 = scmp.eq.s32.totalorder %s24, 1
      %p105 = scmp.ne.s32.totalorder %s100, %s102
      %p106 = scmp.eq.s32.totalorder %s24, 0
      %p107 = por %p105, %p106
      %p108 = scmp.ne.s32.totalorder %s100, %s102
      %p109 = scmp.eq.s32.totalorder %s29, 1
      %p110 = por %p108, %p109
      %p111 = scmp.ne.s32.totalorder %s102, %s103
      %p112 = scmp.eq.s32.totalorder %s29, 0
      %p113 = por %p111, %p112
      %p114 = scmp.ne.s32.totalorder %s102, %s103
      %p115 = scmp.eq.s32.totalorder %s30, 1
      %p116 = por %p114, %p115
      %p118 = scmp.ne.s32.totalorder %s103, %s117
      %p119 = scmp.eq.s32.totalorder %s30, 0
      %p120 = por %p118, %p119
      %s122 = sadd.s32 %s121, 1
      %p125 = scmp.eq.s32.totalorder %s24, 1
      %p126 = scmp.ne.s32.totalorder %s121, %s123
      %p127 = scmp.eq.s32.totalorder %s24, 0
      %p128 = por %p126, %p127
      %p129 = scmp.ne.s32.totalorder %s121, %s123
      %p130 = scmp.eq.s32.totalorder %s29, 1
      %p131 = por %p129, %p130
      %p132 = scmp.ne.s32.totalorder %s123, %s124
      %p133 = scmp.eq.s32.totalorder %s29, 0
      %p134 = por %p132, %p133
      %p135 = scmp.ne.s32.totalorder %s123, %s124
      %p136 = scmp.eq.s32.totalorder %s30, 1
      %p137 = por %p135, %p136
      %p139 = scmp.ne.s32.totalorder %s124, %s138
      %p140 = scmp.eq.s32.totalorder %s30, 0
      %p141 = por %p139, %p140
      %s143 = sadd.s32 %s142, 1
      %p146 = scmp.eq.s32.totalorder %s24, 1
      %p147 = scmp.ne.s32.totalorder %s142, %s144
      %p148 = scmp.eq.s32.totalorder %s24, 0
      %p149 = por %p147, %p148
      %p150 = scmp.ne.s32.totalorder %s142, %s144
      %p151 = scmp.eq.s32.totalorder %s29, 1
      %p152 = por %p150, %p151
      %p153 = scmp.ne.s32.totalorder %s144, %s145
      %p154 = scmp.eq.s32.totalorder %s29, 0
      %p155 = por %p153, %p154
      %p156 = scmp.ne.s32.totalorder %s144, %s145
      %p157 = scmp.eq.s32.totalorder %s30, 1
      %p158 = por %p156, %p157
      %p160 = scmp.ne.s32.totalorder %s145, %s159
      %p161 = scmp.eq.s32.totalorder %s30, 0
      %p162 = por %p160, %p161
      %s164 = sadd.s32 %s163, 1
      %p167 = scmp.eq.s32.totalorder %s24, 1
      %p168 = scmp.ne.s32.totalorder %s163, %s165
      %p169 = scmp.eq.s32.totalorder %s24, 0
      %p170 = por %p168, %p169
      %p171 = scmp.ne.s32.totalorder %s163, %s165
      %p172 = scmp.eq.s32.totalorder %s29, 1
      %p173 = por %p171, %p172
      %p174 = scmp.ne.s32.totalorder %s165, %s166
      %p175 = scmp.eq.s32.totalorder %s29, 0
      %p176 = por %p174, %p175
      %p177 = scmp.ne.s32.totalorder %s165, %s166
      %p178 = scmp.eq.s32.totalorder %s30, 1
      %p179 = por %p177, %p178
      %p181 = scmp.ne.s32.totalorder %s166, %s180
      %p182 = scmp.eq.s32.totalorder %s30, 0
      %p183 = por %p181, %p182
      %s185 = sadd.s32 %s184, 1
      %p188 = scmp.eq.s32.totalorder %s24, 1
      %p189 = scmp.ne.s32.totalorder %s184, %s186
      %p190 = scmp.eq.s32.totalorder %s24, 0
      %p191 = por %p189, %p190
      %p192 = scmp.ne.s32.totalorder %s184, %s186
      %p193 = scmp.eq.s32.totalorder %s29, 1
      %p194 = por %p192, %p193
      %p195 = scmp.ne.s32.totalorder %s186, %s187
      %p196 = scmp.eq.s32.totalorder %s29, 0
      %p197 = por %p195, %p196
      %p198 = scmp.ne.s32.totalorder %s186, %s187
      %p199 = scmp.eq.s32.totalorder %s30, 1
      %p200 = por %p198, %p199
      %p202 = scmp.ne.s32.totalorder %s187, %s201
      %p203 = scmp.eq.s32.totalorder %s30, 0
      %p204 = por %p202, %p203
      %s206 = sadd.s32 %s205, 1
      %p209 = scmp.eq.s32.totalorder %s24, 1
      %p210 = scmp.ne.s32.totalorder %s205, %s207
      %p211 = scmp.eq.s32.totalorder %s24, 0
      %p212 = por %p210, %p211
      %p213 = scmp.ne.s32.totalorder %s205, %s207
      %p214 = scmp.eq.s32.totalorder %s29, 1
      %p215 = por %p213, %p214
      %p216 = scmp.ne.s32.totalorder %s207, %s208
      %p217 = scmp.eq.s32.totalorder %s29, 0
      %p218 = por %p216, %p217
      %p219 = scmp.ne.s32.totalorder %s207, %s208
      %p220 = scmp.eq.s32.totalorder %s30, 1
      %p221 = por %p219, %p220
      %p223 = scmp.ne.s32.totalorder %s208, %s222
      %p224 = scmp.eq.s32.totalorder %s30, 0
      %p225 = por %p223, %p224
      %s227 = sadd.s32 %s226, 1
      %p230 = scmp.eq.s32.totalorder %s24, 1
      %p231 = scmp.ne.s32.totalorder %s226, %s228
      %p232 = scmp.eq.s32.totalorder %s24, 0
      %p233 = por %p231, %p232
      %p234 = scmp.ne.s32.totalorder %s226, %s228
      %p235 = scmp.eq.s32.totalorder %s29, 1
      %p236 = por %p234, %p235
      %p237 = scmp.ne.s32.totalorder %s228, %s229
      %p238 = scmp.eq.s32.totalorder %s29, 0
      %p239 = por %p237, %p238
      %p240 = scmp.ne.s32.totalorder %s228, %s229
      %p241 = scmp.eq.s32.totalorder %s30, 1
      %p242 = por %p240, %p241
      %p244 = scmp.ne.s32.totalorder %s229, %s243
      %p245 = scmp.eq.s32.totalorder %s30, 0
      %p246 = por %p244, %p245
      %s247 = ssub.s32 %s24, %s31
      %p248 = scmp.eq.s32.totalorder %s247, 0
      %s250 = sadd.s32 %s249, 1
      %s251 = scalar_select %p248, %s249, %s250
      %p254 = pneg %p248
      %p255 = scmp.eq.s32.totalorder %s24, 1
      %p256 = por %p254, %p255
      %p257 = scmp.ne.s32.totalorder %s249, %s252
      %p258 = scmp.eq.s32.totalorder %s24, 0
      %p259 = por %p257, %p258
      %p260 = scmp.ne.s32.totalorder %s249, %s252
      %p261 = scmp.eq.s32.totalorder %s29, 1
      %p262 = por %p260, %p261
      %p263 = scmp.ne.s32.totalorder %s252, %s253
      %p264 = scmp.eq.s32.totalorder %s29, 0
      %p265 = por %p263, %p264
      %p266 = scmp.ne.s32.totalorder %s252, %s253
      %p267 = scmp.eq.s32.totalorder %s30, 1
      %p268 = por %p266, %p267
      %p270 = scmp.ne.s32.totalorder %s253, %s269
      %p271 = scmp.eq.s32.totalorder %s30, 0
      %p272 = por %p270, %p271
      %p273 = scmp.le.s32.totalorder 1, %s24
      %p274 = scmp.lt.s32.totalorder %s24, 3
      %p275 = pnand %p273, %p274
      %p276 = pneg %p275
      // Predicated region
      $region9: #{tpu_custom_call.1} parent=5 // pred_check
        _
      $region10: #{tpu_custom_call.1} parent=5 // pred_check_branch
        %278 = sbr.rel (%p275) target = $region12
      $region11: #{tpu_custom_call.1} parent=5 // pred_region
        %s279 = ssub.s32 %s24, 1
        // Predicated region
        $region13: #{tpu_custom_call.1} parent=11 // pred_check
          %p280 = pneg %p71
        $region14: #{tpu_custom_call.1} parent=11 // pred_check_branch
          %282 = sbr.rel (%p280) target = $region16
        $region15: #{tpu_custom_call.1} parent=11 // pred_region
          %s284 = ssub.s32 1024, 1024
          %285 = vsyncadd [#allocation8], %s284
          %s286 = sshll.u32 [#allocation7], 4
          %s287 = int_to_ptr.vmem [resolvable:$true] %s286
          %292 = dma.hbm_to_vmem [thread:$0]  %s1, 1024, %s287, [#allocation8], 64, 64, 4
        $region16: #{tpu_custom_call.1} parent=11 // pred_fallthru
          _
        // Predicated region
        $region17: #{tpu_custom_call.1} parent=11 // pred_check
          %p293 = pneg %p92
        $region18: #{tpu_custom_call.1} parent=11 // pred_check_branch
          %295 = sbr.rel (%p293) target = $region20
        $region19: #{tpu_custom_call.1} parent=11 // pred_region
          _
        $region20: #{tpu_custom_call.1} parent=11 // pred_fallthru
          _
        // Predicated region
        $region21: #{tpu_custom_call.1} parent=11 // pred_check
          %p296 = pneg %p113
        $region22: #{tpu_custom_call.1} parent=11 // pred_check_branch
          %298 = sbr.rel (%p296) target = $region24
        $region23: #{tpu_custom_call.1} parent=11 // pred_region
          _
        $region24: #{tpu_custom_call.1} parent=11 // pred_fallthru
          _
        // Predicated region
        $region25: #{tpu_custom_call.1} parent=11 // pred_check
          %p299 = pneg %p134
        $region26: #{tpu_custom_call.1} parent=11 // pred_check_branch
          %301 = sbr.rel (%p299) target = $region28
        $region27: #{tpu_custom_call.1} parent=11 // pred_region
          %s303 = ssub.s32 9216, 9216
          %304 = vsyncadd [#allocation8], %s303
          %s305 = sshll.u32 [#allocation9], 4
          %s306 = int_to_ptr.vmem [resolvable:$true] %s305
          %311 = dma.hbm_to_vmem [thread:$0]  %s4, 9216, %s306, [#allocation8], 64, 64, 4
        $region28: #{tpu_custom_call.1} parent=11 // pred_fallthru
          _
        // Predicated region
        $region29: #{tpu_custom_call.1} parent=11 // pred_check
          %p312 = pneg %p155
        $region30: #{tpu_custom_call.1} parent=11 // pred_check_branch
          %314 = sbr.rel (%p312) target = $region32
        $region31: #{tpu_custom_call.1} parent=11 // pred_region
          _
        $region32: #{tpu_custom_call.1} parent=11 // pred_fallthru
          _
        // Predicated region
        $region33: #{tpu_custom_call.1} parent=11 // pred_check
          %p315 = pneg %p176
        $region34: #{tpu_custom_call.1} parent=11 // pred_check_branch
          %317 = sbr.rel (%p315) target = $region36
        $region35: #{tpu_custom_call.1} parent=11 // pred_region
          _
        $region36: #{tpu_custom_call.1} parent=11 // pred_fallthru
          _
        // Predicated region
        $region37: #{tpu_custom_call.1} parent=11 // pred_check
          %p318 = pneg %p197
        $region38: #{tpu_custom_call.1} parent=11 // pred_check_branch
          %320 = sbr.rel (%p318) target = $region40
        $region39: #{tpu_custom_call.1} parent=11 // pred_region
          %s322 = ssub.s32 1024, 1024
          %323 = vsyncadd [#allocation11], %s322
          %s324 = sshll.u32 [#allocation10], 4
          %s325 = int_to_ptr.vmem [resolvable:$true] %s324
          %330 = dma.hbm_to_vmem [thread:$0]  %s7, 1024, %s325, [#allocation11], 64, 64, 4
        $region40: #{tpu_custom_call.1} parent=11 // pred_fallthru
          _
        // Predicated region
        $region41: #{tpu_custom_call.1} parent=11 // pred_check
          %p331 = pneg %p218
        $region42: #{tpu_custom_call.1} parent=11 // pred_check_branch
          %333 = sbr.rel (%p331) target = $region44
        $region43: #{tpu_custom_call.1} parent=11 // pred_region
          _
        $region44: #{tpu_custom_call.1} parent=11 // pred_fallthru
          _
        // Predicated region
        $region45: #{tpu_custom_call.1} parent=11 // pred_check
          %p334 = pneg %p239
        $region46: #{tpu_custom_call.1} parent=11 // pred_check_branch
          %336 = sbr.rel (%p334) target = $region48
        $region47: #{tpu_custom_call.1} parent=11 // pred_region
          _
        $region48: #{tpu_custom_call.1} parent=11 // pred_fallthru
          _
      $region12: #{tpu_custom_call.1} parent=5 // pred_fallthru
        _
      %p337 = scmp.lt.s32.totalorder %s24, 2
      // Predicated region
      $region49: #{tpu_custom_call.1} parent=5 // pred_check
        %p338 = pneg %p337
      $region50: #{tpu_custom_call.1} parent=5 // pred_check_branch
        %340 = sbr.rel (%p338) target = $region52
      $region51: #{tpu_custom_call.1} parent=5 // pred_region
        // Predicated region
        $region53: #{tpu_custom_call.1} parent=51 // pred_check
          %p341 = pneg %p44
        $region54: #{tpu_custom_call.1} parent=51 // pred_check_branch
          %343 = sbr.rel (%p341) target = $region56
        $region55: #{tpu_custom_call.1} parent=51 // pred_region
          %s344 = sand.u32 %s34, 1
          %s345 = scalar_lea.sflag [#allocation5], %s344
          %s346 = sand.u32 %s34, 1
          %s347 = smul.addr %s346, 32
          %s348 = scalar_lea.vmem [#allocation4], %s347
          %s350 = ssub.s32 512, 512
          %351 = vsyncadd %s345, %s350
          %s352 = smul.addr %s24, 8
          %s353 = smul.addr %s352, 64
          %s354 = scalar_lea.hbm %s0, %s353
          %s355 = sshll.u32 %s348, 4
          %s356 = int_to_ptr.vmem [resolvable:$true] %s355
          %361 = dma.hbm_to_vmem [thread:$0]  %s354, 512, %s356, %s345, 64, 64, 4
        $region56: #{tpu_custom_call.1} parent=51 // pred_fallthru
          _
      $region52: #{tpu_custom_call.1} parent=5 // pred_fallthru
        _
      %p362 = scmp.le.s32.totalorder 1, %s24
      %p363 = scmp.lt.s32.totalorder %s24, 3
      %p364 = pnand %p362, %p363
      %p365 = pneg %p364
      // Predicated region
      $region57: #{tpu_custom_call.1} parent=5 // pred_check
        _
      $region58: #{tpu_custom_call.1} parent=5 // pred_check_branch
        %367 = sbr.rel (%p364) target = $region60
      $region59: #{tpu_custom_call.1} parent=5 // pred_region
        %s368 = ssub.s32 %s24, 1
        %s369 = sand.u32 %s37, 1
        %s370 = scalar_lea.sflag [#allocation5], %s369
        %s371 = sand.u32 %s37, 1
        %s372 = smul.addr %s371, 32
        %s373 = scalar_lea.vmem [#allocation4], %s372
        // Predicated region
        $region61: #{tpu_custom_call.1} parent=59 // pred_check
          %p374 = pneg %p50
        $region62: #{tpu_custom_call.1} parent=59 // pred_check_branch
          %376 = sbr.rel (%p374) target = $region64
        $region63: #{tpu_custom_call.1} parent=59 // pred_region
          %377 = dma.done %s370, 512
        $region64: #{tpu_custom_call.1} parent=59 // pred_fallthru
          _
        // Predicated region
        $region65: #{tpu_custom_call.1} parent=59 // pred_check
          %p378 = pneg %p71
        $region66: #{tpu_custom_call.1} parent=59 // pred_check_branch
          %380 = sbr.rel (%p378) target = $region68
        $region67: #{tpu_custom_call.1} parent=59 // pred_region
          %381 = dma.done [#allocation8], 1024
        $region68: #{tpu_custom_call.1} parent=59 // pred_fallthru
          _
        // Predicated region
        $region69: #{tpu_custom_call.1} parent=59 // pred_check
          %p382 = pneg %p134
        $region70: #{tpu_custom_call.1} parent=59 // pred_check_branch
          %384 = sbr.rel (%p382) target = $region72
        $region71: #{tpu_custom_call.1} parent=59 // pred_region
          %385 = dma.done [#allocation8], 9216
        $region72: #{tpu_custom_call.1} parent=59 // pred_fallthru
          _
        // Predicated region
        $region73: #{tpu_custom_call.1} parent=59 // pred_check
          %p386 = pneg %p197
        $region74: #{tpu_custom_call.1} parent=59 // pred_check_branch
          %388 = sbr.rel (%p386) target = $region76
        $region75: #{tpu_custom_call.1} parent=59 // pred_region
          %389 = dma.done [#allocation11], 1024
        $region76: #{tpu_custom_call.1} parent=59 // pred_fallthru
          _
        %s390 = sand.u32 %s37, 1
        %s391 = scalar_lea.sflag [#allocation5], %s390
        %s392 = sand.u32 %s37, 1
        %s393 = smul.addr %s392, 32
        %s394 = scalar_lea.vmem [#allocation4], %s393
        %p395 = pneg %p50
        %p396 = pneg %p47
        %p397 = pneg %p71
        %p398 = pneg %p68
        %p399 = pneg %p92
        %p400 = pneg %p89
        %p401 = pneg %p113
        %p402 = pneg %p110
        %p403 = pneg %p134
        %p404 = pneg %p131
        %p405 = pneg %p155
        %p406 = pneg %p152
        %p407 = pneg %p176
        %p408 = pneg %p173
        %p409 = pneg %p197
        %p410 = pneg %p194
        %p411 = pneg %p218
        %p412 = pneg %p215
        %p413 = pneg %p239
        %p414 = pneg %p236
        %p415 = pneg %p265
        %p416 = pneg %p262
        %s417 = sand.u32 %s252, 1
        %s418 = scalar_lea.sflag [#allocation6], %s417
        %s419 = sand.u32 %s252, 1
        %s420 = smul.addr %s419, 32
        %s421 = scalar_lea.vmem [#allocation12], %s420
        %v423 = vld [vmem:[%s373] sm:$0xf]
        %v424 = vld [vmem:[%s373 + $0x4] sm:$0xf]
        %v425 = vld [vmem:[%s373 + $0x8] sm:$0xf]
        %v426 = vld [vmem:[%s373 + $0xc] sm:$0xf]
        %v427 = vld [vmem:[%s373 + $0x10] sm:$0xf]
        %v428 = vld [vmem:[%s373 + $0x14] sm:$0xf]
        %v429 = vld [vmem:[%s373 + $0x18] sm:$0xf]
        %v430 = vld [vmem:[%s373 + $0x1c] sm:$0xf]
        %v431 = vld [vmem:[#allocation7] sm:$0xf]
        %v432 = vld [vmem:[#allocation7 + $0x4] sm:$0xf]
        %v433 = vld [vmem:[#allocation7 + $0x8] sm:$0xf]
        %v434 = vld [vmem:[#allocation7 + $0xc] sm:$0xf]
        %v435 = vld [vmem:[#allocation7 + $0x10] sm:$0xf]
        %v436 = vld [vmem:[#allocation7 + $0x14] sm:$0xf]
        %v437 = vld [vmem:[#allocation7 + $0x18] sm:$0xf]
        %v438 = vld [vmem:[#allocation7 + $0x1c] sm:$0xf]
        %v439 = vld [vmem:[#allocation7 + $0x20] sm:$0xf]
        %v440 = vld [vmem:[#allocation7 + $0x24] sm:$0xf]
        %v441 = vld [vmem:[#allocation7 + $0x28] sm:$0xf]
        %v442 = vld [vmem:[#allocation7 + $0x2c] sm:$0xf]
        %v443 = vld [vmem:[#allocation7 + $0x30] sm:$0xf]
        %v444 = vld [vmem:[#allocation7 + $0x34] sm:$0xf]
        %v445 = vld [vmem:[#allocation7 + $0x38] sm:$0xf]
        %v446 = vld [vmem:[#allocation7 + $0x3c] sm:$0xf]
        %v455 = vunpack.c.l.b16 %v423
        %v456 = vunpack.c.l.b16 %v424
        %v457 = vunpack.c.l.b16 %v425
        %v458 = vunpack.c.l.b16 %v426
        %v459 = vunpack.c.l.b16 %v427
        %v460 = vunpack.c.l.b16 %v428
        %v461 = vunpack.c.l.b16 %v429
        %v462 = vunpack.c.l.b16 %v430
        %v463 = vpack.c.b16 %v456, %v455
        %v464 = vpack.c.b16 %v458, %v457
        %v465 = vpack.c.b16 %v460, %v459
        %v466 = vpack.c.b16 %v462, %v461
        %v487 = vunpack.c.l.b16 %v431
        %v488 = vunpack.c.l.b16 %v432
        %v489 = vunpack.c.l.b16 %v433
        %v490 = vunpack.c.l.b16 %v434
        %v491 = vunpack.c.l.b16 %v435
        %v492 = vunpack.c.l.b16 %v436
        %v493 = vunpack.c.l.b16 %v437
        %v494 = vunpack.c.l.b16 %v438
        %v495 = vunpack.c.l.b16 %v439
        %v496 = vunpack.c.l.b16 %v440
        %v497 = vunpack.c.l.b16 %v441
        %v498 = vunpack.c.l.b16 %v442
        %v499 = vunpack.c.l.b16 %v443
        %v500 = vunpack.c.l.b16 %v444
        %v501 = vunpack.c.l.b16 %v445
        %v502 = vunpack.c.l.b16 %v446
        %v503 = vpack.c.b16 %v488, %v487
        %v504 = vpack.c.b16 %v490, %v489
        %v505 = vpack.c.b16 %v492, %v491
        %v506 = vpack.c.b16 %v494, %v493
        %v507 = vpack.c.b16 %v496, %v495
        %v508 = vpack.c.b16 %v498, %v497
        %v509 = vpack.c.b16 %v500, %v499
        %v510 = vpack.c.b16 %v502, %v501
        %519 = vmatprep.subr.bf16.mxu0 0
        %520 = vmatpush1.bf16.msra.mxu0 %v510
        %521 = vmatprep.subr.bf16.mxu0 0
        %522 = vmatpush1.bf16.msra.mxu0 %v509
        %523 = vmatprep.subr.bf16.mxu0 0
        %524 = vmatpush1.bf16.msra.mxu0 %v508
        %525 = vmatprep.subr.bf16.mxu0 0
        %526 = vmatpush1.bf16.msra.mxu0 %v507
        %527 = vmatprep.subr.bf16.mxu0 0
        %528 = vmatpush1.bf16.msra.mxu0 %v506
        %529 = vmatprep.subr.bf16.mxu0 0
        %530 = vmatpush1.bf16.msra.mxu0 %v505
        %531 = vmatprep.subr.bf16.mxu0 0
        %532 = vmatpush1.bf16.msra.mxu0 %v504
        %533 = vmatprep.subr.bf16.mxu0 0
        %534 = vmatpush1.bf16.msra.mxu0 %v503
        %535 = vmatprep.subr.bf16.mxu0 0
        %536 = vmatpush2.bf16.msra.mxu0 0
        %537 = vmatprep.subr.bf16.mxu0 0
        %538 = vmatpush2.bf16.msra.mxu0 0
        %539 = vmatprep.subr.bf16.mxu0 0
        %540 = vmatpush2.bf16.msra.mxu0 0
        %541 = vmatprep.subr.bf16.mxu0 0
        %542 = vmatpush2.bf16.msra.mxu0 0
        %543 = vmatprep.subr.bf16.mxu0 0
        %544 = vmatpush2.bf16.msra.mxu0 0
        %545 = vmatprep.subr.bf16.mxu0 0
        %546 = vmatpush2.bf16.msra.mxu0 0
        %547 = vmatprep.subr.bf16.mxu0 0
        %548 = vmatpush2.bf16.msra.mxu0 0
        %549 = vmatprep.subr.bf16.mxu0 0
        %550 = vmatpush2.bf16.msra.mxu0 0
        %551 = vmatprep.mubr.bf16.mxu0 0
        %552 = vmatmul.mubr.bf16.gmra.mxu0 %v463
        %v553 = vpop.f32.mrf.mxu0
        %v554 = vadd.f32 0.0, %v553
        %v555 = vpop.f32.mrf.mxu0
        %v556 = vpop.f32.mrf.mxu0
        %v557 = vadd.f32 0.0, %v556
        %v558 = vpop.f32.mrf.mxu0
        %559 = vmatprep.mubr.bf16.mxu0 0
        %560 = vmatmul.mubr.bf16.gmra.mxu0 %v464
        %v561 = vpop.f32.mrf.mxu0
        %v562 = vadd.f32 0.0, %v561
        %v563 = vpop.f32.mrf.mxu0
        %v564 = vpop.f32.mrf.mxu0
        %v565 = vadd.f32 0.0, %v564
        %v566 = vpop.f32.mrf.mxu0
        %567 = vmatprep.mubr.bf16.mxu0 0
        %568 = vmatmul.mubr.bf16.gmra.mxu0 %v465
        %v569 = vpop.f32.mrf.mxu0
        %v570 = vadd.f32 0.0, %v569
        %v571 = vpop.f32.mrf.mxu0
        %v572 = vpop.f32.mrf.mxu0
        %v573 = vadd.f32 0.0, %v572
        %v574 = vpop.f32.mrf.mxu0
        %575 = vmatprep.mubr.bf16.mxu0 0
        %576 = vmatmul.mubr.bf16.gmra.mxu0 %v466
        %v577 = vpop.f32.mrf.mxu0
        %v578 = vadd.f32 0.0, %v577
        %v579 = vpop.f32.mrf.mxu0
        %v580 = vpop.f32.mrf.mxu0
        %v581 = vadd.f32 0.0, %v580
        %v582 = vpop.f32.mrf.mxu0
        %583 = vdwg.mxu0
        %v584 = vld [vmem:[%s2] sm:$0x1]
        %v586 = vlaneseq
        %v587 = vshrl.u32 %v586, 7
        %v588 = vsub.s32 0, %v587
        %v589 = vrot.slane %v584, %v588
        %v591 = vmul.f32 %v554, %v589
        %v592 = vmul.f32 %v557, %v589
        %v593 = vmul.f32 %v562, %v589
        %v594 = vmul.f32 %v565, %v589
        %v595 = vmul.f32 %v570, %v589
        %v596 = vmul.f32 %v573, %v589
        %v597 = vmul.f32 %v578, %v589
        %v598 = vmul.f32 %v581, %v589
        %v599 = vld [vmem:[%s3] sm:$0x1]
        %v601 = vlaneseq
        %v602 = vshrl.u32 %v601, 7
        %v603 = vsub.s32 0, %v602
        %v604 = vrot.slane %v599, %v603
        %v606 = vadd.f32 %v591, %v604
        %v607 = vadd.f32 %v592, %v604
        %v608 = vadd.f32 %v593, %v604
        %v609 = vadd.f32 %v594, %v604
        %v610 = vadd.f32 %v595, %v604
        %v611 = vadd.f32 %v596, %v604
        %v612 = vadd.f32 %v597, %v604
        %v613 = vadd.f32 %v598, %v604
        %v614 = vmax.f32 %v606, 0.0
        %v615 = vmax.f32 %v607, 0.0
        %v616 = vmax.f32 %v608, 0.0
        %v617 = vmax.f32 %v609, 0.0
        %v618 = vmax.f32 %v610, 0.0
        %v619 = vmax.f32 %v611, 0.0
        %v620 = vmax.f32 %v612, 0.0
        %v621 = vmax.f32 %v613, 0.0
        %622 = vst [vmem:[#allocation2] sm:$0xf] 0
        %623 = vst [vmem:[#allocation2 + $0x4] sm:$0x1] 0
        %s624 = scalar_lea.vmem [#allocation2], 72
        %625 = vst [vmem:[%s624] sm:$0xf] 0
        %626 = vst [vmem:[%s624 + $0x4] sm:$0x1] 0
        %s627 = scalar_lea.vmem [#allocation2], 8
        %vm628 = vcmask 1040384
        %vm629 = vsmask.f32 256
        %vm630 = vmand %vm628, %vm629
        %v631 = vld [vmem:[%s627] sm:$0x1]
        %v632 = vsel %vm630, 0, %v631
        %633 = vst [vmem:[%s627] sm:$0x1] %v632
        %v634 = vld [vmem:[%s627 + $0x8] sm:$0x1]
        %v635 = vsel %vm630, 0, %v634
        %636 = vst [vmem:[%s627 + $0x8] sm:$0x1] %v635
        %v637 = vld [vmem:[%s627 + $0x10] sm:$0x1]
        %v638 = vsel %vm630, 0, %v637
        %639 = vst [vmem:[%s627 + $0x10] sm:$0x1] %v638
        %v640 = vld [vmem:[%s627 + $0x18] sm:$0x1]
        %v641 = vsel %vm630, 0, %v640
        %642 = vst [vmem:[%s627 + $0x18] sm:$0x1] %v641
        %v643 = vld [vmem:[%s627 + $0x20] sm:$0x1]
        %v644 = vsel %vm630, 0, %v643
        %645 = vst [vmem:[%s627 + $0x20] sm:$0x1] %v644
        %v646 = vld [vmem:[%s627 + $0x28] sm:$0x1]
        %v647 = vsel %vm630, 0, %v646
        %648 = vst [vmem:[%s627 + $0x28] sm:$0x1] %v647
        %v649 = vld [vmem:[%s627 + $0x30] sm:$0x1]
        %v650 = vsel %vm630, 0, %v649
        %651 = vst [vmem:[%s627 + $0x30] sm:$0x1] %v650
        %v652 = vld [vmem:[%s627 + $0x38] sm:$0x1]
        %v653 = vsel %vm630, 0, %v652
        %654 = vst [vmem:[%s627 + $0x38] sm:$0x1] %v653
        %vm655 = vsmask.f32 7938
        %vm656 = vmand %vm628, %vm655
        %v657 = vld [vmem:[%s627 + $0x4] sm:$0x1]
        %v658 = vsel %vm656, 0, %v657
        %659 = vst [vmem:[%s627 + $0x4] sm:$0x1] %v658
        %v660 = vld [vmem:[%s627 + $0xc] sm:$0x1]
        %v661 = vsel %vm656, 0, %v660
        %662 = vst [vmem:[%s627 + $0xc] sm:$0x1] %v661
        %v663 = vld [vmem:[%s627 + $0x14] sm:$0x1]
        %v664 = vsel %vm656, 0, %v663
        %665 = vst [vmem:[%s627 + $0x14] sm:$0x1] %v664
        %v666 = vld [vmem:[%s627 + $0x1c] sm:$0x1]
        %v667 = vsel %vm656, 0, %v666
        %668 = vst [vmem:[%s627 + $0x1c] sm:$0x1] %v667
        %v669 = vld [vmem:[%s627 + $0x24] sm:$0x1]
        %v670 = vsel %vm656, 0, %v669
        %671 = vst [vmem:[%s627 + $0x24] sm:$0x1] %v670
        %v672 = vld [vmem:[%s627 + $0x2c] sm:$0x1]
        %v673 = vsel %vm656, 0, %v672
        %674 = vst [vmem:[%s627 + $0x2c] sm:$0x1] %v673
        %v675 = vld [vmem:[%s627 + $0x34] sm:$0x1]
        %v676 = vsel %vm656, 0, %v675
        %677 = vst [vmem:[%s627 + $0x34] sm:$0x1] %v676
        %v678 = vld [vmem:[%s627 + $0x3c] sm:$0x1]
        %v679 = vsel %vm656, 0, %v678
        %680 = vst [vmem:[%s627 + $0x3c] sm:$0x1] %v679
        %v681 = vpack.c.bf16 %v615, %v614
        %v682 = vpack.c.bf16 %v617, %v616
        %v683 = vpack.c.bf16 %v619, %v618
        %v684 = vpack.c.bf16 %v621, %v620
        %v689 = vunpack.c.l.b16 %v681
        %v690 = vunpack.c.h.b16 %v681
        %v691 = vunpack.c.l.b16 %v682
        %v692 = vunpack.c.h.b16 %v682
        %v693 = vunpack.c.l.b16 %v683
        %v694 = vunpack.c.h.b16 %v683
        %v695 = vunpack.c.l.b16 %v684
        %v696 = vunpack.c.h.b16 %v684
        %v697 = vpack.c.b16 %v689, %v689
        %v698 = vpack.c.b16 %v690, %v690
        %v699 = vpack.c.b16 %v691, %v691
        %v700 = vpack.c.b16 %v692, %v692
        %v701 = vpack.c.b16 %v693, %v693
        %v702 = vpack.c.b16 %v694, %v694
        %v703 = vpack.c.b16 %v695, %v695
        %v704 = vpack.c.b16 %v696, %v696
        %v706 = vshrl.u32 %v697, 16
        %v708 = vrot.slane %v706, 7
        %v709 = vshll.u32 %v697, 16
        %v711 = vor.u32 %v708, %v709
        %v712 = vrot.slane %v708, 4
        %v714 = vshrl.u32 %v698, 16
        %v716 = vrot.slane %v714, 7
        %v717 = vshll.u32 %v698, 16
        %v719 = vor.u32 %v716, %v717
        %v720 = vrot.slane %v716, 4
        %v722 = vshrl.u32 %v699, 16
        %v724 = vrot.slane %v722, 7
        %v725 = vshll.u32 %v699, 16
        %v727 = vor.u32 %v724, %v725
        %v728 = vrot.slane %v724, 4
        %v730 = vshrl.u32 %v700, 16
        %v732 = vrot.slane %v730, 7
        %v733 = vshll.u32 %v700, 16
        %v735 = vor.u32 %v732, %v733
        %v736 = vrot.slane %v732, 4
        %v738 = vshrl.u32 %v701, 16
        %v740 = vrot.slane %v738, 7
        %v741 = vshll.u32 %v701, 16
        %v743 = vor.u32 %v740, %v741
        %v744 = vrot.slane %v740, 4
        %v746 = vshrl.u32 %v702, 16
        %v748 = vrot.slane %v746, 7
        %v749 = vshll.u32 %v702, 16
        %v751 = vor.u32 %v748, %v749
        %v752 = vrot.slane %v748, 4
        %v754 = vshrl.u32 %v703, 16
        %v756 = vrot.slane %v754, 7
        %v757 = vshll.u32 %v703, 16
        %v759 = vor.u32 %v756, %v757
        %v760 = vrot.slane %v756, 4
        %v762 = vshrl.u32 %v704, 16
        %v764 = vrot.slane %v762, 7
        %v765 = vshll.u32 %v704, 16
        %v767 = vor.u32 %v764, %v765
        %v768 = vrot.slane %v764, 4
        %vm785 = vcmask 1043456
        %vm786 = vmand %vm785, %vm655
        %v787 = vld [vmem:[%s627] sm:$0xf]
        %v788 = vsel %vm786, %v711, %v787
        %789 = vst [vmem:[%s627] sm:$0xf] %v788
        %v790 = vld [vmem:[%s627 + $0x4] sm:$0x1]
        %v791 = vsel %vm630, %v712, %v790
        %792 = vst [vmem:[%s627 + $0x4] sm:$0x1] %v791
        %v793 = vld [vmem:[%s627 + $0x8] sm:$0xf]
        %v794 = vsel %vm786, %v719, %v793
        %795 = vst [vmem:[%s627 + $0x8] sm:$0xf] %v794
        %v796 = vld [vmem:[%s627 + $0xc] sm:$0x1]
        %v797 = vsel %vm630, %v720, %v796
        %798 = vst [vmem:[%s627 + $0xc] sm:$0x1] %v797
        %v799 = vld [vmem:[%s627 + $0x10] sm:$0xf]
        %v800 = vsel %vm786, %v727, %v799
        %801 = vst [vmem:[%s627 + $0x10] sm:$0xf] %v800
        %v802 = vld [vmem:[%s627 + $0x14] sm:$0x1]
        %v803 = vsel %vm630, %v728, %v802
        %804 = vst [vmem:[%s627 + $0x14] sm:$0x1] %v803
        %v805 = vld [vmem:[%s627 + $0x18] sm:$0xf]
        %v806 = vsel %vm786, %v735, %v805
        %807 = vst [vmem:[%s627 + $0x18] sm:$0xf] %v806
        %v808 = vld [vmem:[%s627 + $0x1c] sm:$0x1]
        %v809 = vsel %vm630, %v736, %v808
        %810 = vst [vmem:[%s627 + $0x1c] sm:$0x1] %v809
        %v811 = vld [vmem:[%s627 + $0x20] sm:$0xf]
        %v812 = vsel %vm786, %v743, %v811
        %813 = vst [vmem:[%s627 + $0x20] sm:$0xf] %v812
        %v814 = vld [vmem:[%s627 + $0x24] sm:$0x1]
        %v815 = vsel %vm630, %v744, %v814
        %816 = vst [vmem:[%s627 + $0x24] sm:$0x1] %v815
        %v817 = vld [vmem:[%s627 + $0x28] sm:$0xf]
        %v818 = vsel %vm786, %v751, %v817
        %819 = vst [vmem:[%s627 + $0x28] sm:$0xf] %v818
        %v820 = vld [vmem:[%s627 + $0x2c] sm:$0x1]
        %v821 = vsel %vm630, %v752, %v820
        %822 = vst [vmem:[%s627 + $0x2c] sm:$0x1] %v821
        %v823 = vld [vmem:[%s627 + $0x30] sm:$0xf]
        %v824 = vsel %vm786, %v759, %v823
        %825 = vst [vmem:[%s627 + $0x30] sm:$0xf] %v824
        %v826 = vld [vmem:[%s627 + $0x34] sm:$0x1]
        %v827 = vsel %vm630, %v760, %v826
        %828 = vst [vmem:[%s627 + $0x34] sm:$0x1] %v827
        %v829 = vld [vmem:[%s627 + $0x38] sm:$0xf]
        %v830 = vsel %vm786, %v767, %v829
        %831 = vst [vmem:[%s627 + $0x38] sm:$0xf] %v830
        %v832 = vld [vmem:[%s627 + $0x3c] sm:$0x1]
        %v833 = vsel %vm630, %v768, %v832
        %834 = vst [vmem:[%s627 + $0x3c] sm:$0x1] %v833
        %v835 = vld [vmem:[#allocation2] sm:$0xf]
        %v836 = vld [vmem:[#allocation2 + $0x8] sm:$0xf]
        %v837 = vld [vmem:[#allocation2 + $0x10] sm:$0xf]
        %v838 = vld [vmem:[#allocation2 + $0x18] sm:$0xf]
        %v839 = vld [vmem:[#allocation2 + $0x20] sm:$0xf]
        %v840 = vld [vmem:[#allocation2 + $0x28] sm:$0xf]
        %v841 = vld [vmem:[#allocation2 + $0x30] sm:$0xf]
        %v842 = vld [vmem:[#allocation2 + $0x38] sm:$0xf]
        %v843 = vld [vmem:[#allocation9] sm:$0xf]
        %v844 = vld [vmem:[#allocation9 + $0x4] sm:$0xf]
        %v845 = vld [vmem:[#allocation9 + $0x8] sm:$0xf]
        %v846 = vld [vmem:[#allocation9 + $0xc] sm:$0xf]
        %v847 = vld [vmem:[#allocation9 + $0x10] sm:$0xf]
        %v848 = vld [vmem:[#allocation9 + $0x14] sm:$0xf]
        %v849 = vld [vmem:[#allocation9 + $0x18] sm:$0xf]
        %v850 = vld [vmem:[#allocation9 + $0x1c] sm:$0xf]
        %v851 = vld [vmem:[#allocation9 + $0x20] sm:$0xf]
        %v852 = vld [vmem:[#allocation9 + $0x24] sm:$0xf]
        %v853 = vld [vmem:[#allocation9 + $0x28] sm:$0xf]
        %v854 = vld [vmem:[#allocation9 + $0x2c] sm:$0xf]
        %v855 = vld [vmem:[#allocation9 + $0x30] sm:$0xf]
        %v856 = vld [vmem:[#allocation9 + $0x34] sm:$0xf]
        %v857 = vld [vmem:[#allocation9 + $0x38] sm:$0xf]
        %v858 = vld [vmem:[#allocation9 + $0x3c] sm:$0xf]
        %v867 = vunpack.c.l.b16 %v835
        %v868 = vunpack.c.l.b16 %v836
        %v869 = vunpack.c.l.b16 %v837
        %v870 = vunpack.c.l.b16 %v838
        %v871 = vunpack.c.l.b16 %v839
        %v872 = vunpack.c.l.b16 %v840
        %v873 = vunpack.c.l.b16 %v841
        %v874 = vunpack.c.l.b16 %v842
        %v875 = vpack.c.b16 %v868, %v867
        %v876 = vpack.c.b16 %v870, %v869
        %v877 = vpack.c.b16 %v872, %v871
        %v878 = vpack.c.b16 %v874, %v873
        %v899 = vunpack.c.l.b16 %v843
        %v900 = vunpack.c.l.b16 %v844
        %v901 = vunpack.c.l.b16 %v845
        %v902 = vunpack.c.l.b16 %v846
        %v903 = vunpack.c.l.b16 %v847
        %v904 = vunpack.c.l.b16 %v848
        %v905 = vunpack.c.l.b16 %v849
        %v906 = vunpack.c.l.b16 %v850
        %v907 = vunpack.c.l.b16 %v851
        %v908 = vunpack.c.l.b16 %v852
        %v909 = vunpack.c.l.b16 %v853
        %v910 = vunpack.c.l.b16 %v854
        %v911 = vunpack.c.l.b16 %v855
        %v912 = vunpack.c.l.b16 %v856
        %v913 = vunpack.c.l.b16 %v857
        %v914 = vunpack.c.l.b16 %v858
        %v915 = vpack.c.b16 %v900, %v899
        %v916 = vpack.c.b16 %v902, %v901
        %v917 = vpack.c.b16 %v904, %v903
        %v918 = vpack.c.b16 %v906, %v905
        %v919 = vpack.c.b16 %v908, %v907
        %v920 = vpack.c.b16 %v910, %v909
        %v921 = vpack.c.b16 %v912, %v911
        %v922 = vpack.c.b16 %v914, %v913
        %931 = vmatprep.subr.bf16.mxu0 0
        %932 = vmatpush1.bf16.msra.mxu0 %v922
        %933 = vmatprep.subr.bf16.mxu0 0
        %934 = vmatpush1.bf16.msra.mxu0 %v921
        %935 = vmatprep.subr.bf16.mxu0 0
        %936 = vmatpush1.bf16.msra.mxu0 %v920
        %937 = vmatprep.subr.bf16.mxu0 0
        %938 = vmatpush1.bf16.msra.mxu0 %v919
        %939 = vmatprep.subr.bf16.mxu0 0
        %940 = vmatpush1.bf16.msra.mxu0 %v918
        %941 = vmatprep.subr.bf16.mxu0 0
        %942 = vmatpush1.bf16.msra.mxu0 %v917
        %943 = vmatprep.subr.bf16.mxu0 0
        %944 = vmatpush1.bf16.msra.mxu0 %v916
        %945 = vmatprep.subr.bf16.mxu0 0
        %946 = vmatpush1.bf16.msra.mxu0 %v915
        %947 = vmatprep.subr.bf16.mxu0 0
        %948 = vmatpush2.bf16.msra.mxu0 0
        %949 = vmatprep.subr.bf16.mxu0 0
        %950 = vmatpush2.bf16.msra.mxu0 0
        %951 = vmatprep.subr.bf16.mxu0 0
        %952 = vmatpush2.bf16.msra.mxu0 0
        %953 = vmatprep.subr.bf16.mxu0 0
        %954 = vmatpush2.bf16.msra.mxu0 0
        %955 = vmatprep.subr.bf16.mxu0 0
        %956 = vmatpush2.bf16.msra.mxu0 0
        %957 = vmatprep.subr.bf16.mxu0 0
        %958 = vmatpush2.bf16.msra.mxu0 0
        %959 = vmatprep.subr.bf16.mxu0 0
        %960 = vmatpush2.bf16.msra.mxu0 0
        %961 = vmatprep.subr.bf16.mxu0 0
        %962 = vmatpush2.bf16.msra.mxu0 0
        %963 = vmatprep.mubr.bf16.mxu0 0
        %964 = vmatmul.mubr.bf16.gmra.mxu0 %v875
        %v965 = vpop.f32.mrf.mxu0
        %v966 = vadd.f32 0.0, %v965
        %v967 = vpop.f32.mrf.mxu0
        %v968 = vpop.f32.mrf.mxu0
        %v969 = vadd.f32 0.0, %v968
        %v970 = vpop.f32.mrf.mxu0
        %971 = vmatprep.mubr.bf16.mxu0 0
        %972 = vmatmul.mubr.bf16.gmra.mxu0 %v876
        %v973 = vpop.f32.mrf.mxu0
        %v974 = vadd.f32 0.0, %v973
        %v975 = vpop.f32.mrf.mxu0
        %v976 = vpop.f32.mrf.mxu0
        %v977 = vadd.f32 0.0, %v976
        %v978 = vpop.f32.mrf.mxu0
        %979 = vmatprep.mubr.bf16.mxu0 0
        %980 = vmatmul.mubr.bf16.gmra.mxu0 %v877
        %v981 = vpop.f32.mrf.mxu0
        %v982 = vadd.f32 0.0, %v981
        %v983 = vpop.f32.mrf.mxu0
        %v984 = vpop.f32.mrf.mxu0
        %v985 = vadd.f32 0.0, %v984
        %v986 = vpop.f32.mrf.mxu0
        %987 = vmatprep.mubr.bf16.mxu0 0
        %988 = vmatmul.mubr.bf16.gmra.mxu0 %v878
        %v989 = vpop.f32.mrf.mxu0
        %v990 = vadd.f32 0.0, %v989
        %v991 = vpop.f32.mrf.mxu0
        %v992 = vpop.f32.mrf.mxu0
        %v993 = vadd.f32 0.0, %v992
        %v994 = vpop.f32.mrf.mxu0
        %995 = vdwg.mxu0
        %996 = vst [vmem:[#allocation3] sm:$0xff] %v966
        %997 = vst [vmem:[#allocation3 + $0x8] sm:$0xff] %v969
        %998 = vst [vmem:[#allocation3 + $0x10] sm:$0xff] %v974
        %999 = vst [vmem:[#allocation3 + $0x18] sm:$0xff] %v977
        %1000 = vst [vmem:[#allocation3 + $0x20] sm:$0xff] %v982
        %1001 = vst [vmem:[#allocation3 + $0x28] sm:$0xff] %v985
        %1002 = vst [vmem:[#allocation3 + $0x30] sm:$0xff] %v990
        %1003 = vst [vmem:[#allocation3 + $0x38] sm:$0xff] %v993
        %v1004 = vld [vmem:[#allocation2] sm:$0xf]
        %v1005 = vld [vmem:[#allocation2 + $0x4] sm:$0x1]
        %v1006 = vld [vmem:[#allocation2 + $0x8] sm:$0xf]
        %v1007 = vld [vmem:[#allocation2 + $0xc] sm:$0x1]
        %v1008 = vld [vmem:[#allocation2 + $0x10] sm:$0xf]
        %v1009 = vld [vmem:[#allocation2 + $0x14] sm:$0x1]
        %v1010 = vld [vmem:[#allocation2 + $0x18] sm:$0xf]
        %v1011 = vld [vmem:[#allocation2 + $0x1c] sm:$0x1]
        %v1012 = vld [vmem:[#allocation2 + $0x20] sm:$0xf]
        %v1013 = vld [vmem:[#allocation2 + $0x24] sm:$0x1]
        %v1014 = vld [vmem:[#allocation2 + $0x28] sm:$0xf]
        %v1015 = vld [vmem:[#allocation2 + $0x2c] sm:$0x1]
        %v1016 = vld [vmem:[#allocation2 + $0x30] sm:$0xf]
        %v1017 = vld [vmem:[#allocation2 + $0x34] sm:$0x1]
        %v1018 = vld [vmem:[#allocation2 + $0x38] sm:$0xf]
        %v1019 = vld [vmem:[#allocation2 + $0x3c] sm:$0x1]
        %vm1020 = vsmask.f32 3328
        %vm1021 = vsmask.f32 7440
        %vm1022 = vmor %vm1020, %vm1021
        %v1024 = vshrl.u32 %v1004, 16
        %v1026 = vrot.slane %v1024, 4
        %v1027 = vshll.u32 %v1004, 16
        %v1029 = vrot.slane %v1027, 5
        %v1030 = vor.u32 %v1026, %v1029
        %v1031 = vrot.slane %v1030, 4
        %v1033 = vshll.u32 %v1005, 16
        %v1035 = vrot.slane %v1033, 5
        %v1036 = vsel %vm1022, %v1031, %v1035
        %v1038 = vshrl.u32 %v1006, 16
        %v1040 = vrot.slane %v1038, 4
        %v1041 = vshll.u32 %v1006, 16
        %v1043 = vrot.slane %v1041, 5
        %v1044 = vor.u32 %v1040, %v1043
        %v1045 = vrot.slane %v1044, 4
        %v1047 = vshll.u32 %v1007, 16
        %v1049 = vrot.slane %v1047, 5
        %v1050 = vsel %vm1022, %v1045, %v1049
        %v1052 = vshrl.u32 %v1008, 16
        %v1054 = vrot.slane %v1052, 4
        %v1055 = vshll.u32 %v1008, 16
        %v1057 = vrot.slane %v1055, 5
        %v1058 = vor.u32 %v1054, %v1057
        %v1059 = vrot.slane %v1058, 4
        %v1061 = vshll.u32 %v1009, 16
        %v1063 = vrot.slane %v1061, 5
        %v1064 = vsel %vm1022, %v1059, %v1063
        %v1066 = vshrl.u32 %v1010, 16
        %v1068 = vrot.slane %v1066, 4
        %v1069 = vshll.u32 %v1010, 16
        %v1071 = vrot.slane %v1069, 5
        %v1072 = vor.u32 %v1068, %v1071
        %v1073 = vrot.slane %v1072, 4
        %v1075 = vshll.u32 %v1011, 16
        %v1077 = vrot.slane %v1075, 5
        %v1078 = vsel %vm1022, %v1073, %v1077
        %v1080 = vshrl.u32 %v1012, 16
        %v1082 = vrot.slane %v1080, 4
        %v1083 = vshll.u32 %v1012, 16
        %v1085 = vrot.slane %v1083, 5
        %v1086 = vor.u32 %v1082, %v1085
        %v1087 = vrot.slane %v1086, 4
        %v1089 = vshll.u32 %v1013, 16
        %v1091 = vrot.slane %v1089, 5
        %v1092 = vsel %vm1022, %v1087, %v1091
        %v1094 = vshrl.u32 %v1014, 16
        %v1096 = vrot.slane %v1094, 4
        %v1097 = vshll.u32 %v1014, 16
        %v1099 = vrot.slane %v1097, 5
        %v1100 = vor.u32 %v1096, %v1099
        %v1101 = vrot.slane %v1100, 4
        %v1103 = vshll.u32 %v1015, 16
        %v1105 = vrot.slane %v1103, 5
        %v1106 = vsel %vm1022, %v1101, %v1105
        %v1108 = vshrl.u32 %v1016, 16
        %v1110 = vrot.slane %v1108, 4
        %v1111 = vshll.u32 %v1016, 16
        %v1113 = vrot.slane %v1111, 5
        %v1114 = vor.u32 %v1110, %v1113
        %v1115 = vrot.slane %v1114, 4
        %v1117 = vshll.u32 %v1017, 16
        %v1119 = vrot.slane %v1117, 5
        %v1120 = vsel %vm1022, %v1115, %v1119
        %v1122 = vshrl.u32 %v1018, 16
        %v1124 = vrot.slane %v1122, 4
        %v1125 = vshll.u32 %v1018, 16
        %v1127 = vrot.slane %v1125, 5
        %v1128 = vor.u32 %v1124, %v1127
        %v1129 = vrot.slane %v1128, 4
        %v1131 = vshll.u32 %v1019, 16
        %v1133 = vrot.slane %v1131, 5
        %v1134 = vsel %vm1022, %v1129, %v1133
        %s1135 = scalar_lea.vmem [#allocation9], 64
        %v1136 = vld [vmem:[%s1135] sm:$0xf]
        %v1137 = vld [vmem:[%s1135 + $0x4] sm:$0xf]
        %v1138 = vld [vmem:[%s1135 + $0x8] sm:$0xf]
        %v1139 = vld [vmem:[%s1135 + $0xc] sm:$0xf]
        %v1140 = vld [vmem:[%s1135 + $0x10] sm:$0xf]
        %v1141 = vld [vmem:[%s1135 + $0x14] sm:$0xf]
        %v1142 = vld [vmem:[%s1135 + $0x18] sm:$0xf]
        %v1143 = vld [vmem:[%s1135 + $0x1c] sm:$0xf]
        %v1144 = vld [vmem:[%s1135 + $0x20] sm:$0xf]
        %v1145 = vld [vmem:[%s1135 + $0x24] sm:$0xf]
        %v1146 = vld [vmem:[%s1135 + $0x28] sm:$0xf]
        %v1147 = vld [vmem:[%s1135 + $0x2c] sm:$0xf]
        %v1148 = vld [vmem:[%s1135 + $0x30] sm:$0xf]
        %v1149 = vld [vmem:[%s1135 + $0x34] sm:$0xf]
        %v1150 = vld [vmem:[%s1135 + $0x38] sm:$0xf]
        %v1151 = vld [vmem:[%s1135 + $0x3c] sm:$0xf]
        %v1152 = vunpack.c.l.b16 %v1036
        %v1153 = vunpack.c.l.b16 %v1050
        %v1154 = vunpack.c.l.b16 %v1064
        %v1155 = vunpack.c.l.b16 %v1078
        %v1156 = vunpack.c.l.b16 %v1092
        %v1157 = vunpack.c.l.b16 %v1106
        %v1158 = vunpack.c.l.b16 %v1120
        %v1159 = vunpack.c.l.b16 %v1134
        %v1160 = vpack.c.b16 %v1153, %v1152
        %v1161 = vpack.c.b16 %v1155, %v1154
        %v1162 = vpack.c.b16 %v1157, %v1156
        %v1163 = vpack.c.b16 %v1159, %v1158
        %v1184 = vunpack.c.l.b16 %v1136
        %v1185 = vunpack.c.l.b16 %v1137
        %v1186 = vunpack.c.l.b16 %v1138
        %v1187 = vunpack.c.l.b16 %v1139
        %v1188 = vunpack.c.l.b16 %v1140
        %v1189 = vunpack.c.l.b16 %v1141
        %v1190 = vunpack.c.l.b16 %v1142
        %v1191 = vunpack.c.l.b16 %v1143
        %v1192 = vunpack.c.l.b16 %v1144
        %v1193 = vunpack.c.l.b16 %v1145
        %v1194 = vunpack.c.l.b16 %v1146
        %v1195 = vunpack.c.l.b16 %v1147
        %v1196 = vunpack.c.l.b16 %v1148
        %v1197 = vunpack.c.l.b16 %v1149
        %v1198 = vunpack.c.l.b16 %v1150
        %v1199 = vunpack.c.l.b16 %v1151
        %v1200 = vpack.c.b16 %v1185, %v1184
        %v1201 = vpack.c.b16 %v1187, %v1186
        %v1202 = vpack.c.b16 %v1189, %v1188
        %v1203 = vpack.c.b16 %v1191, %v1190
        %v1204 = vpack.c.b16 %v1193, %v1192
        %v1205 = vpack.c.b16 %v1195, %v1194
        %v1206 = vpack.c.b16 %v1197, %v1196
        %v1207 = vpack.c.b16 %v1199, %v1198
        %1216 = vmatprep.subr.bf16.mxu0 0
        %1217 = vmatpush1.bf16.msra.mxu0 %v1207
        %1218 = vmatprep.subr.bf16.mxu0 0
        %1219 = vmatpush1.bf16.msra.mxu0 %v1206
        %1220 = vmatprep.subr.bf16.mxu0 0
        %1221 = vmatpush1.bf16.msra.mxu0 %v1205
        %1222 = vmatprep.subr.bf16.mxu0 0
        %1223 = vmatpush1.bf16.msra.mxu0 %v1204
        %1224 = vmatprep.subr.bf16.mxu0 0
        %1225 = vmatpush1.bf16.msra.mxu0 %v1203
        %1226 = vmatprep.subr.bf16.mxu0 0
        %1227 = vmatpush1.bf16.msra.mxu0 %v1202
        %1228 = vmatprep.subr.bf16.mxu0 0
        %1229 = vmatpush1.bf16.msra.mxu0 %v1201
        %1230 = vmatprep.subr.bf16.mxu0 0
        %1231 = vmatpush1.bf16.msra.mxu0 %v1200
        %1232 = vmatprep.subr.bf16.mxu0 0
        %1233 = vmatpush2.bf16.msra.mxu0 0
        %1234 = vmatprep.subr.bf16.mxu0 0
        %1235 = vmatpush2.bf16.msra.mxu0 0
        %1236 = vmatprep.subr.bf16.mxu0 0
        %1237 = vmatpush2.bf16.msra.mxu0 0
        %1238 = vmatprep.subr.bf16.mxu0 0
        %1239 = vmatpush2.bf16.msra.mxu0 0
        %1240 = vmatprep.subr.bf16.mxu0 0
        %1241 = vmatpush2.bf16.msra.mxu0 0
        %1242 = vmatprep.subr.bf16.mxu0 0
        %1243 = vmatpush2.bf16.msra.mxu0 0
        %1244 = vmatprep.subr.bf16.mxu0 0
        %1245 = vmatpush2.bf16.msra.mxu0 0
        %1246 = vmatprep.subr.bf16.mxu0 0
        %1247 = vmatpush2.bf16.msra.mxu0 0
        %1248 = vmatprep.mubr.bf16.mxu0 0
        %1249 = vmatmul.mubr.bf16.gmra.mxu0 %v1160
        %v1250 = vpop.f32.mrf.mxu0
        %v1251 = vadd.f32 0.0, %v1250
        %v1252 = vpop.f32.mrf.mxu0
        %v1253 = vpop.f32.mrf.mxu0
        %v1254 = vadd.f32 0.0, %v1253
        %v1255 = vpop.f32.mrf.mxu0
        %1256 = vmatprep.mubr.bf16.mxu0 0
        %1257 = vmatmul.mubr.bf16.gmra.mxu0 %v1161
        %v1258 = vpop.f32.mrf.mxu0
        %v1259 = vadd.f32 0.0, %v1258
        %v1260 = vpop.f32.mrf.mxu0
        %v1261 = vpop.f32.mrf.mxu0
        %v1262 = vadd.f32 0.0, %v1261
        %v1263 = vpop.f32.mrf.mxu0
        %1264 = vmatprep.mubr.bf16.mxu0 0
        %1265 = vmatmul.mubr.bf16.gmra.mxu0 %v1162
        %v1266 = vpop.f32.mrf.mxu0
        %v1267 = vadd.f32 0.0, %v1266
        %v1268 = vpop.f32.mrf.mxu0
        %v1269 = vpop.f32.mrf.mxu0
        %v1270 = vadd.f32 0.0, %v1269
        %v1271 = vpop.f32.mrf.mxu0
        %1272 = vmatprep.mubr.bf16.mxu0 0
        %1273 = vmatmul.mubr.bf16.gmra.mxu0 %v1163
        %v1274 = vpop.f32.mrf.mxu0
        %v1275 = vadd.f32 0.0, %v1274
        %v1276 = vpop.f32.mrf.mxu0
        %v1277 = vpop.f32.mrf.mxu0
        %v1278 = vadd.f32 0.0, %v1277
        %v1279 = vpop.f32.mrf.mxu0
        %1280 = vdwg.mxu0
        %v1281 = vld [vmem:[#allocation3] sm:$0xff]
        %v1282 = vld [vmem:[#allocation3 + $0x8] sm:$0xff]
        %v1283 = vld [vmem:[#allocation3 + $0x10] sm:$0xff]
        %v1284 = vld [vmem:[#allocation3 + $0x18] sm:$0xff]
        %v1285 = vld [vmem:[#allocation3 + $0x20] sm:$0xff]
        %v1286 = vld [vmem:[#allocation3 + $0x28] sm:$0xff]
        %v1287 = vld [vmem:[#allocation3 + $0x30] sm:$0xff]
        %v1288 = vld [vmem:[#allocation3 + $0x38] sm:$0xff]
        %v1289 = vadd.f32 %v1281, %v1251
        %v1290 = vadd.f32 %v1282, %v1254
        %v1291 = vadd.f32 %v1283, %v1259
        %v1292 = vadd.f32 %v1284, %v1262
        %v1293 = vadd.f32 %v1285, %v1267
        %v1294 = vadd.f32 %v1286, %v1270
        %v1295 = vadd.f32 %v1287, %v1275
        %v1296 = vadd.f32 %v1288, %v1278
        %1297 = vst [vmem:[#allocation3] sm:$0xff] %v1289
        %1298 = vst [vmem:[#allocation3 + $0x8] sm:$0xff] %v1290
        %1299 = vst [vmem:[#allocation3 + $0x10] sm:$0xff] %v1291
        %1300 = vst [vmem:[#allocation3 + $0x18] sm:$0xff] %v1292
        %1301 = vst [vmem:[#allocation3 + $0x20] sm:$0xff] %v1293
        %1302 = vst [vmem:[#allocation3 + $0x28] sm:$0xff] %v1294
        %1303 = vst [vmem:[#allocation3 + $0x30] sm:$0xff] %v1295
        %1304 = vst [vmem:[#allocation3 + $0x38] sm:$0xff] %v1296
        %v1305 = vld [vmem:[#allocation2] sm:$0xe]
        %v1306 = vld [vmem:[#allocation2 + $0x4] sm:$0x1]
        %v1307 = vld [vmem:[#allocation2 + $0x8] sm:$0xe]
        %v1308 = vld [vmem:[#allocation2 + $0xc] sm:$0x1]
        %v1309 = vld [vmem:[#allocation2 + $0x10] sm:$0xe]
        %v1310 = vld [vmem:[#allocation2 + $0x14] sm:$0x1]
        %v1311 = vld [vmem:[#allocation2 + $0x18] sm:$0xe]
        %v1312 = vld [vmem:[#allocation2 + $0x1c] sm:$0x1]
        %v1313 = vld [vmem:[#allocation2 + $0x20] sm:$0xe]
        %v1314 = vld [vmem:[#allocation2 + $0x24] sm:$0x1]
        %v1315 = vld [vmem:[#allocation2 + $0x28] sm:$0xe]
        %v1316 = vld [vmem:[#allocation2 + $0x2c] sm:$0x1]
        %v1317 = vld [vmem:[#allocation2 + $0x30] sm:$0xe]
        %v1318 = vld [vmem:[#allocation2 + $0x34] sm:$0x1]
        %v1319 = vld [vmem:[#allocation2 + $0x38] sm:$0xe]
        %v1320 = vld [vmem:[#allocation2 + $0x3c] sm:$0x1]
        %vm1337 = vcmask 1042432
        %vm1338 = vcmask 1046532
        %vm1339 = vmor %vm1337, %vm1338
        %v1340 = vrot.slane %v1305, 5
        %v1341 = vrot.slane %v1340, 4
        %v1342 = vrot.slane %v1306, 5
        %v1343 = vsel %vm1339, %v1341, %v1342
        %v1344 = vrot.slane %v1307, 5
        %v1345 = vrot.slane %v1344, 4
        %v1346 = vrot.slane %v1308, 5
        %v1347 = vsel %vm1339, %v1345, %v1346
        %v1348 = vrot.slane %v1309, 5
        %v1349 = vrot.slane %v1348, 4
        %v1350 = vrot.slane %v1310, 5
        %v1351 = vsel %vm1339, %v1349, %v1350
        %v1352 = vrot.slane %v1311, 5
        %v1353 = vrot.slane %v1352, 4
        %v1354 = vrot.slane %v1312, 5
        %v1355 = vsel %vm1339, %v1353, %v1354
        %v1356 = vrot.slane %v1313, 5
        %v1357 = vrot.slane %v1356, 4
        %v1358 = vrot.slane %v1314, 5
        %v1359 = vsel %vm1339, %v1357, %v1358
        %v1360 = vrot.slane %v1315, 5
        %v1361 = vrot.slane %v1360, 4
        %v1362 = vrot.slane %v1316, 5
        %v1363 = vsel %vm1339, %v1361, %v1362
        %v1364 = vrot.slane %v1317, 5
        %v1365 = vrot.slane %v1364, 4
        %v1366 = vrot.slane %v1318, 5
        %v1367 = vsel %vm1339, %v1365, %v1366
        %v1368 = vrot.slane %v1319, 5
        %v1369 = vrot.slane %v1368, 4
        %v1370 = vrot.slane %v1320, 5
        %v1371 = vsel %vm1339, %v1369, %v1370
        %s1372 = scalar_lea.vmem [#allocation9], 128
        %v1373 = vld [vmem:[%s1372] sm:$0xf]
        %v1374 = vld [vmem:[%s1372 + $0x4] sm:$0xf]
        %v1375 = vld [vmem:[%s1372 + $0x8] sm:$0xf]
        %v1376 = vld [vmem:[%s1372 + $0xc] sm:$0xf]
        %v1377 = vld [vmem:[%s1372 + $0x10] sm:$0xf]
        %v1378 = vld [vmem:[%s1372 + $0x14] sm:$0xf]
        %v1379 = vld [vmem:[%s1372 + $0x18] sm:$0xf]
        %v1380 = vld [vmem:[%s1372 + $0x1c] sm:$0xf]
        %v1381 = vld [vmem:[%s1372 + $0x20] sm:$0xf]
        %v1382 = vld [vmem:[%s1372 + $0x24] sm:$0xf]
        %v1383 = vld [vmem:[%s1372 + $0x28] sm:$0xf]
        %v1384 = vld [vmem:[%s1372 + $0x2c] sm:$0xf]
        %v1385 = vld [vmem:[%s1372 + $0x30] sm:$0xf]
        %v1386 = vld [vmem:[%s1372 + $0x34] sm:$0xf]
        %v1387 = vld [vmem:[%s1372 + $0x38] sm:$0xf]
        %v1388 = vld [vmem:[%s1372 + $0x3c] sm:$0xf]
        %v1389 = vunpack.c.l.b16 %v1343
        %v1390 = vunpack.c.l.b16 %v1347
        %v1391 = vunpack.c.l.b16 %v1351
        %v1392 = vunpack.c.l.b16 %v1355
        %v1393 = vunpack.c.l.b16 %v1359
        %v1394 = vunpack.c.l.b16 %v1363
        %v1395 = vunpack.c.l.b16 %v1367
        %v1396 = vunpack.c.l.b16 %v1371
        %v1397 = vpack.c.b16 %v1390, %v1389
        %v1398 = vpack.c.b16 %v1392, %v1391
        %v1399 = vpack.c.b16 %v1394, %v1393
        %v1400 = vpack.c.b16 %v1396, %v1395
        %v1421 = vunpack.c.l.b16 %v1373
        %v1422 = vunpack.c.l.b16 %v1374
        %v1423 = vunpack.c.l.b16 %v1375
        %v1424 = vunpack.c.l.b16 %v1376
        %v1425 = vunpack.c.l.b16 %v1377
        %v1426 = vunpack.c.l.b16 %v1378
        %v1427 = vunpack.c.l.b16 %v1379
        %v1428 = vunpack.c.l.b16 %v1380
        %v1429 = vunpack.c.l.b16 %v1381
        %v1430 = vunpack.c.l.b16 %v1382
        %v1431 = vunpack.c.l.b16 %v1383
        %v1432 = vunpack.c.l.b16 %v1384
        %v1433 = vunpack.c.l.b16 %v1385
        %v1434 = vunpack.c.l.b16 %v1386
        %v1435 = vunpack.c.l.b16 %v1387
        %v1436 = vunpack.c.l.b16 %v1388
        %v1437 = vpack.c.b16 %v1422, %v1421
        %v1438 = vpack.c.b16 %v1424, %v1423
        %v1439 = vpack.c.b16 %v1426, %v1425
        %v1440 = vpack.c.b16 %v1428, %v1427
        %v1441 = vpack.c.b16 %v1430, %v1429
        %v1442 = vpack.c.b16 %v1432, %v1431
        %v1443 = vpack.c.b16 %v1434, %v1433
        %v1444 = vpack.c.b16 %v1436, %v1435
        %1453 = vmatprep.subr.bf16.mxu0 0
        %1454 = vmatpush1.bf16.msra.mxu0 %v1444
        %1455 = vmatprep.subr.bf16.mxu0 0
        %1456 = vmatpush1.bf16.msra.mxu0 %v1443
        %1457 = vmatprep.subr.bf16.mxu0 0
        %1458 = vmatpush1.bf16.msra.mxu0 %v1442
        %1459 = vmatprep.subr.bf16.mxu0 0
        %1460 = vmatpush1.bf16.msra.mxu0 %v1441
        %1461 = vmatprep.subr.bf16.mxu0 0
        %1462 = vmatpush1.bf16.msra.mxu0 %v1440
        %1463 = vmatprep.subr.bf16.mxu0 0
        %1464 = vmatpush1.bf16.msra.mxu0 %v1439
        %1465 = vmatprep.subr.bf16.mxu0 0
        %1466 = vmatpush1.bf16.msra.mxu0 %v1438
        %1467 = vmatprep.subr.bf16.mxu0 0
        %1468 = vmatpush1.bf16.msra.mxu0 %v1437
        %1469 = vmatprep.subr.bf16.mxu0 0
        %1470 = vmatpush2.bf16.msra.mxu0 0
        %1471 = vmatprep.subr.bf16.mxu0 0
        %1472 = vmatpush2.bf16.msra.mxu0 0
        %1473 = vmatprep.subr.bf16.mxu0 0
        %1474 = vmatpush2.bf16.msra.mxu0 0
        %1475 = vmatprep.subr.bf16.mxu0 0
        %1476 = vmatpush2.bf16.msra.mxu0 0
        %1477 = vmatprep.subr.bf16.mxu0 0
        %1478 = vmatpush2.bf16.msra.mxu0 0
        %1479 = vmatprep.subr.bf16.mxu0 0
        %1480 = vmatpush2.bf16.msra.mxu0 0
        %1481 = vmatprep.subr.bf16.mxu0 0
        %1482 = vmatpush2.bf16.msra.mxu0 0
        %1483 = vmatprep.subr.bf16.mxu0 0
        %1484 = vmatpush2.bf16.msra.mxu0 0
        %1485 = vmatprep.mubr.bf16.mxu0 0
        %1486 = vmatmul.mubr.bf16.gmra.mxu0 %v1397
        %v1487 = vpop.f32.mrf.mxu0
        %v1488 = vadd.f32 0.0, %v1487
        %v1489 = vpop.f32.mrf.mxu0
        %v1490 = vpop.f32.mrf.mxu0
        %v1491 = vadd.f32 0.0, %v1490
        %v1492 = vpop.f32.mrf.mxu0
        %1493 = vmatprep.mubr.bf16.mxu0 0
        %1494 = vmatmul.mubr.bf16.gmra.mxu0 %v1398
        %v1495 = vpop.f32.mrf.mxu0
        %v1496 = vadd.f32 0.0, %v1495
        %v1497 = vpop.f32.mrf.mxu0
        %v1498 = vpop.f32.mrf.mxu0
        %v1499 = vadd.f32 0.0, %v1498
        %v1500 = vpop.f32.mrf.mxu0
        %1501 = vmatprep.mubr.bf16.mxu0 0
        %1502 = vmatmul.mubr.bf16.gmra.mxu0 %v1399
        %v1503 = vpop.f32.mrf.mxu0
        %v1504 = vadd.f32 0.0, %v1503
        %v1505 = vpop.f32.mrf.mxu0
        %v1506 = vpop.f32.mrf.mxu0
        %v1507 = vadd.f32 0.0, %v1506
        %v1508 = vpop.f32.mrf.mxu0
        %1509 = vmatprep.mubr.bf16.mxu0 0
        %1510 = vmatmul.mubr.bf16.gmra.mxu0 %v1400
        %v1511 = vpop.f32.mrf.mxu0
        %v1512 = vadd.f32 0.0, %v1511
        %v1513 = vpop.f32.mrf.mxu0
        %v1514 = vpop.f32.mrf.mxu0
        %v1515 = vadd.f32 0.0, %v1514
        %v1516 = vpop.f32.mrf.mxu0
        %1517 = vdwg.mxu0
        %v1518 = vld [vmem:[#allocation3] sm:$0xff]
        %v1519 = vld [vmem:[#allocation3 + $0x8] sm:$0xff]
        %v1520 = vld [vmem:[#allocation3 + $0x10] sm:$0xff]
        %v1521 = vld [vmem:[#allocation3 + $0x18] sm:$0xff]
        %v1522 = vld [vmem:[#allocation3 + $0x20] sm:$0xff]
        %v1523 = vld [vmem:[#allocation3 + $0x28] sm:$0xff]
        %v1524 = vld [vmem:[#allocation3 + $0x30] sm:$0xff]
        %v1525 = vld [vmem:[#allocation3 + $0x38] sm:$0xff]
        %v1526 = vadd.f32 %v1518, %v1488
        %v1527 = vadd.f32 %v1519, %v1491
        %v1528 = vadd.f32 %v1520, %v1496
        %v1529 = vadd.f32 %v1521, %v1499
        %v1530 = vadd.f32 %v1522, %v1504
        %v1531 = vadd.f32 %v1523, %v1507
        %v1532 = vadd.f32 %v1524, %v1512
        %v1533 = vadd.f32 %v1525, %v1515
        %1534 = vst [vmem:[#allocation3] sm:$0xff] %v1526
        %1535 = vst [vmem:[#allocation3 + $0x8] sm:$0xff] %v1527
        %1536 = vst [vmem:[#allocation3 + $0x10] sm:$0xff] %v1528
        %1537 = vst [vmem:[#allocation3 + $0x18] sm:$0xff] %v1529
        %1538 = vst [vmem:[#allocation3 + $0x20] sm:$0xff] %v1530
        %1539 = vst [vmem:[#allocation3 + $0x28] sm:$0xff] %v1531
        %1540 = vst [vmem:[#allocation3 + $0x30] sm:$0xff] %v1532
        %1541 = vst [vmem:[#allocation3 + $0x38] sm:$0xff] %v1533
        %v1542 = vld [vmem:[%s627] sm:$0xf]
        %v1543 = vld [vmem:[%s627 + $0x8] sm:$0xf]
        %v1544 = vld [vmem:[%s627 + $0x10] sm:$0xf]
        %v1545 = vld [vmem:[%s627 + $0x18] sm:$0xf]
        %v1546 = vld [vmem:[%s627 + $0x20] sm:$0xf]
        %v1547 = vld [vmem:[%s627 + $0x28] sm:$0xf]
        %v1548 = vld [vmem:[%s627 + $0x30] sm:$0xf]
        %v1549 = vld [vmem:[%s627 + $0x38] sm:$0xf]
        %s1550 = scalar_lea.vmem [#allocation9], 192
        %v1551 = vld [vmem:[%s1550] sm:$0xf]
        %v1552 = vld [vmem:[%s1550 + $0x4] sm:$0xf]
        %v1553 = vld [vmem:[%s1550 + $0x8] sm:$0xf]
        %v1554 = vld [vmem:[%s1550 + $0xc] sm:$0xf]
        %v1555 = vld [vmem:[%s1550 + $0x10] sm:$0xf]
        %v1556 = vld [vmem:[%s1550 + $0x14] sm:$0xf]
        %v1557 = vld [vmem:[%s1550 + $0x18] sm:$0xf]
        %v1558 = vld [vmem:[%s1550 + $0x1c] sm:$0xf]
        %v1559 = vld [vmem:[%s1550 + $0x20] sm:$0xf]
        %v1560 = vld [vmem:[%s1550 + $0x24] sm:$0xf]
        %v1561 = vld [vmem:[%s1550 + $0x28] sm:$0xf]
        %v1562 = vld [vmem:[%s1550 + $0x2c] sm:$0xf]
        %v1563 = vld [vmem:[%s1550 + $0x30] sm:$0xf]
        %v1564 = vld [vmem:[%s1550 + $0x34] sm:$0xf]
        %v1565 = vld [vmem:[%s1550 + $0x38] sm:$0xf]
        %v1566 = vld [vmem:[%s1550 + $0x3c] sm:$0xf]
        %v1575 = vunpack.c.l.b16 %v1542
        %v1576 = vunpack.c.l.b16 %v1543
        %v1577 = vunpack.c.l.b16 %v1544
        %v1578 = vunpack.c.l.b16 %v1545
        %v1579 = vunpack.c.l.b16 %v1546
        %v1580 = vunpack.c.l.b16 %v1547
        %v1581 = vunpack.c.l.b16 %v1548
        %v1582 = vunpack.c.l.b16 %v1549
        %v1583 = vpack.c.b16 %v1576, %v1575
        %v1584 = vpack.c.b16 %v1578, %v1577
        %v1585 = vpack.c.b16 %v1580, %v1579
        %v1586 = vpack.c.b16 %v1582, %v1581
        %v1607 = vunpack.c.l.b16 %v1551
        %v1608 = vunpack.c.l.b16 %v1552
        %v1609 = vunpack.c.l.b16 %v1553
        %v1610 = vunpack.c.l.b16 %v1554
        %v1611 = vunpack.c.l.b16 %v1555
        %v1612 = vunpack.c.l.b16 %v1556
        %v1613 = vunpack.c.l.b16 %v1557
        %v1614 = vunpack.c.l.b16 %v1558
        %v1615 = vunpack.c.l.b16 %v1559
        %v1616 = vunpack.c.l.b16 %v1560
        %v1617 = vunpack.c.l.b16 %v1561
        %v1618 = vunpack.c.l.b16 %v1562
        %v1619 = vunpack.c.l.b16 %v1563
        %v1620 = vunpack.c.l.b16 %v1564
        %v1621 = vunpack.c.l.b16 %v1565
        %v1622 = vunpack.c.l.b16 %v1566
        %v1623 = vpack.c.b16 %v1608, %v1607
        %v1624 = vpack.c.b16 %v1610, %v1609
        %v1625 = vpack.c.b16 %v1612, %v1611
        %v1626 = vpack.c.b16 %v1614, %v1613
        %v1627 = vpack.c.b16 %v1616, %v1615
        %v1628 = vpack.c.b16 %v1618, %v1617
        %v1629 = vpack.c.b16 %v1620, %v1619
        %v1630 = vpack.c.b16 %v1622, %v1621
        %1639 = vmatprep.subr.bf16.mxu0 0
        %1640 = vmatpush1.bf16.msra.mxu0 %v1630
        %1641 = vmatprep.subr.bf16.mxu0 0
        %1642 = vmatpush1.bf16.msra.mxu0 %v1629
        %1643 = vmatprep.subr.bf16.mxu0 0
        %1644 = vmatpush1.bf16.msra.mxu0 %v1628
        %1645 = vmatprep.subr.bf16.mxu0 0
        %1646 = vmatpush1.bf16.msra.mxu0 %v1627
        %1647 = vmatprep.subr.bf16.mxu0 0
        %1648 = vmatpush1.bf16.msra.mxu0 %v1626
        %1649 = vmatprep.subr.bf16.mxu0 0
        %1650 = vmatpush1.bf16.msra.mxu0 %v1625
        %1651 = vmatprep.subr.bf16.mxu0 0
        %1652 = vmatpush1.bf16.msra.mxu0 %v1624
        %1653 = vmatprep.subr.bf16.mxu0 0
        %1654 = vmatpush1.bf16.msra.mxu0 %v1623
        %1655 = vmatprep.subr.bf16.mxu0 0
        %1656 = vmatpush2.bf16.msra.mxu0 0
        %1657 = vmatprep.subr.bf16.mxu0 0
        %1658 = vmatpush2.bf16.msra.mxu0 0
        %1659 = vmatprep.subr.bf16.mxu0 0
        %1660 = vmatpush2.bf16.msra.mxu0 0
        %1661 = vmatprep.subr.bf16.mxu0 0
        %1662 = vmatpush2.bf16.msra.mxu0 0
        %1663 = vmatprep.subr.bf16.mxu0 0
        %1664 = vmatpush2.bf16.msra.mxu0 0
        %1665 = vmatprep.subr.bf16.mxu0 0
        %1666 = vmatpush2.bf16.msra.mxu0 0
        %1667 = vmatprep.subr.bf16.mxu0 0
        %1668 = vmatpush2.bf16.msra.mxu0 0
        %1669 = vmatprep.subr.bf16.mxu0 0
        %1670 = vmatpush2.bf16.msra.mxu0 0
        %1671 = vmatprep.mubr.bf16.mxu0 0
        %1672 = vmatmul.mubr.bf16.gmra.mxu0 %v1583
        %v1673 = vpop.f32.mrf.mxu0
        %v1674 = vadd.f32 0.0, %v1673
        %v1675 = vpop.f32.mrf.mxu0
        %v1676 = vpop.f32.mrf.mxu0
        %v1677 = vadd.f32 0.0, %v1676
        %v1678 = vpop.f32.mrf.mxu0
        %1679 = vmatprep.mubr.bf16.mxu0 0
        %1680 = vmatmul.mubr.bf16.gmra.mxu0 %v1584
        %v1681 = vpop.f32.mrf.mxu0
        %v1682 = vadd.f32 0.0, %v1681
        %v1683 = vpop.f32.mrf.mxu0
        %v1684 = vpop.f32.mrf.mxu0
        %v1685 = vadd.f32 0.0, %v1684
        %v1686 = vpop.f32.mrf.mxu0
        %1687 = vmatprep.mubr.bf16.mxu0 0
        %1688 = vmatmul.mubr.bf16.gmra.mxu0 %v1585
        %v1689 = vpop.f32.mrf.mxu0
        %v1690 = vadd.f32 0.0, %v1689
        %v1691 = vpop.f32.mrf.mxu0
        %v1692 = vpop.f32.mrf.mxu0
        %v1693 = vadd.f32 0.0, %v1692
        %v1694 = vpop.f32.mrf.mxu0
        %1695 = vmatprep.mubr.bf16.mxu0 0
        %1696 = vmatmul.mubr.bf16.gmra.mxu0 %v1586
        %v1697 = vpop.f32.mrf.mxu0
        %v1698 = vadd.f32 0.0, %v1697
        %v1699 = vpop.f32.mrf.mxu0
        %v1700 = vpop.f32.mrf.mxu0
        %v1701 = vadd.f32 0.0, %v1700
        %v1702 = vpop.f32.mrf.mxu0
        %1703 = vdwg.mxu0
        %v1704 = vld [vmem:[#allocation3] sm:$0xff]
        %v1705 = vld [vmem:[#allocation3 + $0x8] sm:$0xff]
        %v1706 = vld [vmem:[#allocation3 + $0x10] sm:$0xff]
        %v1707 = vld [vmem:[#allocation3 + $0x18] sm:$0xff]
        %v1708 = vld [vmem:[#allocation3 + $0x20] sm:$0xff]
        %v1709 = vld [vmem:[#allocation3 + $0x28] sm:$0xff]
        %v1710 = vld [vmem:[#allocation3 + $0x30] sm:$0xff]
        %v1711 = vld [vmem:[#allocation3 + $0x38] sm:$0xff]
        %v1712 = vadd.f32 %v1704, %v1674
        %v1713 = vadd.f32 %v1705, %v1677
        %v1714 = vadd.f32 %v1706, %v1682
        %v1715 = vadd.f32 %v1707, %v1685
        %v1716 = vadd.f32 %v1708, %v1690
        %v1717 = vadd.f32 %v1709, %v1693
        %v1718 = vadd.f32 %v1710, %v1698
        %v1719 = vadd.f32 %v1711, %v1701
        %1720 = vst [vmem:[#allocation3] sm:$0xff] %v1712
        %1721 = vst [vmem:[#allocation3 + $0x8] sm:$0xff] %v1713
        %1722 = vst [vmem:[#allocation3 + $0x10] sm:$0xff] %v1714
        %1723 = vst [vmem:[#allocation3 + $0x18] sm:$0xff] %v1715
        %1724 = vst [vmem:[#allocation3 + $0x20] sm:$0xff] %v1716
        %1725 = vst [vmem:[#allocation3 + $0x28] sm:$0xff] %v1717
        %1726 = vst [vmem:[#allocation3 + $0x30] sm:$0xff] %v1718
        %1727 = vst [vmem:[#allocation3 + $0x38] sm:$0xff] %v1719
        %v1728 = vld [vmem:[%s627] sm:$0xf]
        %v1729 = vld [vmem:[%s627 + $0x4] sm:$0x1]
        %v1730 = vld [vmem:[%s627 + $0x8] sm:$0xf]
        %v1731 = vld [vmem:[%s627 + $0xc] sm:$0x1]
        %v1732 = vld [vmem:[%s627 + $0x10] sm:$0xf]
        %v1733 = vld [vmem:[%s627 + $0x14] sm:$0x1]
        %v1734 = vld [vmem:[%s627 + $0x18] sm:$0xf]
        %v1735 = vld [vmem:[%s627 + $0x1c] sm:$0x1]
        %v1736 = vld [vmem:[%s627 + $0x20] sm:$0xf]
        %v1737 = vld [vmem:[%s627 + $0x24] sm:$0x1]
        %v1738 = vld [vmem:[%s627 + $0x28] sm:$0xf]
        %v1739 = vld [vmem:[%s627 + $0x2c] sm:$0x1]
        %v1740 = vld [vmem:[%s627 + $0x30] sm:$0xf]
        %v1741 = vld [vmem:[%s627 + $0x34] sm:$0x1]
        %v1742 = vld [vmem:[%s627 + $0x38] sm:$0xf]
        %v1743 = vld [vmem:[%s627 + $0x3c] sm:$0x1]
        %v1745 = vshrl.u32 %v1728, 16
        %v1747 = vrot.slane %v1745, 4
        %v1748 = vshll.u32 %v1728, 16
        %v1750 = vrot.slane %v1748, 5
        %v1751 = vor.u32 %v1747, %v1750
        %v1752 = vrot.slane %v1751, 4
        %v1754 = vshll.u32 %v1729, 16
        %v1756 = vrot.slane %v1754, 5
        %v1757 = vsel %vm1022, %v1752, %v1756
        %v1759 = vshrl.u32 %v1730, 16
        %v1761 = vrot.slane %v1759, 4
        %v1762 = vshll.u32 %v1730, 16
        %v1764 = vrot.slane %v1762, 5
        %v1765 = vor.u32 %v1761, %v1764
        %v1766 = vrot.slane %v1765, 4
        %v1768 = vshll.u32 %v1731, 16
        %v1770 = vrot.slane %v1768, 5
        %v1771 = vsel %vm1022, %v1766, %v1770
        %v1773 = vshrl.u32 %v1732, 16
        %v1775 = vrot.slane %v1773, 4
        %v1776 = vshll.u32 %v1732, 16
        %v1778 = vrot.slane %v1776, 5
        %v1779 = vor.u32 %v1775, %v1778
        %v1780 = vrot.slane %v1779, 4
        %v1782 = vshll.u32 %v1733, 16
        %v1784 = vrot.slane %v1782, 5
        %v1785 = vsel %vm1022, %v1780, %v1784
        %v1787 = vshrl.u32 %v1734, 16
        %v1789 = vrot.slane %v1787, 4
        %v1790 = vshll.u32 %v1734, 16
        %v1792 = vrot.slane %v1790, 5
        %v1793 = vor.u32 %v1789, %v1792
        %v1794 = vrot.slane %v1793, 4
        %v1796 = vshll.u32 %v1735, 16
        %v1798 = vrot.slane %v1796, 5
        %v1799 = vsel %vm1022, %v1794, %v1798
        %v1801 = vshrl.u32 %v1736, 16
        %v1803 = vrot.slane %v1801, 4
        %v1804 = vshll.u32 %v1736, 16
        %v1806 = vrot.slane %v1804, 5
        %v1807 = vor.u32 %v1803, %v1806
        %v1808 = vrot.slane %v1807, 4
        %v1810 = vshll.u32 %v1737, 16
        %v1812 = vrot.slane %v1810, 5
        %v1813 = vsel %vm1022, %v1808, %v1812
        %v1815 = vshrl.u32 %v1738, 16
        %v1817 = vrot.slane %v1815, 4
        %v1818 = vshll.u32 %v1738, 16
        %v1820 = vrot.slane %v1818, 5
        %v1821 = vor.u32 %v1817, %v1820
        %v1822 = vrot.slane %v1821, 4
        %v1824 = vshll.u32 %v1739, 16
        %v1826 = vrot.slane %v1824, 5
        %v1827 = vsel %vm1022, %v1822, %v1826
        %v1829 = vshrl.u32 %v1740, 16
        %v1831 = vrot.slane %v1829, 4
        %v1832 = vshll.u32 %v1740, 16
        %v1834 = vrot.slane %v1832, 5
        %v1835 = vor.u32 %v1831, %v1834
        %v1836 = vrot.slane %v1835, 4
        %v1838 = vshll.u32 %v1741, 16
        %v1840 = vrot.slane %v1838, 5
        %v1841 = vsel %vm1022, %v1836, %v1840
        %v1843 = vshrl.u32 %v1742, 16
        %v1845 = vrot.slane %v1843, 4
        %v1846 = vshll.u32 %v1742, 16
        %v1848 = vrot.slane %v1846, 5
        %v1849 = vor.u32 %v1845, %v1848
        %v1850 = vrot.slane %v1849, 4
        %v1852 = vshll.u32 %v1743, 16
        %v1854 = vrot.slane %v1852, 5
        %v1855 = vsel %vm1022, %v1850, %v1854
        %s1856 = scalar_lea.vmem [#allocation9], 256
        %v1857 = vld [vmem:[%s1856] sm:$0xf]
        %v1858 = vld [vmem:[%s1856 + $0x4] sm:$0xf]
        %v1859 = vld [vmem:[%s1856 + $0x8] sm:$0xf]
        %v1860 = vld [vmem:[%s1856 + $0xc] sm:$0xf]
        %v1861 = vld [vmem:[%s1856 + $0x10] sm:$0xf]
        %v1862 = vld [vmem:[%s1856 + $0x14] sm:$0xf]
        %v1863 = vld [vmem:[%s1856 + $0x18] sm:$0xf]
        %v1864 = vld [vmem:[%s1856 + $0x1c] sm:$0xf]
        %v1865 = vld [vmem:[%s1856 + $0x20] sm:$0xf]
        %v1866 = vld [vmem:[%s1856 + $0x24] sm:$0xf]
        %v1867 = vld [vmem:[%s1856 + $0x28] sm:$0xf]
        %v1868 = vld [vmem:[%s1856 + $0x2c] sm:$0xf]
        %v1869 = vld [vmem:[%s1856 + $0x30] sm:$0xf]
        %v1870 = vld [vmem:[%s1856 + $0x34] sm:$0xf]
        %v1871 = vld [vmem:[%s1856 + $0x38] sm:$0xf]
        %v1872 = vld [vmem:[%s1856 + $0x3c] sm:$0xf]
        %v1873 = vunpack.c.l.b16 %v1757
        %v1874 = vunpack.c.l.b16 %v1771
        %v1875 = vunpack.c.l.b16 %v1785
        %v1876 = vunpack.c.l.b16 %v1799
        %v1877 = vunpack.c.l.b16 %v1813
        %v1878 = vunpack.c.l.b16 %v1827
        %v1879 = vunpack.c.l.b16 %v1841
        %v1880 = vunpack.c.l.b16 %v1855
        %v1881 = vpack.c.b16 %v1874, %v1873
        %v1882 = vpack.c.b16 %v1876, %v1875
        %v1883 = vpack.c.b16 %v1878, %v1877
        %v1884 = vpack.c.b16 %v1880, %v1879
        %v1905 = vunpack.c.l.b16 %v1857
        %v1906 = vunpack.c.l.b16 %v1858
        %v1907 = vunpack.c.l.b16 %v1859
        %v1908 = vunpack.c.l.b16 %v1860
        %v1909 = vunpack.c.l.b16 %v1861
        %v1910 = vunpack.c.l.b16 %v1862
        %v1911 = vunpack.c.l.b16 %v1863
        %v1912 = vunpack.c.l.b16 %v1864
        %v1913 = vunpack.c.l.b16 %v1865
        %v1914 = vunpack.c.l.b16 %v1866
        %v1915 = vunpack.c.l.b16 %v1867
        %v1916 = vunpack.c.l.b16 %v1868
        %v1917 = vunpack.c.l.b16 %v1869
        %v1918 = vunpack.c.l.b16 %v1870
        %v1919 = vunpack.c.l.b16 %v1871
        %v1920 = vunpack.c.l.b16 %v1872
        %v1921 = vpack.c.b16 %v1906, %v1905
        %v1922 = vpack.c.b16 %v1908, %v1907
        %v1923 = vpack.c.b16 %v1910, %v1909
        %v1924 = vpack.c.b16 %v1912, %v1911
        %v1925 = vpack.c.b16 %v1914, %v1913
        %v1926 = vpack.c.b16 %v1916, %v1915
        %v1927 = vpack.c.b16 %v1918, %v1917
        %v1928 = vpack.c.b16 %v1920, %v1919
        %1937 = vmatprep.subr.bf16.mxu0 0
        %1938 = vmatpush1.bf16.msra.mxu0 %v1928
        %1939 = vmatprep.subr.bf16.mxu0 0
        %1940 = vmatpush1.bf16.msra.mxu0 %v1927
        %1941 = vmatprep.subr.bf16.mxu0 0
        %1942 = vmatpush1.bf16.msra.mxu0 %v1926
        %1943 = vmatprep.subr.bf16.mxu0 0
        %1944 = vmatpush1.bf16.msra.mxu0 %v1925
        %1945 = vmatprep.subr.bf16.mxu0 0
        %1946 = vmatpush1.bf16.msra.mxu0 %v1924
        %1947 = vmatprep.subr.bf16.mxu0 0
        %1948 = vmatpush1.bf16.msra.mxu0 %v1923
        %1949 = vmatprep.subr.bf16.mxu0 0
        %1950 = vmatpush1.bf16.msra.mxu0 %v1922
        %1951 = vmatprep.subr.bf16.mxu0 0
        %1952 = vmatpush1.bf16.msra.mxu0 %v1921
        %1953 = vmatprep.subr.bf16.mxu0 0
        %1954 = vmatpush2.bf16.msra.mxu0 0
        %1955 = vmatprep.subr.bf16.mxu0 0
        %1956 = vmatpush2.bf16.msra.mxu0 0
        %1957 = vmatprep.subr.bf16.mxu0 0
        %1958 = vmatpush2.bf16.msra.mxu0 0
        %1959 = vmatprep.subr.bf16.mxu0 0
        %1960 = vmatpush2.bf16.msra.mxu0 0
        %1961 = vmatprep.subr.bf16.mxu0 0
        %1962 = vmatpush2.bf16.msra.mxu0 0
        %1963 = vmatprep.subr.bf16.mxu0 0
        %1964 = vmatpush2.bf16.msra.mxu0 0
        %1965 = vmatprep.subr.bf16.mxu0 0
        %1966 = vmatpush2.bf16.msra.mxu0 0
        %1967 = vmatprep.subr.bf16.mxu0 0
        %1968 = vmatpush2.bf16.msra.mxu0 0
        %1969 = vmatprep.mubr.bf16.mxu0 0
        %1970 = vmatmul.mubr.bf16.gmra.mxu0 %v1881
        %v1971 = vpop.f32.mrf.mxu0
        %v1972 = vadd.f32 0.0, %v1971
        %v1973 = vpop.f32.mrf.mxu0
        %v1974 = vpop.f32.mrf.mxu0
        %v1975 = vadd.f32 0.0, %v1974
        %v1976 = vpop.f32.mrf.mxu0
        %1977 = vmatprep.mubr.bf16.mxu0 0
        %1978 = vmatmul.mubr.bf16.gmra.mxu0 %v1882
        %v1979 = vpop.f32.mrf.mxu0
        %v1980 = vadd.f32 0.0, %v1979
        %v1981 = vpop.f32.mrf.mxu0
        %v1982 = vpop.f32.mrf.mxu0
        %v1983 = vadd.f32 0.0, %v1982
        %v1984 = vpop.f32.mrf.mxu0
        %1985 = vmatprep.mubr.bf16.mxu0 0
        %1986 = vmatmul.mubr.bf16.gmra.mxu0 %v1883
        %v1987 = vpop.f32.mrf.mxu0
        %v1988 = vadd.f32 0.0, %v1987
        %v1989 = vpop.f32.mrf.mxu0
        %v1990 = vpop.f32.mrf.mxu0
        %v1991 = vadd.f32 0.0, %v1990
        %v1992 = vpop.f32.mrf.mxu0
        %1993 = vmatprep.mubr.bf16.mxu0 0
        %1994 = vmatmul.mubr.bf16.gmra.mxu0 %v1884
        %v1995 = vpop.f32.mrf.mxu0
        %v1996 = vadd.f32 0.0, %v1995
        %v1997 = vpop.f32.mrf.mxu0
        %v1998 = vpop.f32.mrf.mxu0
        %v1999 = vadd.f32 0.0, %v1998
        %v2000 = vpop.f32.mrf.mxu0
        %2001 = vdwg.mxu0
        %v2002 = vld [vmem:[#allocation3] sm:$0xff]
        %v2003 = vld [vmem:[#allocation3 + $0x8] sm:$0xff]
        %v2004 = vld [vmem:[#allocation3 + $0x10] sm:$0xff]
        %v2005 = vld [vmem:[#allocation3 + $0x18] sm:$0xff]
        %v2006 = vld [vmem:[#allocation3 + $0x20] sm:$0xff]
        %v2007 = vld [vmem:[#allocation3 + $0x28] sm:$0xff]
        %v2008 = vld [vmem:[#allocation3 + $0x30] sm:$0xff]
        %v2009 = vld [vmem:[#allocation3 + $0x38] sm:$0xff]
        %v2010 = vadd.f32 %v2002, %v1972
        %v2011 = vadd.f32 %v2003, %v1975
        %v2012 = vadd.f32 %v2004, %v1980
        %v2013 = vadd.f32 %v2005, %v1983
        %v2014 = vadd.f32 %v2006, %v1988
        %v2015 = vadd.f32 %v2007, %v1991
        %v2016 = vadd.f32 %v2008, %v1996
        %v2017 = vadd.f32 %v2009, %v1999
        %2018 = vst [vmem:[#allocation3] sm:$0xff] %v2010
        %2019 = vst [vmem:[#allocation3 + $0x8] sm:$0xff] %v2011
        %2020 = vst [vmem:[#allocation3 + $0x10] sm:$0xff] %v2012
        %2021 = vst [vmem:[#allocation3 + $0x18] sm:$0xff] %v2013
        %2022 = vst [vmem:[#allocation3 + $0x20] sm:$0xff] %v2014
        %2023 = vst [vmem:[#allocation3 + $0x28] sm:$0xff] %v2015
        %2024 = vst [vmem:[#allocation3 + $0x30] sm:$0xff] %v2016
        %2025 = vst [vmem:[#allocation3 + $0x38] sm:$0xff] %v2017
        %v2026 = vld [vmem:[%s627] sm:$0xe]
        %v2027 = vld [vmem:[%s627 + $0x4] sm:$0x1]
        %v2028 = vld [vmem:[%s627 + $0x8] sm:$0xe]
        %v2029 = vld [vmem:[%s627 + $0xc] sm:$0x1]
        %v2030 = vld [vmem:[%s627 + $0x10] sm:$0xe]
        %v2031 = vld [vmem:[%s627 + $0x14] sm:$0x1]
        %v2032 = vld [vmem:[%s627 + $0x18] sm:$0xe]
        %v2033 = vld [vmem:[%s627 + $0x1c] sm:$0x1]
        %v2034 = vld [vmem:[%s627 + $0x20] sm:$0xe]
        %v2035 = vld [vmem:[%s627 + $0x24] sm:$0x1]
        %v2036 = vld [vmem:[%s627 + $0x28] sm:$0xe]
        %v2037 = vld [vmem:[%s627 + $0x2c] sm:$0x1]
        %v2038 = vld [vmem:[%s627 + $0x30] sm:$0xe]
        %v2039 = vld [vmem:[%s627 + $0x34] sm:$0x1]
        %v2040 = vld [vmem:[%s627 + $0x38] sm:$0xe]
        %v2041 = vld [vmem:[%s627 + $0x3c] sm:$0x1]
        %v2058 = vrot.slane %v2026, 5
        %v2059 = vrot.slane %v2058, 4
        %v2060 = vrot.slane %v2027, 5
        %v2061 = vsel %vm1339, %v2059, %v2060
        %v2062 = vrot.slane %v2028, 5
        %v2063 = vrot.slane %v2062, 4
        %v2064 = vrot.slane %v2029, 5
        %v2065 = vsel %vm1339, %v2063, %v2064
        %v2066 = vrot.slane %v2030, 5
        %v2067 = vrot.slane %v2066, 4
        %v2068 = vrot.slane %v2031, 5
        %v2069 = vsel %vm1339, %v2067, %v2068
        %v2070 = vrot.slane %v2032, 5
        %v2071 = vrot.slane %v2070, 4
        %v2072 = vrot.slane %v2033, 5
        %v2073 = vsel %vm1339, %v2071, %v2072
        %v2074 = vrot.slane %v2034, 5
        %v2075 = vrot.slane %v2074, 4
        %v2076 = vrot.slane %v2035, 5
        %v2077 = vsel %vm1339, %v2075, %v2076
        %v2078 = vrot.slane %v2036, 5
        %v2079 = vrot.slane %v2078, 4
        %v2080 = vrot.slane %v2037, 5
        %v2081 = vsel %vm1339, %v2079, %v2080
        %v2082 = vrot.slane %v2038, 5
        %v2083 = vrot.slane %v2082, 4
        %v2084 = vrot.slane %v2039, 5
        %v2085 = vsel %vm1339, %v2083, %v2084
        %v2086 = vrot.slane %v2040, 5
        %v2087 = vrot.slane %v2086, 4
        %v2088 = vrot.slane %v2041, 5
        %v2089 = vsel %vm1339, %v2087, %v2088
        %s2090 = scalar_lea.vmem [#allocation9], 320
        %v2091 = vld [vmem:[%s2090] sm:$0xf]
        %v2092 = vld [vmem:[%s2090 + $0x4] sm:$0xf]
        %v2093 = vld [vmem:[%s2090 + $0x8] sm:$0xf]
        %v2094 = vld [vmem:[%s2090 + $0xc] sm:$0xf]
        %v2095 = vld [vmem:[%s2090 + $0x10] sm:$0xf]
        %v2096 = vld [vmem:[%s2090 + $0x14] sm:$0xf]
        %v2097 = vld [vmem:[%s2090 + $0x18] sm:$0xf]
        %v2098 = vld [vmem:[%s2090 + $0x1c] sm:$0xf]
        %v2099 = vld [vmem:[%s2090 + $0x20] sm:$0xf]
        %v2100 = vld [vmem:[%s2090 + $0x24] sm:$0xf]
        %v2101 = vld [vmem:[%s2090 + $0x28] sm:$0xf]
        %v2102 = vld [vmem:[%s2090 + $0x2c] sm:$0xf]
        %v2103 = vld [vmem:[%s2090 + $0x30] sm:$0xf]
        %v2104 = vld [vmem:[%s2090 + $0x34] sm:$0xf]
        %v2105 = vld [vmem:[%s2090 + $0x38] sm:$0xf]
        %v2106 = vld [vmem:[%s2090 + $0x3c] sm:$0xf]
        %v2107 = vunpack.c.l.b16 %v2061
        %v2108 = vunpack.c.l.b16 %v2065
        %v2109 = vunpack.c.l.b16 %v2069
        %v2110 = vunpack.c.l.b16 %v2073
        %v2111 = vunpack.c.l.b16 %v2077
        %v2112 = vunpack.c.l.b16 %v2081
        %v2113 = vunpack.c.l.b16 %v2085
        %v2114 = vunpack.c.l.b16 %v2089
        %v2115 = vpack.c.b16 %v2108, %v2107
        %v2116 = vpack.c.b16 %v2110, %v2109
        %v2117 = vpack.c.b16 %v2112, %v2111
        %v2118 = vpack.c.b16 %v2114, %v2113
        %v2139 = vunpack.c.l.b16 %v2091
        %v2140 = vunpack.c.l.b16 %v2092
        %v2141 = vunpack.c.l.b16 %v2093
        %v2142 = vunpack.c.l.b16 %v2094
        %v2143 = vunpack.c.l.b16 %v2095
        %v2144 = vunpack.c.l.b16 %v2096
        %v2145 = vunpack.c.l.b16 %v2097
        %v2146 = vunpack.c.l.b16 %v2098
        %v2147 = vunpack.c.l.b16 %v2099
        %v2148 = vunpack.c.l.b16 %v2100
        %v2149 = vunpack.c.l.b16 %v2101
        %v2150 = vunpack.c.l.b16 %v2102
        %v2151 = vunpack.c.l.b16 %v2103
        %v2152 = vunpack.c.l.b16 %v2104
        %v2153 = vunpack.c.l.b16 %v2105
        %v2154 = vunpack.c.l.b16 %v2106
        %v2155 = vpack.c.b16 %v2140, %v2139
        %v2156 = vpack.c.b16 %v2142, %v2141
        %v2157 = vpack.c.b16 %v2144, %v2143
        %v2158 = vpack.c.b16 %v2146, %v2145
        %v2159 = vpack.c.b16 %v2148, %v2147
        %v2160 = vpack.c.b16 %v2150, %v2149
        %v2161 = vpack.c.b16 %v2152, %v2151
        %v2162 = vpack.c.b16 %v2154, %v2153
        %2171 = vmatprep.subr.bf16.mxu0 0
        %2172 = vmatpush1.bf16.msra.mxu0 %v2162
        %2173 = vmatprep.subr.bf16.mxu0 0
        %2174 = vmatpush1.bf16.msra.mxu0 %v2161
        %2175 = vmatprep.subr.bf16.mxu0 0
        %2176 = vmatpush1.bf16.msra.mxu0 %v2160
        %2177 = vmatprep.subr.bf16.mxu0 0
        %2178 = vmatpush1.bf16.msra.mxu0 %v2159
        %2179 = vmatprep.subr.bf16.mxu0 0
        %2180 = vmatpush1.bf16.msra.mxu0 %v2158
        %2181 = vmatprep.subr.bf16.mxu0 0
        %2182 = vmatpush1.bf16.msra.mxu0 %v2157
        %2183 = vmatprep.subr.bf16.mxu0 0
        %2184 = vmatpush1.bf16.msra.mxu0 %v2156
        %2185 = vmatprep.subr.bf16.mxu0 0
        %2186 = vmatpush1.bf16.msra.mxu0 %v2155
        %2187 = vmatprep.subr.bf16.mxu0 0
        %2188 = vmatpush2.bf16.msra.mxu0 0
        %2189 = vmatprep.subr.bf16.mxu0 0
        %2190 = vmatpush2.bf16.msra.mxu0 0
        %2191 = vmatprep.subr.bf16.mxu0 0
        %2192 = vmatpush2.bf16.msra.mxu0 0
        %2193 = vmatprep.subr.bf16.mxu0 0
        %2194 = vmatpush2.bf16.msra.mxu0 0
        %2195 = vmatprep.subr.bf16.mxu0 0
        %2196 = vmatpush2.bf16.msra.mxu0 0
        %2197 = vmatprep.subr.bf16.mxu0 0
        %2198 = vmatpush2.bf16.msra.mxu0 0
        %2199 = vmatprep.subr.bf16.mxu0 0
        %2200 = vmatpush2.bf16.msra.mxu0 0
        %2201 = vmatprep.subr.bf16.mxu0 0
        %2202 = vmatpush2.bf16.msra.mxu0 0
        %2203 = vmatprep.mubr.bf16.mxu0 0
        %2204 = vmatmul.mubr.bf16.gmra.mxu0 %v2115
        %v2205 = vpop.f32.mrf.mxu0
        %v2206 = vadd.f32 0.0, %v2205
        %v2207 = vpop.f32.mrf.mxu0
        %v2208 = vpop.f32.mrf.mxu0
        %v2209 = vadd.f32 0.0, %v2208
        %v2210 = vpop.f32.mrf.mxu0
        %2211 = vmatprep.mubr.bf16.mxu0 0
        %2212 = vmatmul.mubr.bf16.gmra.mxu0 %v2116
        %v2213 = vpop.f32.mrf.mxu0
        %v2214 = vadd.f32 0.0, %v2213
        %v2215 = vpop.f32.mrf.mxu0
        %v2216 = vpop.f32.mrf.mxu0
        %v2217 = vadd.f32 0.0, %v2216
        %v2218 = vpop.f32.mrf.mxu0
        %2219 = vmatprep.mubr.bf16.mxu0 0
        %2220 = vmatmul.mubr.bf16.gmra.mxu0 %v2117
        %v2221 = vpop.f32.mrf.mxu0
        %v2222 = vadd.f32 0.0, %v2221
        %v2223 = vpop.f32.mrf.mxu0
        %v2224 = vpop.f32.mrf.mxu0
        %v2225 = vadd.f32 0.0, %v2224
        %v2226 = vpop.f32.mrf.mxu0
        %2227 = vmatprep.mubr.bf16.mxu0 0
        %2228 = vmatmul.mubr.bf16.gmra.mxu0 %v2118
        %v2229 = vpop.f32.mrf.mxu0
        %v2230 = vadd.f32 0.0, %v2229
        %v2231 = vpop.f32.mrf.mxu0
        %v2232 = vpop.f32.mrf.mxu0
        %v2233 = vadd.f32 0.0, %v2232
        %v2234 = vpop.f32.mrf.mxu0
        %2235 = vdwg.mxu0
        %v2236 = vld [vmem:[#allocation3] sm:$0xff]
        %v2237 = vld [vmem:[#allocation3 + $0x8] sm:$0xff]
        %v2238 = vld [vmem:[#allocation3 + $0x10] sm:$0xff]
        %v2239 = vld [vmem:[#allocation3 + $0x18] sm:$0xff]
        %v2240 = vld [vmem:[#allocation3 + $0x20] sm:$0xff]
        %v2241 = vld [vmem:[#allocation3 + $0x28] sm:$0xff]
        %v2242 = vld [vmem:[#allocation3 + $0x30] sm:$0xff]
        %v2243 = vld [vmem:[#allocation3 + $0x38] sm:$0xff]
        %v2244 = vadd.f32 %v2236, %v2206
        %v2245 = vadd.f32 %v2237, %v2209
        %v2246 = vadd.f32 %v2238, %v2214
        %v2247 = vadd.f32 %v2239, %v2217
        %v2248 = vadd.f32 %v2240, %v2222
        %v2249 = vadd.f32 %v2241, %v2225
        %v2250 = vadd.f32 %v2242, %v2230
        %v2251 = vadd.f32 %v2243, %v2233
        %2252 = vst [vmem:[#allocation3] sm:$0xff] %v2244
        %2253 = vst [vmem:[#allocation3 + $0x8] sm:$0xff] %v2245
        %2254 = vst [vmem:[#allocation3 + $0x10] sm:$0xff] %v2246
        %2255 = vst [vmem:[#allocation3 + $0x18] sm:$0xff] %v2247
        %2256 = vst [vmem:[#allocation3 + $0x20] sm:$0xff] %v2248
        %2257 = vst [vmem:[#allocation3 + $0x28] sm:$0xff] %v2249
        %2258 = vst [vmem:[#allocation3 + $0x30] sm:$0xff] %v2250
        %2259 = vst [vmem:[#allocation3 + $0x38] sm:$0xff] %v2251
        %s2260 = scalar_lea.vmem [#allocation2], 16
        %v2261 = vld [vmem:[%s2260] sm:$0xf]
        %v2262 = vld [vmem:[%s2260 + $0x8] sm:$0xf]
        %v2263 = vld [vmem:[%s2260 + $0x10] sm:$0xf]
        %v2264 = vld [vmem:[%s2260 + $0x18] sm:$0xf]
        %v2265 = vld [vmem:[%s2260 + $0x20] sm:$0xf]
        %v2266 = vld [vmem:[%s2260 + $0x28] sm:$0xf]
        %v2267 = vld [vmem:[%s2260 + $0x30] sm:$0xf]
        %v2268 = vld [vmem:[%s2260 + $0x38] sm:$0xf]
        %s2269 = scalar_lea.vmem [#allocation9], 384
        %v2270 = vld [vmem:[%s2269] sm:$0xf]
        %v2271 = vld [vmem:[%s2269 + $0x4] sm:$0xf]
        %v2272 = vld [vmem:[%s2269 + $0x8] sm:$0xf]
        %v2273 = vld [vmem:[%s2269 + $0xc] sm:$0xf]
        %v2274 = vld [vmem:[%s2269 + $0x10] sm:$0xf]
        %v2275 = vld [vmem:[%s2269 + $0x14] sm:$0xf]
        %v2276 = vld [vmem:[%s2269 + $0x18] sm:$0xf]
        %v2277 = vld [vmem:[%s2269 + $0x1c] sm:$0xf]
        %v2278 = vld [vmem:[%s2269 + $0x20] sm:$0xf]
        %v2279 = vld [vmem:[%s2269 + $0x24] sm:$0xf]
        %v2280 = vld [vmem:[%s2269 + $0x28] sm:$0xf]
        %v2281 = vld [vmem:[%s2269 + $0x2c] sm:$0xf]
        %v2282 = vld [vmem:[%s2269 + $0x30] sm:$0xf]
        %v2283 = vld [vmem:[%s2269 + $0x34] sm:$0xf]
        %v2284 = vld [vmem:[%s2269 + $0x38] sm:$0xf]
        %v2285 = vld [vmem:[%s2269 + $0x3c] sm:$0xf]
        %v2294 = vunpack.c.l.b16 %v2261
        %v2295 = vunpack.c.l.b16 %v2262
        %v2296 = vunpack.c.l.b16 %v2263
        %v2297 = vunpack.c.l.b16 %v2264
        %v2298 = vunpack.c.l.b16 %v2265
        %v2299 = vunpack.c.l.b16 %v2266
        %v2300 = vunpack.c.l.b16 %v2267
        %v2301 = vunpack.c.l.b16 %v2268
        %v2302 = vpack.c.b16 %v2295, %v2294
        %v2303 = vpack.c.b16 %v2297, %v2296
        %v2304 = vpack.c.b16 %v2299, %v2298
        %v2305 = vpack.c.b16 %v2301, %v2300
        %v2326 = vunpack.c.l.b16 %v2270
        %v2327 = vunpack.c.l.b16 %v2271
        %v2328 = vunpack.c.l.b16 %v2272
        %v2329 = vunpack.c.l.b16 %v2273
        %v2330 = vunpack.c.l.b16 %v2274
        %v2331 = vunpack.c.l.b16 %v2275
        %v2332 = vunpack.c.l.b16 %v2276
        %v2333 = vunpack.c.l.b16 %v2277
        %v2334 = vunpack.c.l.b16 %v2278
        %v2335 = vunpack.c.l.b16 %v2279
        %v2336 = vunpack.c.l.b16 %v2280
        %v2337 = vunpack.c.l.b16 %v2281
        %v2338 = vunpack.c.l.b16 %v2282
        %v2339 = vunpack.c.l.b16 %v2283
        %v2340 = vunpack.c.l.b16 %v2284
        %v2341 = vunpack.c.l.b16 %v2285
        %v2342 = vpack.c.b16 %v2327, %v2326
        %v2343 = vpack.c.b16 %v2329, %v2328
        %v2344 = vpack.c.b16 %v2331, %v2330
        %v2345 = vpack.c.b16 %v2333, %v2332
        %v2346 = vpack.c.b16 %v2335, %v2334
        %v2347 = vpack.c.b16 %v2337, %v2336
        %v2348 = vpack.c.b16 %v2339, %v2338
        %v2349 = vpack.c.b16 %v2341, %v2340
        %2358 = vmatprep.subr.bf16.mxu0 0
        %2359 = vmatpush1.bf16.msra.mxu0 %v2349
        %2360 = vmatprep.subr.bf16.mxu0 0
        %2361 = vmatpush1.bf16.msra.mxu0 %v2348
        %2362 = vmatprep.subr.bf16.mxu0 0
        %2363 = vmatpush1.bf16.msra.mxu0 %v2347
        %2364 = vmatprep.subr.bf16.mxu0 0
        %2365 = vmatpush1.bf16.msra.mxu0 %v2346
        %2366 = vmatprep.subr.bf16.mxu0 0
        %2367 = vmatpush1.bf16.msra.mxu0 %v2345
        %2368 = vmatprep.subr.bf16.mxu0 0
        %2369 = vmatpush1.bf16.msra.mxu0 %v2344
        %2370 = vmatprep.subr.bf16.mxu0 0
        %2371 = vmatpush1.bf16.msra.mxu0 %v2343
        %2372 = vmatprep.subr.bf16.mxu0 0
        %2373 = vmatpush1.bf16.msra.mxu0 %v2342
        %2374 = vmatprep.subr.bf16.mxu0 0
        %2375 = vmatpush2.bf16.msra.mxu0 0
        %2376 = vmatprep.subr.bf16.mxu0 0
        %2377 = vmatpush2.bf16.msra.mxu0 0
        %2378 = vmatprep.subr.bf16.mxu0 0
        %2379 = vmatpush2.bf16.msra.mxu0 0
        %2380 = vmatprep.subr.bf16.mxu0 0
        %2381 = vmatpush2.bf16.msra.mxu0 0
        %2382 = vmatprep.subr.bf16.mxu0 0
        %2383 = vmatpush2.bf16.msra.mxu0 0
        %2384 = vmatprep.subr.bf16.mxu0 0
        %2385 = vmatpush2.bf16.msra.mxu0 0
        %2386 = vmatprep.subr.bf16.mxu0 0
        %2387 = vmatpush2.bf16.msra.mxu0 0
        %2388 = vmatprep.subr.bf16.mxu0 0
        %2389 = vmatpush2.bf16.msra.mxu0 0
        %2390 = vmatprep.mubr.bf16.mxu0 0
        %2391 = vmatmul.mubr.bf16.gmra.mxu0 %v2302
        %v2392 = vpop.f32.mrf.mxu0
        %v2393 = vadd.f32 0.0, %v2392
        %v2394 = vpop.f32.mrf.mxu0
        %v2395 = vpop.f32.mrf.mxu0
        %v2396 = vadd.f32 0.0, %v2395
        %v2397 = vpop.f32.mrf.mxu0
        %2398 = vmatprep.mubr.bf16.mxu0 0
        %2399 = vmatmul.mubr.bf16.gmra.mxu0 %v2303
        %v2400 = vpop.f32.mrf.mxu0
        %v2401 = vadd.f32 0.0, %v2400
        %v2402 = vpop.f32.mrf.mxu0
        %v2403 = vpop.f32.mrf.mxu0
        %v2404 = vadd.f32 0.0, %v2403
        %v2405 = vpop.f32.mrf.mxu0
        %2406 = vmatprep.mubr.bf16.mxu0 0
        %2407 = vmatmul.mubr.bf16.gmra.mxu0 %v2304
        %v2408 = vpop.f32.mrf.mxu0
        %v2409 = vadd.f32 0.0, %v2408
        %v2410 = vpop.f32.mrf.mxu0
        %v2411 = vpop.f32.mrf.mxu0
        %v2412 = vadd.f32 0.0, %v2411
        %v2413 = vpop.f32.mrf.mxu0
        %2414 = vmatprep.mubr.bf16.mxu0 0
        %2415 = vmatmul.mubr.bf16.gmra.mxu0 %v2305
        %v2416 = vpop.f32.mrf.mxu0
        %v2417 = vadd.f32 0.0, %v2416
        %v2418 = vpop.f32.mrf.mxu0
        %v2419 = vpop.f32.mrf.mxu0
        %v2420 = vadd.f32 0.0, %v2419
        %v2421 = vpop.f32.mrf.mxu0
        %2422 = vdwg.mxu0
        %v2423 = vld [vmem:[#allocation3] sm:$0xff]
        %v2424 = vld [vmem:[#allocation3 + $0x8] sm:$0xff]
        %v2425 = vld [vmem:[#allocation3 + $0x10] sm:$0xff]
        %v2426 = vld [vmem:[#allocation3 + $0x18] sm:$0xff]
        %v2427 = vld [vmem:[#allocation3 + $0x20] sm:$0xff]
        %v2428 = vld [vmem:[#allocation3 + $0x28] sm:$0xff]
        %v2429 = vld [vmem:[#allocation3 + $0x30] sm:$0xff]
        %v2430 = vld [vmem:[#allocation3 + $0x38] sm:$0xff]
        %v2431 = vadd.f32 %v2423, %v2393
        %v2432 = vadd.f32 %v2424, %v2396
        %v2433 = vadd.f32 %v2425, %v2401
        %v2434 = vadd.f32 %v2426, %v2404
        %v2435 = vadd.f32 %v2427, %v2409
        %v2436 = vadd.f32 %v2428, %v2412
        %v2437 = vadd.f32 %v2429, %v2417
        %v2438 = vadd.f32 %v2430, %v2420
        %2439 = vst [vmem:[#allocation3] sm:$0xff] %v2431
        %2440 = vst [vmem:[#allocation3 + $0x8] sm:$0xff] %v2432
        %2441 = vst [vmem:[#allocation3 + $0x10] sm:$0xff] %v2433
        %2442 = vst [vmem:[#allocation3 + $0x18] sm:$0xff] %v2434
        %2443 = vst [vmem:[#allocation3 + $0x20] sm:$0xff] %v2435
        %2444 = vst [vmem:[#allocation3 + $0x28] sm:$0xff] %v2436
        %2445 = vst [vmem:[#allocation3 + $0x30] sm:$0xff] %v2437
        %2446 = vst [vmem:[#allocation3 + $0x38] sm:$0xff] %v2438
        %v2447 = vld [vmem:[%s2260] sm:$0xf]
        %v2448 = vld [vmem:[%s2260 + $0x4] sm:$0x1]
        %v2449 = vld [vmem:[%s2260 + $0x8] sm:$0xf]
        %v2450 = vld [vmem:[%s2260 + $0xc] sm:$0x1]
        %v2451 = vld [vmem:[%s2260 + $0x10] sm:$0xf]
        %v2452 = vld [vmem:[%s2260 + $0x14] sm:$0x1]
        %v2453 = vld [vmem:[%s2260 + $0x18] sm:$0xf]
        %v2454 = vld [vmem:[%s2260 + $0x1c] sm:$0x1]
        %v2455 = vld [vmem:[%s2260 + $0x20] sm:$0xf]
        %v2456 = vld [vmem:[%s2260 + $0x24] sm:$0x1]
        %v2457 = vld [vmem:[%s2260 + $0x28] sm:$0xf]
        %v2458 = vld [vmem:[%s2260 + $0x2c] sm:$0x1]
        %v2459 = vld [vmem:[%s2260 + $0x30] sm:$0xf]
        %v2460 = vld [vmem:[%s2260 + $0x34] sm:$0x1]
        %v2461 = vld [vmem:[%s2260 + $0x38] sm:$0xf]
        %v2462 = vld [vmem:[%s2260 + $0x3c] sm:$0x1]
        %v2464 = vshrl.u32 %v2447, 16
        %v2466 = vrot.slane %v2464, 4
        %v2467 = vshll.u32 %v2447, 16
        %v2469 = vrot.slane %v2467, 5
        %v2470 = vor.u32 %v2466, %v2469
        %v2471 = vrot.slane %v2470, 4
        %v2473 = vshll.u32 %v2448, 16
        %v2475 = vrot.slane %v2473, 5
        %v2476 = vsel %vm1022, %v2471, %v2475
        %v2478 = vshrl.u32 %v2449, 16
        %v2480 = vrot.slane %v2478, 4
        %v2481 = vshll.u32 %v2449, 16
        %v2483 = vrot.slane %v2481, 5
        %v2484 = vor.u32 %v2480, %v2483
        %v2485 = vrot.slane %v2484, 4
        %v2487 = vshll.u32 %v2450, 16
        %v2489 = vrot.slane %v2487, 5
        %v2490 = vsel %vm1022, %v2485, %v2489
        %v2492 = vshrl.u32 %v2451, 16
        %v2494 = vrot.slane %v2492, 4
        %v2495 = vshll.u32 %v2451, 16
        %v2497 = vrot.slane %v2495, 5
        %v2498 = vor.u32 %v2494, %v2497
        %v2499 = vrot.slane %v2498, 4
        %v2501 = vshll.u32 %v2452, 16
        %v2503 = vrot.slane %v2501, 5
        %v2504 = vsel %vm1022, %v2499, %v2503
        %v2506 = vshrl.u32 %v2453, 16
        %v2508 = vrot.slane %v2506, 4
        %v2509 = vshll.u32 %v2453, 16
        %v2511 = vrot.slane %v2509, 5
        %v2512 = vor.u32 %v2508, %v2511
        %v2513 = vrot.slane %v2512, 4
        %v2515 = vshll.u32 %v2454, 16
        %v2517 = vrot.slane %v2515, 5
        %v2518 = vsel %vm1022, %v2513, %v2517
        %v2520 = vshrl.u32 %v2455, 16
        %v2522 = vrot.slane %v2520, 4
        %v2523 = vshll.u32 %v2455, 16
        %v2525 = vrot.slane %v2523, 5
        %v2526 = vor.u32 %v2522, %v2525
        %v2527 = vrot.slane %v2526, 4
        %v2529 = vshll.u32 %v2456, 16
        %v2531 = vrot.slane %v2529, 5
        %v2532 = vsel %vm1022, %v2527, %v2531
        %v2534 = vshrl.u32 %v2457, 16
        %v2536 = vrot.slane %v2534, 4
        %v2537 = vshll.u32 %v2457, 16
        %v2539 = vrot.slane %v2537, 5
        %v2540 = vor.u32 %v2536, %v2539
        %v2541 = vrot.slane %v2540, 4
        %v2543 = vshll.u32 %v2458, 16
        %v2545 = vrot.slane %v2543, 5
        %v2546 = vsel %vm1022, %v2541, %v2545
        %v2548 = vshrl.u32 %v2459, 16
        %v2550 = vrot.slane %v2548, 4
        %v2551 = vshll.u32 %v2459, 16
        %v2553 = vrot.slane %v2551, 5
        %v2554 = vor.u32 %v2550, %v2553
        %v2555 = vrot.slane %v2554, 4
        %v2557 = vshll.u32 %v2460, 16
        %v2559 = vrot.slane %v2557, 5
        %v2560 = vsel %vm1022, %v2555, %v2559
        %v2562 = vshrl.u32 %v2461, 16
        %v2564 = vrot.slane %v2562, 4
        %v2565 = vshll.u32 %v2461, 16
        %v2567 = vrot.slane %v2565, 5
        %v2568 = vor.u32 %v2564, %v2567
        %v2569 = vrot.slane %v2568, 4
        %v2571 = vshll.u32 %v2462, 16
        %v2573 = vrot.slane %v2571, 5
        %v2574 = vsel %vm1022, %v2569, %v2573
        %s2575 = scalar_lea.vmem [#allocation9], 448
        %v2576 = vld [vmem:[%s2575] sm:$0xf]
        %v2577 = vld [vmem:[%s2575 + $0x4] sm:$0xf]
        %v2578 = vld [vmem:[%s2575 + $0x8] sm:$0xf]
        %v2579 = vld [vmem:[%s2575 + $0xc] sm:$0xf]
        %v2580 = vld [vmem:[%s2575 + $0x10] sm:$0xf]
        %v2581 = vld [vmem:[%s2575 + $0x14] sm:$0xf]
        %v2582 = vld [vmem:[%s2575 + $0x18] sm:$0xf]
        %v2583 = vld [vmem:[%s2575 + $0x1c] sm:$0xf]
        %v2584 = vld [vmem:[%s2575 + $0x20] sm:$0xf]
        %v2585 = vld [vmem:[%s2575 + $0x24] sm:$0xf]
        %v2586 = vld [vmem:[%s2575 + $0x28] sm:$0xf]
        %v2587 = vld [vmem:[%s2575 + $0x2c] sm:$0xf]
        %v2588 = vld [vmem:[%s2575 + $0x30] sm:$0xf]
        %v2589 = vld [vmem:[%s2575 + $0x34] sm:$0xf]
        %v2590 = vld [vmem:[%s2575 + $0x38] sm:$0xf]
        %v2591 = vld [vmem:[%s2575 + $0x3c] sm:$0xf]
        %v2592 = vunpack.c.l.b16 %v2476
        %v2593 = vunpack.c.l.b16 %v2490
        %v2594 = vunpack.c.l.b16 %v2504
        %v2595 = vunpack.c.l.b16 %v2518
        %v2596 = vunpack.c.l.b16 %v2532
        %v2597 = vunpack.c.l.b16 %v2546
        %v2598 = vunpack.c.l.b16 %v2560
        %v2599 = vunpack.c.l.b16 %v2574
        %v2600 = vpack.c.b16 %v2593, %v2592
        %v2601 = vpack.c.b16 %v2595, %v2594
        %v2602 = vpack.c.b16 %v2597, %v2596
        %v2603 = vpack.c.b16 %v2599, %v2598
        %v2624 = vunpack.c.l.b16 %v2576
        %v2625 = vunpack.c.l.b16 %v2577
        %v2626 = vunpack.c.l.b16 %v2578
        %v2627 = vunpack.c.l.b16 %v2579
        %v2628 = vunpack.c.l.b16 %v2580
        %v2629 = vunpack.c.l.b16 %v2581
        %v2630 = vunpack.c.l.b16 %v2582
        %v2631 = vunpack.c.l.b16 %v2583
        %v2632 = vunpack.c.l.b16 %v2584
        %v2633 = vunpack.c.l.b16 %v2585
        %v2634 = vunpack.c.l.b16 %v2586
        %v2635 = vunpack.c.l.b16 %v2587
        %v2636 = vunpack.c.l.b16 %v2588
        %v2637 = vunpack.c.l.b16 %v2589
        %v2638 = vunpack.c.l.b16 %v2590
        %v2639 = vunpack.c.l.b16 %v2591
        %v2640 = vpack.c.b16 %v2625, %v2624
        %v2641 = vpack.c.b16 %v2627, %v2626
        %v2642 = vpack.c.b16 %v2629, %v2628
        %v2643 = vpack.c.b16 %v2631, %v2630
        %v2644 = vpack.c.b16 %v2633, %v2632
        %v2645 = vpack.c.b16 %v2635, %v2634
        %v2646 = vpack.c.b16 %v2637, %v2636
        %v2647 = vpack.c.b16 %v2639, %v2638
        %2656 = vmatprep.subr.bf16.mxu0 0
        %2657 = vmatpush1.bf16.msra.mxu0 %v2647
        %2658 = vmatprep.subr.bf16.mxu0 0
        %2659 = vmatpush1.bf16.msra.mxu0 %v2646
        %2660 = vmatprep.subr.bf16.mxu0 0
        %2661 = vmatpush1.bf16.msra.mxu0 %v2645
        %2662 = vmatprep.subr.bf16.mxu0 0
        %2663 = vmatpush1.bf16.msra.mxu0 %v2644
        %2664 = vmatprep.subr.bf16.mxu0 0
        %2665 = vmatpush1.bf16.msra.mxu0 %v2643
        %2666 = vmatprep.subr.bf16.mxu0 0
        %2667 = vmatpush1.bf16.msra.mxu0 %v2642
        %2668 = vmatprep.subr.bf16.mxu0 0
        %2669 = vmatpush1.bf16.msra.mxu0 %v2641
        %2670 = vmatprep.subr.bf16.mxu0 0
        %2671 = vmatpush1.bf16.msra.mxu0 %v2640
        %2672 = vmatprep.subr.bf16.mxu0 0
        %2673 = vmatpush2.bf16.msra.mxu0 0
        %2674 = vmatprep.subr.bf16.mxu0 0
        %2675 = vmatpush2.bf16.msra.mxu0 0
        %2676 = vmatprep.subr.bf16.mxu0 0
        %2677 = vmatpush2.bf16.msra.mxu0 0
        %2678 = vmatprep.subr.bf16.mxu0 0
        %2679 = vmatpush2.bf16.msra.mxu0 0
        %2680 = vmatprep.subr.bf16.mxu0 0
        %2681 = vmatpush2.bf16.msra.mxu0 0
        %2682 = vmatprep.subr.bf16.mxu0 0
        %2683 = vmatpush2.bf16.msra.mxu0 0
        %2684 = vmatprep.subr.bf16.mxu0 0
        %2685 = vmatpush2.bf16.msra.mxu0 0
        %2686 = vmatprep.subr.bf16.mxu0 0
        %2687 = vmatpush2.bf16.msra.mxu0 0
        %2688 = vmatprep.mubr.bf16.mxu0 0
        %2689 = vmatmul.mubr.bf16.gmra.mxu0 %v2600
        %v2690 = vpop.f32.mrf.mxu0
        %v2691 = vadd.f32 0.0, %v2690
        %v2692 = vpop.f32.mrf.mxu0
        %v2693 = vpop.f32.mrf.mxu0
        %v2694 = vadd.f32 0.0, %v2693
        %v2695 = vpop.f32.mrf.mxu0
        %2696 = vmatprep.mubr.bf16.mxu0 0
        %2697 = vmatmul.mubr.bf16.gmra.mxu0 %v2601
        %v2698 = vpop.f32.mrf.mxu0
        %v2699 = vadd.f32 0.0, %v2698
        %v2700 = vpop.f32.mrf.mxu0
        %v2701 = vpop.f32.mrf.mxu0
        %v2702 = vadd.f32 0.0, %v2701
        %v2703 = vpop.f32.mrf.mxu0
        %2704 = vmatprep.mubr.bf16.mxu0 0
        %2705 = vmatmul.mubr.bf16.gmra.mxu0 %v2602
        %v2706 = vpop.f32.mrf.mxu0
        %v2707 = vadd.f32 0.0, %v2706
        %v2708 = vpop.f32.mrf.mxu0
        %v2709 = vpop.f32.mrf.mxu0
        %v2710 = vadd.f32 0.0, %v2709
        %v2711 = vpop.f32.mrf.mxu0
        %2712 = vmatprep.mubr.bf16.mxu0 0
        %2713 = vmatmul.mubr.bf16.gmra.mxu0 %v2603
        %v2714 = vpop.f32.mrf.mxu0
        %v2715 = vadd.f32 0.0, %v2714
        %v2716 = vpop.f32.mrf.mxu0
        %v2717 = vpop.f32.mrf.mxu0
        %v2718 = vadd.f32 0.0, %v2717
        %v2719 = vpop.f32.mrf.mxu0
        %2720 = vdwg.mxu0
        %v2721 = vld [vmem:[#allocation3] sm:$0xff]
        %v2722 = vld [vmem:[#allocation3 + $0x8] sm:$0xff]
        %v2723 = vld [vmem:[#allocation3 + $0x10] sm:$0xff]
        %v2724 = vld [vmem:[#allocation3 + $0x18] sm:$0xff]
        %v2725 = vld [vmem:[#allocation3 + $0x20] sm:$0xff]
        %v2726 = vld [vmem:[#allocation3 + $0x28] sm:$0xff]
        %v2727 = vld [vmem:[#allocation3 + $0x30] sm:$0xff]
        %v2728 = vld [vmem:[#allocation3 + $0x38] sm:$0xff]
        %v2729 = vadd.f32 %v2721, %v2691
        %v2730 = vadd.f32 %v2722, %v2694
        %v2731 = vadd.f32 %v2723, %v2699
        %v2732 = vadd.f32 %v2724, %v2702
        %v2733 = vadd.f32 %v2725, %v2707
        %v2734 = vadd.f32 %v2726, %v2710
        %v2735 = vadd.f32 %v2727, %v2715
        %v2736 = vadd.f32 %v2728, %v2718
        %2737 = vst [vmem:[#allocation3] sm:$0xff] %v2729
        %2738 = vst [vmem:[#allocation3 + $0x8] sm:$0xff] %v2730
        %2739 = vst [vmem:[#allocation3 + $0x10] sm:$0xff] %v2731
        %2740 = vst [vmem:[#allocation3 + $0x18] sm:$0xff] %v2732
        %2741 = vst [vmem:[#allocation3 + $0x20] sm:$0xff] %v2733
        %2742 = vst [vmem:[#allocation3 + $0x28] sm:$0xff] %v2734
        %2743 = vst [vmem:[#allocation3 + $0x30] sm:$0xff] %v2735
        %2744 = vst [vmem:[#allocation3 + $0x38] sm:$0xff] %v2736
        %v2745 = vld [vmem:[%s2260] sm:$0xe]
        %v2746 = vld [vmem:[%s2260 + $0x4] sm:$0x1]
        %v2747 = vld [vmem:[%s2260 + $0x8] sm:$0xe]
        %v2748 = vld [vmem:[%s2260 + $0xc] sm:$0x1]
        %v2749 = vld [vmem:[%s2260 + $0x10] sm:$0xe]
        %v2750 = vld [vmem:[%s2260 + $0x14] sm:$0x1]
        %v2751 = vld [vmem:[%s2260 + $0x18] sm:$0xe]
        %v2752 = vld [vmem:[%s2260 + $0x1c] sm:$0x1]
        %v2753 = vld [vmem:[%s2260 + $0x20] sm:$0xe]
        %v2754 = vld [vmem:[%s2260 + $0x24] sm:$0x1]
        %v2755 = vld [vmem:[%s2260 + $0x28] sm:$0xe]
        %v2756 = vld [vmem:[%s2260 + $0x2c] sm:$0x1]
        %v2757 = vld [vmem:[%s2260 + $0x30] sm:$0xe]
        %v2758 = vld [vmem:[%s2260 + $0x34] sm:$0x1]
        %v2759 = vld [vmem:[%s2260 + $0x38] sm:$0xe]
        %v2760 = vld [vmem:[%s2260 + $0x3c] sm:$0x1]
        %v2777 = vrot.slane %v2745, 5
        %v2778 = vrot.slane %v2777, 4
        %v2779 = vrot.slane %v2746, 5
        %v2780 = vsel %vm1339, %v2778, %v2779
        %v2781 = vrot.slane %v2747, 5
        %v2782 = vrot.slane %v2781, 4
        %v2783 = vrot.slane %v2748, 5
        %v2784 = vsel %vm1339, %v2782, %v2783
        %v2785 = vrot.slane %v2749, 5
        %v2786 = vrot.slane %v2785, 4
        %v2787 = vrot.slane %v2750, 5
        %v2788 = vsel %vm1339, %v2786, %v2787
        %v2789 = vrot.slane %v2751, 5
        %v2790 = vrot.slane %v2789, 4
        %v2791 = vrot.slane %v2752, 5
        %v2792 = vsel %vm1339, %v2790, %v2791
        %v2793 = vrot.slane %v2753, 5
        %v2794 = vrot.slane %v2793, 4
        %v2795 = vrot.slane %v2754, 5
        %v2796 = vsel %vm1339, %v2794, %v2795
        %v2797 = vrot.slane %v2755, 5
        %v2798 = vrot.slane %v2797, 4
        %v2799 = vrot.slane %v2756, 5
        %v2800 = vsel %vm1339, %v2798, %v2799
        %v2801 = vrot.slane %v2757, 5
        %v2802 = vrot.slane %v2801, 4
        %v2803 = vrot.slane %v2758, 5
        %v2804 = vsel %vm1339, %v2802, %v2803
        %v2805 = vrot.slane %v2759, 5
        %v2806 = vrot.slane %v2805, 4
        %v2807 = vrot.slane %v2760, 5
        %v2808 = vsel %vm1339, %v2806, %v2807
        %s2809 = scalar_lea.vmem [#allocation9], 512
        %v2810 = vld [vmem:[%s2809] sm:$0xf]
        %v2811 = vld [vmem:[%s2809 + $0x4] sm:$0xf]
        %v2812 = vld [vmem:[%s2809 + $0x8] sm:$0xf]
        %v2813 = vld [vmem:[%s2809 + $0xc] sm:$0xf]
        %v2814 = vld [vmem:[%s2809 + $0x10] sm:$0xf]
        %v2815 = vld [vmem:[%s2809 + $0x14] sm:$0xf]
        %v2816 = vld [vmem:[%s2809 + $0x18] sm:$0xf]
        %v2817 = vld [vmem:[%s2809 + $0x1c] sm:$0xf]
        %v2818 = vld [vmem:[%s2809 + $0x20] sm:$0xf]
        %v2819 = vld [vmem:[%s2809 + $0x24] sm:$0xf]
        %v2820 = vld [vmem:[%s2809 + $0x28] sm:$0xf]
        %v2821 = vld [vmem:[%s2809 + $0x2c] sm:$0xf]
        %v2822 = vld [vmem:[%s2809 + $0x30] sm:$0xf]
        %v2823 = vld [vmem:[%s2809 + $0x34] sm:$0xf]
        %v2824 = vld [vmem:[%s2809 + $0x38] sm:$0xf]
        %v2825 = vld [vmem:[%s2809 + $0x3c] sm:$0xf]
        %v2826 = vunpack.c.l.b16 %v2780
        %v2827 = vunpack.c.l.b16 %v2784
        %v2828 = vunpack.c.l.b16 %v2788
        %v2829 = vunpack.c.l.b16 %v2792
        %v2830 = vunpack.c.l.b16 %v2796
        %v2831 = vunpack.c.l.b16 %v2800
        %v2832 = vunpack.c.l.b16 %v2804
        %v2833 = vunpack.c.l.b16 %v2808
        %v2834 = vpack.c.b16 %v2827, %v2826
        %v2835 = vpack.c.b16 %v2829, %v2828
        %v2836 = vpack.c.b16 %v2831, %v2830
        %v2837 = vpack.c.b16 %v2833, %v2832
        %v2858 = vunpack.c.l.b16 %v2810
        %v2859 = vunpack.c.l.b16 %v2811
        %v2860 = vunpack.c.l.b16 %v2812
        %v2861 = vunpack.c.l.b16 %v2813
        %v2862 = vunpack.c.l.b16 %v2814
        %v2863 = vunpack.c.l.b16 %v2815
        %v2864 = vunpack.c.l.b16 %v2816
        %v2865 = vunpack.c.l.b16 %v2817
        %v2866 = vunpack.c.l.b16 %v2818
        %v2867 = vunpack.c.l.b16 %v2819
        %v2868 = vunpack.c.l.b16 %v2820
        %v2869 = vunpack.c.l.b16 %v2821
        %v2870 = vunpack.c.l.b16 %v2822
        %v2871 = vunpack.c.l.b16 %v2823
        %v2872 = vunpack.c.l.b16 %v2824
        %v2873 = vunpack.c.l.b16 %v2825
        %v2874 = vpack.c.b16 %v2859, %v2858
        %v2875 = vpack.c.b16 %v2861, %v2860
        %v2876 = vpack.c.b16 %v2863, %v2862
        %v2877 = vpack.c.b16 %v2865, %v2864
        %v2878 = vpack.c.b16 %v2867, %v2866
        %v2879 = vpack.c.b16 %v2869, %v2868
        %v2880 = vpack.c.b16 %v2871, %v2870
        %v2881 = vpack.c.b16 %v2873, %v2872
        %2890 = vmatprep.subr.bf16.mxu0 0
        %2891 = vmatpush1.bf16.msra.mxu0 %v2881
        %2892 = vmatprep.subr.bf16.mxu0 0
        %2893 = vmatpush1.bf16.msra.mxu0 %v2880
        %2894 = vmatprep.subr.bf16.mxu0 0
        %2895 = vmatpush1.bf16.msra.mxu0 %v2879
        %2896 = vmatprep.subr.bf16.mxu0 0
        %2897 = vmatpush1.bf16.msra.mxu0 %v2878
        %2898 = vmatprep.subr.bf16.mxu0 0
        %2899 = vmatpush1.bf16.msra.mxu0 %v2877
        %2900 = vmatprep.subr.bf16.mxu0 0
        %2901 = vmatpush1.bf16.msra.mxu0 %v2876
        %2902 = vmatprep.subr.bf16.mxu0 0
        %2903 = vmatpush1.bf16.msra.mxu0 %v2875
        %2904 = vmatprep.subr.bf16.mxu0 0
        %2905 = vmatpush1.bf16.msra.mxu0 %v2874
        %2906 = vmatprep.subr.bf16.mxu0 0
        %2907 = vmatpush2.bf16.msra.mxu0 0
        %2908 = vmatprep.subr.bf16.mxu0 0
        %2909 = vmatpush2.bf16.msra.mxu0 0
        %2910 = vmatprep.subr.bf16.mxu0 0
        %2911 = vmatpush2.bf16.msra.mxu0 0
        %2912 = vmatprep.subr.bf16.mxu0 0
        %2913 = vmatpush2.bf16.msra.mxu0 0
        %2914 = vmatprep.subr.bf16.mxu0 0
        %2915 = vmatpush2.bf16.msra.mxu0 0
        %2916 = vmatprep.subr.bf16.mxu0 0
        %2917 = vmatpush2.bf16.msra.mxu0 0
        %2918 = vmatprep.subr.bf16.mxu0 0
        %2919 = vmatpush2.bf16.msra.mxu0 0
        %2920 = vmatprep.subr.bf16.mxu0 0
        %2921 = vmatpush2.bf16.msra.mxu0 0
        %2922 = vmatprep.mubr.bf16.mxu0 0
        %2923 = vmatmul.mubr.bf16.gmra.mxu0 %v2834
        %v2924 = vpop.f32.mrf.mxu0
        %v2925 = vadd.f32 0.0, %v2924
        %v2926 = vpop.f32.mrf.mxu0
        %v2927 = vpop.f32.mrf.mxu0
        %v2928 = vadd.f32 0.0, %v2927
        %v2929 = vpop.f32.mrf.mxu0
        %2930 = vmatprep.mubr.bf16.mxu0 0
        %2931 = vmatmul.mubr.bf16.gmra.mxu0 %v2835
        %v2932 = vpop.f32.mrf.mxu0
        %v2933 = vadd.f32 0.0, %v2932
        %v2934 = vpop.f32.mrf.mxu0
        %v2935 = vpop.f32.mrf.mxu0
        %v2936 = vadd.f32 0.0, %v2935
        %v2937 = vpop.f32.mrf.mxu0
        %2938 = vmatprep.mubr.bf16.mxu0 0
        %2939 = vmatmul.mubr.bf16.gmra.mxu0 %v2836
        %v2940 = vpop.f32.mrf.mxu0
        %v2941 = vadd.f32 0.0, %v2940
        %v2942 = vpop.f32.mrf.mxu0
        %v2943 = vpop.f32.mrf.mxu0
        %v2944 = vadd.f32 0.0, %v2943
        %v2945 = vpop.f32.mrf.mxu0
        %2946 = vmatprep.mubr.bf16.mxu0 0
        %2947 = vmatmul.mubr.bf16.gmra.mxu0 %v2837
        %v2948 = vpop.f32.mrf.mxu0
        %v2949 = vadd.f32 0.0, %v2948
        %v2950 = vpop.f32.mrf.mxu0
        %v2951 = vpop.f32.mrf.mxu0
        %v2952 = vadd.f32 0.0, %v2951
        %v2953 = vpop.f32.mrf.mxu0
        %2954 = vdwg.mxu0
        %v2955 = vld [vmem:[#allocation3] sm:$0xff]
        %v2956 = vld [vmem:[#allocation3 + $0x8] sm:$0xff]
        %v2957 = vld [vmem:[#allocation3 + $0x10] sm:$0xff]
        %v2958 = vld [vmem:[#allocation3 + $0x18] sm:$0xff]
        %v2959 = vld [vmem:[#allocation3 + $0x20] sm:$0xff]
        %v2960 = vld [vmem:[#allocation3 + $0x28] sm:$0xff]
        %v2961 = vld [vmem:[#allocation3 + $0x30] sm:$0xff]
        %v2962 = vld [vmem:[#allocation3 + $0x38] sm:$0xff]
        %v2963 = vadd.f32 %v2955, %v2925
        %v2964 = vadd.f32 %v2956, %v2928
        %v2965 = vadd.f32 %v2957, %v2933
        %v2966 = vadd.f32 %v2958, %v2936
        %v2967 = vadd.f32 %v2959, %v2941
        %v2968 = vadd.f32 %v2960, %v2944
        %v2969 = vadd.f32 %v2961, %v2949
        %v2970 = vadd.f32 %v2962, %v2952
        %2971 = vst [vmem:[#allocation3] sm:$0xff] %v2963
        %2972 = vst [vmem:[#allocation3 + $0x8] sm:$0xff] %v2964
        %2973 = vst [vmem:[#allocation3 + $0x10] sm:$0xff] %v2965
        %2974 = vst [vmem:[#allocation3 + $0x18] sm:$0xff] %v2966
        %2975 = vst [vmem:[#allocation3 + $0x20] sm:$0xff] %v2967
        %2976 = vst [vmem:[#allocation3 + $0x28] sm:$0xff] %v2968
        %2977 = vst [vmem:[#allocation3 + $0x30] sm:$0xff] %v2969
        %2978 = vst [vmem:[#allocation3 + $0x38] sm:$0xff] %v2970
        %v2979 = vld [vmem:[#allocation3] sm:$0xff]
        %v2980 = vld [vmem:[#allocation3 + $0x8] sm:$0xff]
        %v2981 = vld [vmem:[#allocation3 + $0x10] sm:$0xff]
        %v2982 = vld [vmem:[#allocation3 + $0x18] sm:$0xff]
        %v2983 = vld [vmem:[#allocation3 + $0x20] sm:$0xff]
        %v2984 = vld [vmem:[#allocation3 + $0x28] sm:$0xff]
        %v2985 = vld [vmem:[#allocation3 + $0x30] sm:$0xff]
        %v2986 = vld [vmem:[#allocation3 + $0x38] sm:$0xff]
        %v2987 = vld [vmem:[%s5] sm:$0x1]
        %v2989 = vlaneseq
        %v2990 = vshrl.u32 %v2989, 7
        %v2991 = vsub.s32 0, %v2990
        %v2992 = vrot.slane %v2987, %v2991
        %v2994 = vmul.f32 %v2979, %v2992
        %v2995 = vmul.f32 %v2980, %v2992
        %v2996 = vmul.f32 %v2981, %v2992
        %v2997 = vmul.f32 %v2982, %v2992
        %v2998 = vmul.f32 %v2983, %v2992
        %v2999 = vmul.f32 %v2984, %v2992
        %v3000 = vmul.f32 %v2985, %v2992
        %v3001 = vmul.f32 %v2986, %v2992
        %v3002 = vld [vmem:[%s6] sm:$0x1]
        %v3004 = vlaneseq
        %v3005 = vshrl.u32 %v3004, 7
        %v3006 = vsub.s32 0, %v3005
        %v3007 = vrot.slane %v3002, %v3006
        %v3009 = vadd.f32 %v2994, %v3007
        %v3010 = vadd.f32 %v2995, %v3007
        %v3011 = vadd.f32 %v2996, %v3007
        %v3012 = vadd.f32 %v2997, %v3007
        %v3013 = vadd.f32 %v2998, %v3007
        %v3014 = vadd.f32 %v2999, %v3007
        %v3015 = vadd.f32 %v3000, %v3007
        %v3016 = vadd.f32 %v3001, %v3007
        %v3017 = vmax.f32 %v3009, 0.0
        %v3018 = vmax.f32 %v3010, 0.0
        %v3019 = vmax.f32 %v3011, 0.0
        %v3020 = vmax.f32 %v3012, 0.0
        %v3021 = vmax.f32 %v3013, 0.0
        %v3022 = vmax.f32 %v3014, 0.0
        %v3023 = vmax.f32 %v3015, 0.0
        %v3024 = vmax.f32 %v3016, 0.0
        %v3025 = vpack.c.bf16 %v3018, %v3017
        %v3026 = vpack.c.bf16 %v3020, %v3019
        %v3027 = vpack.c.bf16 %v3022, %v3021
        %v3028 = vpack.c.bf16 %v3024, %v3023
        %v3029 = vld [vmem:[#allocation10] sm:$0xf]
        %v3030 = vld [vmem:[#allocation10 + $0x4] sm:$0xf]
        %v3031 = vld [vmem:[#allocation10 + $0x8] sm:$0xf]
        %v3032 = vld [vmem:[#allocation10 + $0xc] sm:$0xf]
        %v3033 = vld [vmem:[#allocation10 + $0x10] sm:$0xf]
        %v3034 = vld [vmem:[#allocation10 + $0x14] sm:$0xf]
        %v3035 = vld [vmem:[#allocation10 + $0x18] sm:$0xf]
        %v3036 = vld [vmem:[#allocation10 + $0x1c] sm:$0xf]
        %v3037 = vld [vmem:[#allocation10 + $0x20] sm:$0xf]
        %v3038 = vld [vmem:[#allocation10 + $0x24] sm:$0xf]
        %v3039 = vld [vmem:[#allocation10 + $0x28] sm:$0xf]
        %v3040 = vld [vmem:[#allocation10 + $0x2c] sm:$0xf]
        %v3041 = vld [vmem:[#allocation10 + $0x30] sm:$0xf]
        %v3042 = vld [vmem:[#allocation10 + $0x34] sm:$0xf]
        %v3043 = vld [vmem:[#allocation10 + $0x38] sm:$0xf]
        %v3044 = vld [vmem:[#allocation10 + $0x3c] sm:$0xf]
        %v3061 = vunpack.c.l.b16 %v3029
        %v3062 = vunpack.c.l.b16 %v3030
        %v3063 = vunpack.c.l.b16 %v3031
        %v3064 = vunpack.c.l.b16 %v3032
        %v3065 = vunpack.c.l.b16 %v3033
        %v3066 = vunpack.c.l.b16 %v3034
        %v3067 = vunpack.c.l.b16 %v3035
        %v3068 = vunpack.c.l.b16 %v3036
        %v3069 = vunpack.c.l.b16 %v3037
        %v3070 = vunpack.c.l.b16 %v3038
        %v3071 = vunpack.c.l.b16 %v3039
        %v3072 = vunpack.c.l.b16 %v3040
        %v3073 = vunpack.c.l.b16 %v3041
        %v3074 = vunpack.c.l.b16 %v3042
        %v3075 = vunpack.c.l.b16 %v3043
        %v3076 = vunpack.c.l.b16 %v3044
        %v3077 = vpack.c.b16 %v3062, %v3061
        %v3078 = vpack.c.b16 %v3064, %v3063
        %v3079 = vpack.c.b16 %v3066, %v3065
        %v3080 = vpack.c.b16 %v3068, %v3067
        %v3081 = vpack.c.b16 %v3070, %v3069
        %v3082 = vpack.c.b16 %v3072, %v3071
        %v3083 = vpack.c.b16 %v3074, %v3073
        %v3084 = vpack.c.b16 %v3076, %v3075
        %3093 = vmatprep.subr.bf16.mxu0 0
        %3094 = vmatpush1.bf16.msra.mxu0 %v3084
        %3095 = vmatprep.subr.bf16.mxu0 0
        %3096 = vmatpush1.bf16.msra.mxu0 %v3083
        %3097 = vmatprep.subr.bf16.mxu0 0
        %3098 = vmatpush1.bf16.msra.mxu0 %v3082
        %3099 = vmatprep.subr.bf16.mxu0 0
        %3100 = vmatpush1.bf16.msra.mxu0 %v3081
        %3101 = vmatprep.subr.bf16.mxu0 0
        %3102 = vmatpush1.bf16.msra.mxu0 %v3080
        %3103 = vmatprep.subr.bf16.mxu0 0
        %3104 = vmatpush1.bf16.msra.mxu0 %v3079
        %3105 = vmatprep.subr.bf16.mxu0 0
        %3106 = vmatpush1.bf16.msra.mxu0 %v3078
        %3107 = vmatprep.subr.bf16.mxu0 0
        %3108 = vmatpush1.bf16.msra.mxu0 %v3077
        %3109 = vmatprep.subr.bf16.mxu0 0
        %3110 = vmatpush2.bf16.msra.mxu0 0
        %3111 = vmatprep.subr.bf16.mxu0 0
        %3112 = vmatpush2.bf16.msra.mxu0 0
        %3113 = vmatprep.subr.bf16.mxu0 0
        %3114 = vmatpush2.bf16.msra.mxu0 0
        %3115 = vmatprep.subr.bf16.mxu0 0
        %3116 = vmatpush2.bf16.msra.mxu0 0
        %3117 = vmatprep.subr.bf16.mxu0 0
        %3118 = vmatpush2.bf16.msra.mxu0 0
        %3119 = vmatprep.subr.bf16.mxu0 0
        %3120 = vmatpush2.bf16.msra.mxu0 0
        %3121 = vmatprep.subr.bf16.mxu0 0
        %3122 = vmatpush2.bf16.msra.mxu0 0
        %3123 = vmatprep.subr.bf16.mxu0 0
        %3124 = vmatpush2.bf16.msra.mxu0 0
        %3125 = vmatprep.mubr.bf16.mxu0 0
        %3126 = vmatmul.mubr.bf16.gmra.mxu0 %v3025
        %v3127 = vpop.f32.mrf.mxu0
        %v3128 = vadd.f32 0.0, %v3127
        %v3129 = vpop.f32.mrf.mxu0
        %v3130 = vpop.f32.mrf.mxu0
        %v3131 = vadd.f32 0.0, %v3130
        %v3132 = vpop.f32.mrf.mxu0
        %3133 = vmatprep.mubr.bf16.mxu0 0
        %3134 = vmatmul.mubr.bf16.gmra.mxu0 %v3026
        %v3135 = vpop.f32.mrf.mxu0
        %v3136 = vadd.f32 0.0, %v3135
        %v3137 = vpop.f32.mrf.mxu0
        %v3138 = vpop.f32.mrf.mxu0
        %v3139 = vadd.f32 0.0, %v3138
        %v3140 = vpop.f32.mrf.mxu0
        %3141 = vmatprep.mubr.bf16.mxu0 0
        %3142 = vmatmul.mubr.bf16.gmra.mxu0 %v3027
        %v3143 = vpop.f32.mrf.mxu0
        %v3144 = vadd.f32 0.0, %v3143
        %v3145 = vpop.f32.mrf.mxu0
        %v3146 = vpop.f32.mrf.mxu0
        %v3147 = vadd.f32 0.0, %v3146
        %v3148 = vpop.f32.mrf.mxu0
        %3149 = vmatprep.mubr.bf16.mxu0 0
        %3150 = vmatmul.mubr.bf16.gmra.mxu0 %v3028
        %v3151 = vpop.f32.mrf.mxu0
        %v3152 = vadd.f32 0.0, %v3151
        %v3153 = vpop.f32.mrf.mxu0
        %v3154 = vpop.f32.mrf.mxu0
        %v3155 = vadd.f32 0.0, %v3154
        %v3156 = vpop.f32.mrf.mxu0
        %3157 = vdwg.mxu0
        %v3158 = vld [vmem:[%s8] sm:$0x1]
        %v3160 = vlaneseq
        %v3161 = vshrl.u32 %v3160, 7
        %v3162 = vsub.s32 0, %v3161
        %v3163 = vrot.slane %v3158, %v3162
        %v3165 = vmul.f32 %v3128, %v3163
        %v3166 = vmul.f32 %v3131, %v3163
        %v3167 = vmul.f32 %v3136, %v3163
        %v3168 = vmul.f32 %v3139, %v3163
        %v3169 = vmul.f32 %v3144, %v3163
        %v3170 = vmul.f32 %v3147, %v3163
        %v3171 = vmul.f32 %v3152, %v3163
        %v3172 = vmul.f32 %v3155, %v3163
        %v3173 = vld [vmem:[%s9] sm:$0x1]
        %v3175 = vlaneseq
        %v3176 = vshrl.u32 %v3175, 7
        %v3177 = vsub.s32 0, %v3176
        %v3178 = vrot.slane %v3173, %v3177
        %v3180 = vadd.f32 %v3165, %v3178
        %v3181 = vadd.f32 %v3166, %v3178
        %v3182 = vadd.f32 %v3167, %v3178
        %v3183 = vadd.f32 %v3168, %v3178
        %v3184 = vadd.f32 %v3169, %v3178
        %v3185 = vadd.f32 %v3170, %v3178
        %v3186 = vadd.f32 %v3171, %v3178
        %v3187 = vadd.f32 %v3172, %v3178
        %v3188 = vld [vmem:[%s373] sm:$0xf]
        %v3189 = vld [vmem:[%s373 + $0x4] sm:$0xf]
        %v3190 = vld [vmem:[%s373 + $0x8] sm:$0xf]
        %v3191 = vld [vmem:[%s373 + $0xc] sm:$0xf]
        %v3192 = vld [vmem:[%s373 + $0x10] sm:$0xf]
        %v3193 = vld [vmem:[%s373 + $0x14] sm:$0xf]
        %v3194 = vld [vmem:[%s373 + $0x18] sm:$0xf]
        %v3195 = vld [vmem:[%s373 + $0x1c] sm:$0xf]
        %v3196 = vunpack.c.l.bf16 %v3188
        %v3197 = vunpack.c.l.bf16 %v3189
        %v3198 = vunpack.c.l.bf16 %v3190
        %v3199 = vunpack.c.l.bf16 %v3191
        %v3200 = vunpack.c.l.bf16 %v3192
        %v3201 = vunpack.c.l.bf16 %v3193
        %v3202 = vunpack.c.l.bf16 %v3194
        %v3203 = vunpack.c.l.bf16 %v3195
        %v3204 = vadd.f32 %v3180, %v3196
        %v3205 = vadd.f32 %v3181, %v3197
        %v3206 = vadd.f32 %v3182, %v3198
        %v3207 = vadd.f32 %v3183, %v3199
        %v3208 = vadd.f32 %v3184, %v3200
        %v3209 = vadd.f32 %v3185, %v3201
        %v3210 = vadd.f32 %v3186, %v3202
        %v3211 = vadd.f32 %v3187, %v3203
        %v3212 = vmax.f32 %v3204, 0.0
        %v3213 = vmax.f32 %v3205, 0.0
        %v3214 = vmax.f32 %v3206, 0.0
        %v3215 = vmax.f32 %v3207, 0.0
        %v3216 = vmax.f32 %v3208, 0.0
        %v3217 = vmax.f32 %v3209, 0.0
        %v3218 = vmax.f32 %v3210, 0.0
        %v3219 = vmax.f32 %v3211, 0.0
        %v3220 = vpack.c.bf16 %v3212, %v3212
        %v3221 = vpack.c.bf16 %v3213, %v3213
        %v3222 = vpack.c.bf16 %v3214, %v3214
        %v3223 = vpack.c.bf16 %v3215, %v3215
        %v3224 = vpack.c.bf16 %v3216, %v3216
        %v3225 = vpack.c.bf16 %v3217, %v3217
        %v3226 = vpack.c.bf16 %v3218, %v3218
        %v3227 = vpack.c.bf16 %v3219, %v3219
        %3228 = vst [vmem:[%s421] sm:$0xf] %v3220
        %3229 = vst [vmem:[%s421 + $0x4] sm:$0xf] %v3221
        %3230 = vst [vmem:[%s421 + $0x8] sm:$0xf] %v3222
        %3231 = vst [vmem:[%s421 + $0xc] sm:$0xf] %v3223
        %3232 = vst [vmem:[%s421 + $0x10] sm:$0xf] %v3224
        %3233 = vst [vmem:[%s421 + $0x14] sm:$0xf] %v3225
        %3234 = vst [vmem:[%s421 + $0x18] sm:$0xf] %v3226
        %3235 = vst [vmem:[%s421 + $0x1c] sm:$0xf] %v3227
        %s3236 = sand.u32 %s252, 1
        %s3237 = scalar_lea.sflag [#allocation6], %s3236
        %s3238 = sand.u32 %s252, 1
        %s3239 = smul.addr %s3238, 32
        %s3240 = scalar_lea.vmem [#allocation12], %s3239
        // Predicated region
        $region77: #{tpu_custom_call.1} parent=59 // pred_check
          %p3241 = pneg %p262
        $region78: #{tpu_custom_call.1} parent=59 // pred_check_branch
          %3243 = sbr.rel (%p3241) target = $region80
        $region79: #{tpu_custom_call.1} parent=59 // pred_region
          %s3245 = ssub.s32 512, 512
          %3246 = vsyncadd %s3237, %s3245
          %s3247 = smul.addr %s29, 8
          %s3248 = smul.addr %s3247, 64
          %s3249 = scalar_lea.hbm %s10, %s3248
          %s3250 = sshll.u32 %s3240, 4
          %s3251 = int_to_ptr.vmem [resolvable:$true] %s3250
          %3256 = dma.vmem_to_hbm [thread:$0]  %s3251, 512, %s3249, %s3237, 64, 64, 4
        $region80: #{tpu_custom_call.1} parent=59 // pred_fallthru
          _
      $region60: #{tpu_custom_call.1} parent=5 // pred_fallthru
        _
      %p3257 = scmp.le.s32.totalorder 2, %s24
      // Predicated region
      $region81: #{tpu_custom_call.1} parent=5 // pred_check
        %p3258 = pneg %p3257
      $region82: #{tpu_custom_call.1} parent=5 // pred_check_branch
        %3260 = sbr.rel (%p3258) target = $region84
      $region83: #{tpu_custom_call.1} parent=5 // pred_region
        %s3261 = ssub.s32 %s24, 2
        // Predicated region
        $region85: #{tpu_custom_call.1} parent=83 // pred_check
          %p3262 = pneg %p268
        $region86: #{tpu_custom_call.1} parent=83 // pred_check_branch
          %3264 = sbr.rel (%p3262) target = $region88
        $region87: #{tpu_custom_call.1} parent=83 // pred_region
          %s3265 = sand.u32 %s253, 1
          %s3266 = scalar_lea.sflag [#allocation6], %s3265
          %s3267 = sand.u32 %s253, 1
          %s3268 = smul.addr %s3267, 32
          %s3269 = scalar_lea.vmem [#allocation12], %s3268
          %3270 = dma.done %s3266, 512
        $region88: #{tpu_custom_call.1} parent=83 // pred_fallthru
          _
      $region84: #{tpu_custom_call.1} parent=5 // pred_fallthru
        _
    $region6: #{tpu_custom_call.1} parent=1 // loop_footer
      %s28 = sadd.s32 1, %s24
    $region7: #{tpu_custom_call.1} parent=1 // loop_footer_branch
      %23 = sbr.rel target = $region3
    $region8: #{tpu_custom_call.1} parent=1 // loop_exit
      _
    %3271 = vsyncpa [#allocation5], 1
    %s3272 = scalar_lea.sflag [#allocation5], 1
    %3273 = vsyncpa %s3272, 1
    %3274 = vsyncpa [#allocation8], 1
    %3275 = vsyncpa [#allocation11], 1
    %3276 = vsyncpa [#allocation6], 1
    %s3277 = scalar_lea.sflag [#allocation6], 1
    %3278 = vsyncpa %s3277, 1

</llo_original>
